<compile_context>
chip_gen: v6e
topology: v6e:2x2x1
jax: 0.10.0
libtpu: 0.0.40
codegen_flags: <defaults>
</compile_context>

<pallas_src>
import jax
import jax.numpy as jnp
from jax.experimental import pallas as pl
from jax.experimental.pallas import tpu as pltpu

# ----------------------------- model hyperparams -----------------------------
# Synthetic stand-ins for the `dataset` module constants.
NUM_TOKENS = 4                 # len(dataset.Token)
TOKEN_PAD = 0                  # dataset.Token.Pad
INCLUDE_CONSTRUCTION = True
NUM_BINS = 8
MAX_ENTITIES = 8
COORD_MAP_SIZES = (3, 3)       # sum(len(m) for m in dataset.COORD_TOKEN_MAP.values()) = 6

NUM_VAL_EMB = NUM_TOKENS + NUM_BINS + (2 if INCLUDE_CONSTRUCTION else 0)   # 14
NUM_COORD_EMB = 2 + sum(COORD_MAP_SIZES)                                   # 8
NUM_POS_EMB = 3 + MAX_ENTITIES                                             # 11

EMBED_DIM = 32
FC_SIZE = 64
NUM_HEADS = 4
NUM_LAYERS = 2
HEAD_DIM = EMBED_DIM // NUM_HEADS

BATCH = 2
SEQ = 8
CONTEXT_DIM = 16               # context.shape[1] <= EMBED_DIM

LN_EPS = 1e-5

# Padded sizes for lane/sublane-friendly kernel inputs/outputs.
V_PAD = 128                                            # lane-dense logits slab
EMB_ROWS = NUM_VAL_EMB + NUM_COORD_EMB + NUM_POS_EMB   # 33 (combined table)
EMB_ROWS_PAD = 40                                      # pad rows to multiple of 8
CTX_ROWS_PAD = 8                                       # pad context rows to 8


# ------------------------------- fused Pallas kernel -------------------------------
def fused_forward_kernel(idx_ref, ctx_ref, mask_ref, emb_ref,
                         w_in_ref, b_in_ref, w_o_ref, w1_ref, b1_ref, w2_ref,
                         vecs_ref, out_w_ref, out_b_ref, o_ref):
    """Whole CondPrimModel forward on the flattened (B*S, E) activation."""
    N = idx_ref.shape[0]
    E = EMBED_DIM
    Dh = HEAD_DIM

    # ---- token embedding: multi-hot (N, T) @ combined table (T, E) on the MXU ----
    idx = idx_ref[...]                                     # (N, 3) int32 (pre-offset)
    T = emb_ref.shape[0]
    tok_iota = jax.lax.broadcasted_iota(jnp.int32, (N, T), 1)
    onehot = ((tok_iota == idx[:, 0:1]).astype(jnp.float32)
              + (tok_iota == idx[:, 1:2]).astype(jnp.float32)
              + (tok_iota == idx[:, 2:3]).astype(jnp.float32))
    x = jnp.dot(onehot, emb_ref[...], preferred_element_type=jnp.float32)   # (N, E)

    # ---- context add at token 0 of each batch element (scatter via tiny matmul) ----
    Bp = ctx_ref.shape[0]
    row_b = jax.lax.broadcasted_iota(jnp.int32, (N, Bp), 0)
    col_b = jax.lax.broadcasted_iota(jnp.int32, (N, Bp), 1)
    sel = (row_b == col_b * SEQ).astype(jnp.float32)       # rows b*SEQ pick ctx[b]
    x = x + jnp.dot(sel, ctx_ref[...], preferred_element_type=jnp.float32)

    mask = mask_ref[...]                                   # (N, N) additive: 0 / -1e30
    scale = 1.0 / (float(Dh) ** 0.5)

    for l in range(NUM_LAYERS):                            # static unroll over layers
        w_in_T = w_in_ref[l]                               # (E, 3E)
        b_in = b_in_ref[l]                                 # (1, 3E)
        w_o_T = w_o_ref[l]                                 # (E, E)
        w1_T = w1_ref[l]                                   # (E, FC)
        b1 = b1_ref[l]                                     # (1, FC)
        w2_T = w2_ref[l]                                   # (FC, E)
        vecs = vecs_ref[l]                                 # (6, E) packed vectors
        b_o, ln1_g, ln1_b = vecs[0:1], vecs[1:2], vecs[2:3]
        b2, ln2_g, ln2_b = vecs[3:4], vecs[4:5], vecs[5:6]

        # ---- self-attention (QKV in one matmul; per-head with fused out-proj) ----
        qkv = jnp.dot(x, w_in_T, preferred_element_type=jnp.float32) + b_in   # (N, 3E)
        acc = jnp.zeros((N, E), jnp.float32)
        for h in range(NUM_HEADS):                         # static unroll over heads
            qh = qkv[:, h * Dh:(h + 1) * Dh]
            kh = qkv[:, E + h * Dh:E + (h + 1) * Dh]
            vh = qkv[:, 2 * E + h * Dh:2 * E + (h + 1) * Dh]
            s = jax.lax.dot_general(qh, kh, (((1,), (1,)), ((), ())),
                                    preferred_element_type=jnp.float32) * scale + mask
            s = s - jnp.max(s, axis=-1, keepdims=True)
            p = jnp.exp(s)
            p = p * pl.reciprocal(jnp.sum(p, axis=-1, keepdims=True), approx=True)
            ctxh = jnp.dot(p, vh, preferred_element_type=jnp.float32)          # (N, Dh)
            # fused output projection: sum_h ctx_h @ Wo^T[h*Dh:(h+1)*Dh, :] (no concat)
            acc = acc + jnp.dot(ctxh, w_o_T[h * Dh:(h + 1) * Dh, :],
                                preferred_element_type=jnp.float32)
        attn_out = acc + b_o

        # ---- residual + LayerNorm 1 ----
        y = x + attn_out
        mu = jnp.mean(y, axis=-1, keepdims=True)
        var = jnp.mean((y - mu) ** 2, axis=-1, keepdims=True)
        y = (y - mu) * jax.lax.rsqrt(var + LN_EPS) * ln1_g + ln1_b

        # ---- feed-forward (relu) ----
        h1 = jnp.maximum(jnp.dot(y, w1_T, preferred_element_type=jnp.float32) + b1, 0.0)
        ffn = jnp.dot(h1, w2_T, preferred_element_type=jnp.float32) + b2

        # ---- residual + LayerNorm 2 ----
        z = y + ffn
        mu2 = jnp.mean(z, axis=-1, keepdims=True)
        var2 = jnp.mean((z - mu2) ** 2, axis=-1, keepdims=True)
        x = (z - mu2) * jax.lax.rsqrt(var2 + LN_EPS) * ln2_g + ln2_b

    # ---- final linear decode into a lane-dense (N, 128) slab ----
    o_ref[...] = (jnp.dot(x, out_w_ref[...], preferred_element_type=jnp.float32)
                  + out_b_ref[...])


# ------------------------------- Python wrappers ------------------------------
def _full_spec(shape):
    return pl.BlockSpec(shape, lambda b: (0,) * len(shape))


def prepare_params(params):
    """One-time parameter prep (outside the hot path): transpose, stack, pad."""
    table = jnp.concatenate([params["val_embed"], params["coord_embed"],
                             params["pos_embed"]], axis=0)               # (33, E)
    emb_table = jnp.zeros((EMB_ROWS_PAD, EMBED_DIM), jnp.float32).at[:EMB_ROWS].set(table)

    layers = params["layers"]
    w_in_T = jnp.stack([lp["w_in"].T for lp in layers])                  # (L, E, 3E)
    b_in = jnp.stack([lp["b_in"] for lp in layers])                      # (L, 1, 3E)
    w_o_T = jnp.stack([lp["w_o"].T for lp in layers])                    # (L, E, E)
    w1_T = jnp.stack([lp["w1"].T for lp in layers])                      # (L, E, FC)
    b1 = jnp.stack([lp["b1"] for lp in layers])                          # (L, 1, FC)
    w2_T = jnp.stack([lp["w2"].T for lp in layers])                      # (L, FC, E)
    vecs = jnp.stack([jnp.concatenate([lp["b_o"], lp["ln1_g"], lp["ln1_b"],
                                       lp["b2"], lp["ln2_g"], lp["ln2_b"]], axis=0)
                      for lp in layers])                                 # (L, 6, E)

    out_w_T = jnp.zeros((EMBED_DIM, V_PAD), jnp.float32).at[:, :NUM_VAL_EMB].set(
        params["out_w"].T)
    out_b = jnp.zeros((1, V_PAD), jnp.float32).at[:, :NUM_VAL_EMB].set(params["out_b"])

    return dict(emb_table=emb_table, w_in_T=w_in_T, b_in=b_in, w_o_T=w_o_T,
                w1_T=w1_T, b1=b1, w2_T=w2_T, vecs=vecs,
                out_w_T=out_w_T, out_b=out_b)


@jax.jit
def cond_prim_forward(pp, src_val, src_coord, src_pos, context):
    B, S = src_val.shape
    N = B * S

    # Token ids, offset into the combined embedding table (glue, tiny).
    idx = jnp.stack([
        src_val.reshape(-1).astype(jnp.int32),
        src_coord.reshape(-1).astype(jnp.int32) + NUM_VAL_EMB,
        src_pos.reshape(-1).astype(jnp.int32) + NUM_VAL_EMB + NUM_COORD_EMB,
    ], axis=1)                                                           # (N, 3)

    # Context padded to (CTX_ROWS_PAD, E): row b is added to token 0 of batch b.
    C = context.shape[1]
    ctx_pad = jnp.zeros((CTX_ROWS_PAD, EMBED_DIM), jnp.float32)
    ctx_pad = ctx_pad.at[:B, :C].set(context.astype(jnp.float32))

    # Block-diagonal causal additive mask over the flattened (B*S) sequence
    # (identical to per-batch generate_square_subsequent_mask).
    r = jax.lax.broadcasted_iota(jnp.int32, (N, N), 0)
    c = jax.lax.broadcasted_iota(jnp.int32, (N, N), 1)
    allowed = (r // S == c // S) & (c <= r)
    attn_mask = jnp.where(allowed, 0.0, -1e30).astype(jnp.float32)       # (N, N)

    args = (idx, ctx_pad, attn_mask, pp["emb_table"], pp["w_in_T"], pp["b_in"],
            pp["w_o_T"], pp["w1_T"], pp["b1"], pp["w2_T"], pp["vecs"],
            pp["out_w_T"], pp["out_b"])

    out = pl.pallas_call(
        fused_forward_kernel,
        out_shape=jax.ShapeDtypeStruct((N, V_PAD), jnp.float32),
        grid_spec=pltpu.PrefetchScalarGridSpec(
            num_scalar_prefetch=0,
            grid=(1,),                                   # single grid step: whole problem
            in_specs=[_full_spec(a.shape) for a in args],
            out_specs=_full_spec((N, V_PAD)),
        ),
        compiler_params=pltpu.CompilerParams(dimension_semantics=("arbitrary",)),
    )(*args)

    # Slice the lane-dense logits slab back to the real vocab size.
    return out[:, :NUM_VAL_EMB].reshape(B, S, NUM_VAL_EMB)


# --------------------------------- init params --------------------------------
def init_params(key):
    ks = jax.random.split(key, 16 + 12 * NUM_LAYERS)
    ki = iter(range(len(ks)))

    def nrm(shape, scale=0.05):
        return scale * jax.random.normal(ks[next(ki)], shape, dtype=jnp.float32)

    # Embedding tables (padding_idx row zeroed, like nn.Embedding(padding_idx=Pad))
    val_embed = nrm((NUM_VAL_EMB, EMBED_DIM), 1.0).at[TOKEN_PAD].set(0.0)
    coord_embed = nrm((NUM_COORD_EMB, EMBED_DIM), 1.0).at[TOKEN_PAD].set(0.0)
    pos_embed = nrm((NUM_POS_EMB, EMBED_DIM), 1.0).at[TOKEN_PAD].set(0.0)

    layers = []
    for _ in range(NUM_LAYERS):
        layers.append(dict(
            w_in=nrm((3 * EMBED_DIM, EMBED_DIM)),
            b_in=nrm((1, 3 * EMBED_DIM)),
            w_o=nrm((EMBED_DIM, EMBED_DIM)),
            b_o=nrm((1, EMBED_DIM)),
            ln1_g=jnp.ones((1, EMBED_DIM), jnp.float32),
            ln1_b=jnp.zeros((1, EMBED_DIM), jnp.float32),
            w1=nrm((FC_SIZE, EMBED_DIM)),
            b1=nrm((1, FC_SIZE)),
            w2=nrm((EMBED_DIM, FC_SIZE)),
            b2=nrm((1, EMBED_DIM)),
            ln2_g=jnp.ones((1, EMBED_DIM), jnp.float32),
            ln2_b=jnp.zeros((1, EMBED_DIM), jnp.float32),
        ))

    out_w = nrm((NUM_VAL_EMB, EMBED_DIM))
    out_b = nrm((1, NUM_VAL_EMB))

    return dict(val_embed=val_embed, coord_embed=coord_embed, pos_embed=pos_embed,
                layers=layers, out_w=out_w, out_b=out_b)


# ------------------------------------ main -------------------------------------
if __name__ == "__main__":
    key = jax.random.PRNGKey(0)
    kp, kv, kc, kq, kx = jax.random.split(key, 5)

    params = init_params(kp)
    prepped = prepare_params(params)   # one-time weight transpose/stack/pad

    src_val = jax.random.randint(kv, (BATCH, SEQ), 0, NUM_VAL_EMB, dtype=jnp.int32)
    src_coord = jax.random.randint(kc, (BATCH, SEQ), 0, NUM_COORD_EMB, dtype=jnp.int32)
    src_pos = jax.random.randint(kq, (BATCH, SEQ), 0, NUM_POS_EMB, dtype=jnp.int32)
    context = 0.1 * jax.random.normal(kx, (BATCH, CONTEXT_DIM), dtype=jnp.float32)

    out = cond_prim_forward(prepped, src_val, src_coord, src_pos, context)
    out = jax.block_until_ready(out)

    assert out.shape == (BATCH, SEQ, NUM_VAL_EMB), out.shape
    assert jnp.all(jnp.isfinite(out))
    print("KERNEL_OK")
</pallas_src>

<mosaic_0001>
module attributes {stable_mosaic.version = 11 : i64} {
  func.func @fused_forward_kernel(%arg0: i32, %arg1: memref<16x3xi32, #tpu.memory_space<vmem>>, %arg2: memref<8x32xf32, #tpu.memory_space<vmem>>, %arg3: memref<16x16xf32, #tpu.memory_space<vmem>>, %arg4: memref<40x32xf32, #tpu.memory_space<vmem>>, %arg5: memref<2x32x96xf32, #tpu.memory_space<vmem>>, %arg6: memref<2x1x96xf32, #tpu.memory_space<vmem>>, %arg7: memref<2x32x32xf32, #tpu.memory_space<vmem>>, %arg8: memref<2x32x64xf32, #tpu.memory_space<vmem>>, %arg9: memref<2x1x64xf32, #tpu.memory_space<vmem>>, %arg10: memref<2x64x32xf32, #tpu.memory_space<vmem>>, %arg11: memref<2x6x32xf32, #tpu.memory_space<vmem>>, %arg12: memref<32x128xf32, #tpu.memory_space<vmem>>, %arg13: memref<1x128xf32, #tpu.memory_space<vmem>>, %arg14: memref<16x128xf32, #tpu.memory_space<vmem>>) attributes {dimension_semantics = [#tpu.dimension_semantics<arbitrary>], iteration_bounds = array<i64: 1>, scalar_prefetch = 0 : i64, scratch_operands = 0 : i64, tpu.core_type = #tpu.core_type<tc>, window_params = [{pipeline_mode = #tpu.pipeline_mode<synchronous>, transform_indices = @transform_0, window_bounds = array<i64: 16, 3>}, {pipeline_mode = #tpu.pipeline_mode<synchronous>, transform_indices = @transform_1, window_bounds = array<i64: 8, 32>}, {pipeline_mode = #tpu.pipeline_mode<synchronous>, transform_indices = @transform_2, window_bounds = array<i64: 16, 16>}, {pipeline_mode = #tpu.pipeline_mode<synchronous>, transform_indices = @transform_3, window_bounds = array<i64: 40, 32>}, {pipeline_mode = #tpu.pipeline_mode<synchronous>, transform_indices = @transform_4, window_bounds = array<i64: 2, 32, 96>}, {pipeline_mode = #tpu.pipeline_mode<synchronous>, transform_indices = @transform_5, window_bounds = array<i64: 2, 1, 96>}, {pipeline_mode = #tpu.pipeline_mode<synchronous>, transform_indices = @transform_6, window_bounds = array<i64: 2, 32, 32>}, {pipeline_mode = #tpu.pipeline_mode<synchronous>, transform_indices = @transform_7, window_bounds = array<i64: 2, 32, 64>}, {pipeline_mode = #tpu.pipeline_mode<synchronous>, transform_indices = @transform_8, window_bounds = array<i64: 2, 1, 64>}, {pipeline_mode = #tpu.pipeline_mode<synchronous>, transform_indices = @transform_9, window_bounds = array<i64: 2, 64, 32>}, {pipeline_mode = #tpu.pipeline_mode<synchronous>, transform_indices = @transform_10, window_bounds = array<i64: 2, 6, 32>}, {pipeline_mode = #tpu.pipeline_mode<synchronous>, transform_indices = @transform_11, window_bounds = array<i64: 32, 128>}, {pipeline_mode = #tpu.pipeline_mode<synchronous>, transform_indices = @transform_12, window_bounds = array<i64: 1, 128>}, {pipeline_mode = #tpu.pipeline_mode<synchronous>, transform_indices = @transform_13, window_bounds = array<i64: 16, 128>}]} {
    %c0 = arith.constant 0 : index
    %c0_0 = arith.constant 0 : index
    %0 = vector.load %arg1[%c0, %c0_0] : memref<16x3xi32, #tpu.memory_space<vmem>>, vector<16x3xi32>
    %1 = tpu.iota {dimensions = array<i32: 1>} : vector<16x40xi32>
    %2 = vector.extract_strided_slice %0 {offsets = [0, 0], sizes = [16, 1], strides = [1, 1]} : vector<16x3xi32> to vector<16x1xi32>
    %3 = vector.broadcast %2 : vector<16x1xi32> to vector<16x40xi32>
    %4 = arith.cmpi eq, %1, %3 : vector<16x40xi32>
    %5 = arith.extui %4 : vector<16x40xi1> to vector<16x40xi32>
    %6 = arith.sitofp %5 : vector<16x40xi32> to vector<16x40xf32>
    %7 = vector.extract_strided_slice %0 {offsets = [0, 1], sizes = [16, 1], strides = [1, 1]} : vector<16x3xi32> to vector<16x1xi32>
    %8 = vector.broadcast %7 : vector<16x1xi32> to vector<16x40xi32>
    %9 = arith.cmpi eq, %1, %8 : vector<16x40xi32>
    %10 = arith.extui %9 : vector<16x40xi1> to vector<16x40xi32>
    %11 = arith.sitofp %10 : vector<16x40xi32> to vector<16x40xf32>
    %12 = arith.addf %6, %11 : vector<16x40xf32>
    %13 = vector.extract_strided_slice %0 {offsets = [0, 2], sizes = [16, 1], strides = [1, 1]} : vector<16x3xi32> to vector<16x1xi32>
    %14 = vector.broadcast %13 : vector<16x1xi32> to vector<16x40xi32>
    %15 = arith.cmpi eq, %1, %14 : vector<16x40xi32>
    %16 = arith.extui %15 : vector<16x40xi1> to vector<16x40xi32>
    %17 = arith.sitofp %16 : vector<16x40xi32> to vector<16x40xf32>
    %18 = arith.addf %12, %17 : vector<16x40xf32>
    %c0_1 = arith.constant 0 : index
    %c0_2 = arith.constant 0 : index
    %19 = vector.load %arg4[%c0_1, %c0_2] : memref<40x32xf32, #tpu.memory_space<vmem>>, vector<40x32xf32>
    %cst = arith.constant dense<0.000000e+00> : vector<16x32xf32>
    %20 = tpu.matmul %18, %19, %cst {dimension_numbers = #tpu.dot_dimension_numbers<[1], [0], [0], [1], [0, 0, 1, 1], [], []>} : vector<16x40xf32>, vector<40x32xf32>, vector<16x32xf32> -> vector<16x32xf32>
    %21 = tpu.iota {dimensions = array<i32: 0>} : vector<16x8xi32>
    %22 = tpu.iota {dimensions = array<i32: 1>} : vector<16x8xi32>
    %c8_i32 = arith.constant 8 : i32
    %23 = vector.broadcast %c8_i32 : i32 to vector<16x8xi32>
    %24 = arith.muli %22, %23 : vector<16x8xi32>
    %25 = arith.cmpi eq, %21, %24 : vector<16x8xi32>
    %26 = arith.extui %25 : vector<16x8xi1> to vector<16x8xi32>
    %27 = arith.sitofp %26 : vector<16x8xi32> to vector<16x8xf32>
    %c0_3 = arith.constant 0 : index
    %c0_4 = arith.constant 0 : index
    %28 = vector.load %arg2[%c0_3, %c0_4] : memref<8x32xf32, #tpu.memory_space<vmem>>, vector<8x32xf32>
    %cst_5 = arith.constant dense<0.000000e+00> : vector<16x32xf32>
    %29 = tpu.matmul %27, %28, %cst_5 {dimension_numbers = #tpu.dot_dimension_numbers<[1], [0], [0], [1], [0, 0, 1, 1], [], []>} : vector<16x8xf32>, vector<8x32xf32>, vector<16x32xf32> -> vector<16x32xf32>
    %30 = arith.addf %20, %29 : vector<16x32xf32>
    %c0_6 = arith.constant 0 : index
    %c0_7 = arith.constant 0 : index
    %31 = vector.load %arg3[%c0_6, %c0_7] : memref<16x16xf32, #tpu.memory_space<vmem>>, vector<16x16xf32>
    %c0_8 = arith.constant 0 : index
    %c0_9 = arith.constant 0 : index
    %c0_10 = arith.constant 0 : index
    %32 = vector.load %arg5[%c0_8, %c0_9, %c0_10] : memref<2x32x96xf32, #tpu.memory_space<vmem>>, vector<1x32x96xf32>
    %33 = vector.shape_cast %32 : vector<1x32x96xf32> to vector<32x96xf32>
    %c0_11 = arith.constant 0 : index
    %c0_12 = arith.constant 0 : index
    %c0_13 = arith.constant 0 : index
    %34 = vector.load %arg6[%c0_11, %c0_12, %c0_13] : memref<2x1x96xf32, #tpu.memory_space<vmem>>, vector<1x1x96xf32>
    %35 = vector.shape_cast %34 : vector<1x1x96xf32> to vector<1x96xf32>
    %c0_14 = arith.constant 0 : index
    %c0_15 = arith.constant 0 : index
    %c0_16 = arith.constant 0 : index
    %36 = vector.load %arg7[%c0_14, %c0_15, %c0_16] : memref<2x32x32xf32, #tpu.memory_space<vmem>>, vector<1x32x32xf32>
    %37 = vector.shape_cast %36 : vector<1x32x32xf32> to vector<32x32xf32>
    %c0_17 = arith.constant 0 : index
    %c0_18 = arith.constant 0 : index
    %c0_19 = arith.constant 0 : index
    %38 = vector.load %arg8[%c0_17, %c0_18, %c0_19] : memref<2x32x64xf32, #tpu.memory_space<vmem>>, vector<1x32x64xf32>
    %39 = vector.shape_cast %38 : vector<1x32x64xf32> to vector<32x64xf32>
    %c0_20 = arith.constant 0 : index
    %c0_21 = arith.constant 0 : index
    %c0_22 = arith.constant 0 : index
    %40 = vector.load %arg9[%c0_20, %c0_21, %c0_22] : memref<2x1x64xf32, #tpu.memory_space<vmem>>, vector<1x1x64xf32>
    %41 = vector.shape_cast %40 : vector<1x1x64xf32> to vector<1x64xf32>
    %c0_23 = arith.constant 0 : index
    %c0_24 = arith.constant 0 : index
    %c0_25 = arith.constant 0 : index
    %42 = vector.load %arg10[%c0_23, %c0_24, %c0_25] : memref<2x64x32xf32, #tpu.memory_space<vmem>>, vector<1x64x32xf32>
    %43 = vector.shape_cast %42 : vector<1x64x32xf32> to vector<64x32xf32>
    %c0_26 = arith.constant 0 : index
    %c0_27 = arith.constant 0 : index
    %c0_28 = arith.constant 0 : index
    %44 = vector.load %arg11[%c0_26, %c0_27, %c0_28] : memref<2x6x32xf32, #tpu.memory_space<vmem>>, vector<1x6x32xf32>
    %45 = vector.shape_cast %44 : vector<1x6x32xf32> to vector<6x32xf32>
    %46 = vector.extract_strided_slice %45 {offsets = [0, 0], sizes = [1, 32], strides = [1, 1]} : vector<6x32xf32> to vector<1x32xf32>
    %47 = vector.extract_strided_slice %45 {offsets = [1, 0], sizes = [1, 32], strides = [1, 1]} : vector<6x32xf32> to vector<1x32xf32>
    %48 = vector.extract_strided_slice %45 {offsets = [2, 0], sizes = [1, 32], strides = [1, 1]} : vector<6x32xf32> to vector<1x32xf32>
    %49 = vector.extract_strided_slice %45 {offsets = [3, 0], sizes = [1, 32], strides = [1, 1]} : vector<6x32xf32> to vector<1x32xf32>
    %50 = vector.extract_strided_slice %45 {offsets = [4, 0], sizes = [1, 32], strides = [1, 1]} : vector<6x32xf32> to vector<1x32xf32>
    %51 = vector.extract_strided_slice %45 {offsets = [5, 0], sizes = [1, 32], strides = [1, 1]} : vector<6x32xf32> to vector<1x32xf32>
    %cst_29 = arith.constant dense<0.000000e+00> : vector<16x96xf32>
    %52 = tpu.matmul %30, %33, %cst_29 {dimension_numbers = #tpu.dot_dimension_numbers<[1], [0], [0], [1], [0, 0, 1, 1], [], []>} : vector<16x32xf32>, vector<32x96xf32>, vector<16x96xf32> -> vector<16x96xf32>
    %53 = vector.broadcast %35 : vector<1x96xf32> to vector<16x96xf32>
    %54 = arith.addf %52, %53 : vector<16x96xf32>
    %cst_30 = arith.constant 0.000000e+00 : f32
    %55 = vector.broadcast %cst_30 : f32 to vector<16x32xf32>
    %56 = vector.extract_strided_slice %54 {offsets = [0, 0], sizes = [16, 8], strides = [1, 1]} : vector<16x96xf32> to vector<16x8xf32>
    %57 = vector.extract_strided_slice %54 {offsets = [0, 32], sizes = [16, 8], strides = [1, 1]} : vector<16x96xf32> to vector<16x8xf32>
    %58 = vector.extract_strided_slice %54 {offsets = [0, 64], sizes = [16, 8], strides = [1, 1]} : vector<16x96xf32> to vector<16x8xf32>
    %cst_31 = arith.constant dense<0.000000e+00> : vector<16x16xf32>
    %59 = tpu.matmul %56, %57, %cst_31 {dimension_numbers = #tpu.dot_dimension_numbers<[1], [1], [0], [0], [0, 0, 1, 0], [], []>} : vector<16x8xf32>, vector<16x8xf32>, vector<16x16xf32> -> vector<16x16xf32>
    %cst_32 = arith.constant 0.353553385 : f32
    %60 = vector.broadcast %cst_32 : f32 to vector<16x16xf32>
    %61 = arith.mulf %59, %60 : vector<16x16xf32>
    %62 = arith.addf %61, %31 : vector<16x16xf32>
    %cst_33 = arith.constant dense<0xFF800000> : vector<16xf32>
    %63 = vector.multi_reduction <maximumf>, %62, %cst_33 [1] : vector<16x16xf32> to vector<16xf32>
    %64 = vector.shape_cast %63 : vector<16xf32> to vector<16x1xf32>
    %65 = vector.broadcast %64 : vector<16x1xf32> to vector<16x16xf32>
    %66 = arith.subf %62, %65 : vector<16x16xf32>
    %67 = math.exp %66 : vector<16x16xf32>
    %cst_34 = arith.constant dense<0.000000e+00> : vector<16xf32>
    %68 = vector.multi_reduction <add>, %67, %cst_34 [1] : vector<16x16xf32> to vector<16xf32>
    %69 = vector.shape_cast %68 : vector<16xf32> to vector<16x1xf32>
    %70 = tpu.reciprocal %69 {approx = true} : vector<16x1xf32> -> vector<16x1xf32>
    %71 = vector.broadcast %70 : vector<16x1xf32> to vector<16x16xf32>
    %72 = arith.mulf %67, %71 : vector<16x16xf32>
    %cst_35 = arith.constant dense<0.000000e+00> : vector<16x8xf32>
    %73 = tpu.matmul %72, %58, %cst_35 {dimension_numbers = #tpu.dot_dimension_numbers<[1], [0], [0], [1], [0, 0, 1, 1], [], []>} : vector<16x16xf32>, vector<16x8xf32>, vector<16x8xf32> -> vector<16x8xf32>
    %74 = vector.extract_strided_slice %37 {offsets = [0, 0], sizes = [8, 32], strides = [1, 1]} : vector<32x32xf32> to vector<8x32xf32>
    %cst_36 = arith.constant dense<0.000000e+00> : vector<16x32xf32>
    %75 = tpu.matmul %73, %74, %cst_36 {dimension_numbers = #tpu.dot_dimension_numbers<[1], [0], [0], [1], [0, 0, 1, 1], [], []>} : vector<16x8xf32>, vector<8x32xf32>, vector<16x32xf32> -> vector<16x32xf32>
    %76 = arith.addf %55, %75 : vector<16x32xf32>
    %77 = vector.extract_strided_slice %54 {offsets = [0, 8], sizes = [16, 8], strides = [1, 1]} : vector<16x96xf32> to vector<16x8xf32>
    %78 = vector.extract_strided_slice %54 {offsets = [0, 40], sizes = [16, 8], strides = [1, 1]} : vector<16x96xf32> to vector<16x8xf32>
    %79 = vector.extract_strided_slice %54 {offsets = [0, 72], sizes = [16, 8], strides = [1, 1]} : vector<16x96xf32> to vector<16x8xf32>
    %cst_37 = arith.constant dense<0.000000e+00> : vector<16x16xf32>
    %80 = tpu.matmul %77, %78, %cst_37 {dimension_numbers = #tpu.dot_dimension_numbers<[1], [1], [0], [0], [0, 0, 1, 0], [], []>} : vector<16x8xf32>, vector<16x8xf32>, vector<16x16xf32> -> vector<16x16xf32>
    %cst_38 = arith.constant 0.353553385 : f32
    %81 = vector.broadcast %cst_38 : f32 to vector<16x16xf32>
    %82 = arith.mulf %80, %81 : vector<16x16xf32>
    %83 = arith.addf %82, %31 : vector<16x16xf32>
    %cst_39 = arith.constant dense<0xFF800000> : vector<16xf32>
    %84 = vector.multi_reduction <maximumf>, %83, %cst_39 [1] : vector<16x16xf32> to vector<16xf32>
    %85 = vector.shape_cast %84 : vector<16xf32> to vector<16x1xf32>
    %86 = vector.broadcast %85 : vector<16x1xf32> to vector<16x16xf32>
    %87 = arith.subf %83, %86 : vector<16x16xf32>
    %88 = math.exp %87 : vector<16x16xf32>
    %cst_40 = arith.constant dense<0.000000e+00> : vector<16xf32>
    %89 = vector.multi_reduction <add>, %88, %cst_40 [1] : vector<16x16xf32> to vector<16xf32>
    %90 = vector.shape_cast %89 : vector<16xf32> to vector<16x1xf32>
    %91 = tpu.reciprocal %90 {approx = true} : vector<16x1xf32> -> vector<16x1xf32>
    %92 = vector.broadcast %91 : vector<16x1xf32> to vector<16x16xf32>
    %93 = arith.mulf %88, %92 : vector<16x16xf32>
    %cst_41 = arith.constant dense<0.000000e+00> : vector<16x8xf32>
    %94 = tpu.matmul %93, %79, %cst_41 {dimension_numbers = #tpu.dot_dimension_numbers<[1], [0], [0], [1], [0, 0, 1, 1], [], []>} : vector<16x16xf32>, vector<16x8xf32>, vector<16x8xf32> -> vector<16x8xf32>
    %95 = vector.extract_strided_slice %37 {offsets = [8, 0], sizes = [8, 32], strides = [1, 1]} : vector<32x32xf32> to vector<8x32xf32>
    %cst_42 = arith.constant dense<0.000000e+00> : vector<16x32xf32>
    %96 = tpu.matmul %94, %95, %cst_42 {dimension_numbers = #tpu.dot_dimension_numbers<[1], [0], [0], [1], [0, 0, 1, 1], [], []>} : vector<16x8xf32>, vector<8x32xf32>, vector<16x32xf32> -> vector<16x32xf32>
    %97 = arith.addf %76, %96 : vector<16x32xf32>
    %98 = vector.extract_strided_slice %54 {offsets = [0, 16], sizes = [16, 8], strides = [1, 1]} : vector<16x96xf32> to vector<16x8xf32>
    %99 = vector.extract_strided_slice %54 {offsets = [0, 48], sizes = [16, 8], strides = [1, 1]} : vector<16x96xf32> to vector<16x8xf32>
    %100 = vector.extract_strided_slice %54 {offsets = [0, 80], sizes = [16, 8], strides = [1, 1]} : vector<16x96xf32> to vector<16x8xf32>
    %cst_43 = arith.constant dense<0.000000e+00> : vector<16x16xf32>
    %101 = tpu.matmul %98, %99, %cst_43 {dimension_numbers = #tpu.dot_dimension_numbers<[1], [1], [0], [0], [0, 0, 1, 0], [], []>} : vector<16x8xf32>, vector<16x8xf32>, vector<16x16xf32> -> vector<16x16xf32>
    %cst_44 = arith.constant 0.353553385 : f32
    %102 = vector.broadcast %cst_44 : f32 to vector<16x16xf32>
    %103 = arith.mulf %101, %102 : vector<16x16xf32>
    %104 = arith.addf %103, %31 : vector<16x16xf32>
    %cst_45 = arith.constant dense<0xFF800000> : vector<16xf32>
    %105 = vector.multi_reduction <maximumf>, %104, %cst_45 [1] : vector<16x16xf32> to vector<16xf32>
    %106 = vector.shape_cast %105 : vector<16xf32> to vector<16x1xf32>
    %107 = vector.broadcast %106 : vector<16x1xf32> to vector<16x16xf32>
    %108 = arith.subf %104, %107 : vector<16x16xf32>
    %109 = math.exp %108 : vector<16x16xf32>
    %cst_46 = arith.constant dense<0.000000e+00> : vector<16xf32>
    %110 = vector.multi_reduction <add>, %109, %cst_46 [1] : vector<16x16xf32> to vector<16xf32>
    %111 = vector.shape_cast %110 : vector<16xf32> to vector<16x1xf32>
    %112 = tpu.reciprocal %111 {approx = true} : vector<16x1xf32> -> vector<16x1xf32>
    %113 = vector.broadcast %112 : vector<16x1xf32> to vector<16x16xf32>
    %114 = arith.mulf %109, %113 : vector<16x16xf32>
    %cst_47 = arith.constant dense<0.000000e+00> : vector<16x8xf32>
    %115 = tpu.matmul %114, %100, %cst_47 {dimension_numbers = #tpu.dot_dimension_numbers<[1], [0], [0], [1], [0, 0, 1, 1], [], []>} : vector<16x16xf32>, vector<16x8xf32>, vector<16x8xf32> -> vector<16x8xf32>
    %116 = vector.extract_strided_slice %37 {offsets = [16, 0], sizes = [8, 32], strides = [1, 1]} : vector<32x32xf32> to vector<8x32xf32>
    %cst_48 = arith.constant dense<0.000000e+00> : vector<16x32xf32>
    %117 = tpu.matmul %115, %116, %cst_48 {dimension_numbers = #tpu.dot_dimension_numbers<[1], [0], [0], [1], [0, 0, 1, 1], [], []>} : vector<16x8xf32>, vector<8x32xf32>, vector<16x32xf32> -> vector<16x32xf32>
    %118 = arith.addf %97, %117 : vector<16x32xf32>
    %119 = vector.extract_strided_slice %54 {offsets = [0, 24], sizes = [16, 8], strides = [1, 1]} : vector<16x96xf32> to vector<16x8xf32>
    %120 = vector.extract_strided_slice %54 {offsets = [0, 56], sizes = [16, 8], strides = [1, 1]} : vector<16x96xf32> to vector<16x8xf32>
    %121 = vector.extract_strided_slice %54 {offsets = [0, 88], sizes = [16, 8], strides = [1, 1]} : vector<16x96xf32> to vector<16x8xf32>
    %cst_49 = arith.constant dense<0.000000e+00> : vector<16x16xf32>
    %122 = tpu.matmul %119, %120, %cst_49 {dimension_numbers = #tpu.dot_dimension_numbers<[1], [1], [0], [0], [0, 0, 1, 0], [], []>} : vector<16x8xf32>, vector<16x8xf32>, vector<16x16xf32> -> vector<16x16xf32>
    %cst_50 = arith.constant 0.353553385 : f32
    %123 = vector.broadcast %cst_50 : f32 to vector<16x16xf32>
    %124 = arith.mulf %122, %123 : vector<16x16xf32>
    %125 = arith.addf %124, %31 : vector<16x16xf32>
    %cst_51 = arith.constant dense<0xFF800000> : vector<16xf32>
    %126 = vector.multi_reduction <maximumf>, %125, %cst_51 [1] : vector<16x16xf32> to vector<16xf32>
    %127 = vector.shape_cast %126 : vector<16xf32> to vector<16x1xf32>
    %128 = vector.broadcast %127 : vector<16x1xf32> to vector<16x16xf32>
    %129 = arith.subf %125, %128 : vector<16x16xf32>
    %130 = math.exp %129 : vector<16x16xf32>
    %cst_52 = arith.constant dense<0.000000e+00> : vector<16xf32>
    %131 = vector.multi_reduction <add>, %130, %cst_52 [1] : vector<16x16xf32> to vector<16xf32>
    %132 = vector.shape_cast %131 : vector<16xf32> to vector<16x1xf32>
    %133 = tpu.reciprocal %132 {approx = true} : vector<16x1xf32> -> vector<16x1xf32>
    %134 = vector.broadcast %133 : vector<16x1xf32> to vector<16x16xf32>
    %135 = arith.mulf %130, %134 : vector<16x16xf32>
    %cst_53 = arith.constant dense<0.000000e+00> : vector<16x8xf32>
    %136 = tpu.matmul %135, %121, %cst_53 {dimension_numbers = #tpu.dot_dimension_numbers<[1], [0], [0], [1], [0, 0, 1, 1], [], []>} : vector<16x16xf32>, vector<16x8xf32>, vector<16x8xf32> -> vector<16x8xf32>
    %137 = vector.extract_strided_slice %37 {offsets = [24, 0], sizes = [8, 32], strides = [1, 1]} : vector<32x32xf32> to vector<8x32xf32>
    %cst_54 = arith.constant dense<0.000000e+00> : vector<16x32xf32>
    %138 = tpu.matmul %136, %137, %cst_54 {dimension_numbers = #tpu.dot_dimension_numbers<[1], [0], [0], [1], [0, 0, 1, 1], [], []>} : vector<16x8xf32>, vector<8x32xf32>, vector<16x32xf32> -> vector<16x32xf32>
    %139 = arith.addf %118, %138 : vector<16x32xf32>
    %140 = vector.broadcast %46 : vector<1x32xf32> to vector<16x32xf32>
    %141 = arith.addf %139, %140 : vector<16x32xf32>
    %142 = arith.addf %30, %141 : vector<16x32xf32>
    %cst_55 = arith.constant dense<0.000000e+00> : vector<16xf32>
    %143 = vector.multi_reduction <add>, %142, %cst_55 [1] : vector<16x32xf32> to vector<16xf32>
    %144 = vector.shape_cast %143 : vector<16xf32> to vector<16x1xf32>
    %cst_56 = arith.constant 3.200000e+01 : f32
    %145 = vector.broadcast %cst_56 : f32 to vector<16x1xf32>
    %146 = arith.divf %144, %145 : vector<16x1xf32>
    %147 = vector.broadcast %146 : vector<16x1xf32> to vector<16x32xf32>
    %148 = arith.subf %142, %147 : vector<16x32xf32>
    %149 = arith.mulf %148, %148 : vector<16x32xf32>
    %cst_57 = arith.constant dense<0.000000e+00> : vector<16xf32>
    %150 = vector.multi_reduction <add>, %149, %cst_57 [1] : vector<16x32xf32> to vector<16xf32>
    %151 = vector.shape_cast %150 : vector<16xf32> to vector<16x1xf32>
    %cst_58 = arith.constant 3.200000e+01 : f32
    %152 = vector.broadcast %cst_58 : f32 to vector<16x1xf32>
    %153 = arith.divf %151, %152 : vector<16x1xf32>
    %154 = vector.broadcast %146 : vector<16x1xf32> to vector<16x32xf32>
    %155 = arith.subf %142, %154 : vector<16x32xf32>
    %cst_59 = arith.constant 9.99999974E-6 : f32
    %156 = vector.broadcast %cst_59 : f32 to vector<16x1xf32>
    %157 = arith.addf %153, %156 : vector<16x1xf32>
    %158 = math.rsqrt %157 : vector<16x1xf32>
    %159 = vector.broadcast %158 : vector<16x1xf32> to vector<16x32xf32>
    %160 = arith.mulf %155, %159 : vector<16x32xf32>
    %161 = vector.broadcast %47 : vector<1x32xf32> to vector<16x32xf32>
    %162 = arith.mulf %160, %161 : vector<16x32xf32>
    %163 = vector.broadcast %48 : vector<1x32xf32> to vector<16x32xf32>
    %164 = arith.addf %162, %163 : vector<16x32xf32>
    %cst_60 = arith.constant dense<0.000000e+00> : vector<16x64xf32>
    %165 = tpu.matmul %164, %39, %cst_60 {dimension_numbers = #tpu.dot_dimension_numbers<[1], [0], [0], [1], [0, 0, 1, 1], [], []>} : vector<16x32xf32>, vector<32x64xf32>, vector<16x64xf32> -> vector<16x64xf32>
    %166 = vector.broadcast %41 : vector<1x64xf32> to vector<16x64xf32>
    %167 = arith.addf %165, %166 : vector<16x64xf32>
    %cst_61 = arith.constant 0.000000e+00 : f32
    %168 = vector.broadcast %cst_61 : f32 to vector<16x64xf32>
    %169 = arith.maximumf %167, %168 : vector<16x64xf32>
    %cst_62 = arith.constant dense<0.000000e+00> : vector<16x32xf32>
    %170 = tpu.matmul %169, %43, %cst_62 {dimension_numbers = #tpu.dot_dimension_numbers<[1], [0], [0], [1], [0, 0, 1, 1], [], []>} : vector<16x64xf32>, vector<64x32xf32>, vector<16x32xf32> -> vector<16x32xf32>
    %171 = vector.broadcast %49 : vector<1x32xf32> to vector<16x32xf32>
    %172 = arith.addf %170, %171 : vector<16x32xf32>
    %173 = arith.addf %164, %172 : vector<16x32xf32>
    %cst_63 = arith.constant dense<0.000000e+00> : vector<16xf32>
    %174 = vector.multi_reduction <add>, %173, %cst_63 [1] : vector<16x32xf32> to vector<16xf32>
    %175 = vector.shape_cast %174 : vector<16xf32> to vector<16x1xf32>
    %cst_64 = arith.constant 3.200000e+01 : f32
    %176 = vector.broadcast %cst_64 : f32 to vector<16x1xf32>
    %177 = arith.divf %175, %176 : vector<16x1xf32>
    %178 = vector.broadcast %177 : vector<16x1xf32> to vector<16x32xf32>
    %179 = arith.subf %173, %178 : vector<16x32xf32>
    %180 = arith.mulf %179, %179 : vector<16x32xf32>
    %cst_65 = arith.constant dense<0.000000e+00> : vector<16xf32>
    %181 = vector.multi_reduction <add>, %180, %cst_65 [1] : vector<16x32xf32> to vector<16xf32>
    %182 = vector.shape_cast %181 : vector<16xf32> to vector<16x1xf32>
    %cst_66 = arith.constant 3.200000e+01 : f32
    %183 = vector.broadcast %cst_66 : f32 to vector<16x1xf32>
    %184 = arith.divf %182, %183 : vector<16x1xf32>
    %185 = vector.broadcast %177 : vector<16x1xf32> to vector<16x32xf32>
    %186 = arith.subf %173, %185 : vector<16x32xf32>
    %cst_67 = arith.constant 9.99999974E-6 : f32
    %187 = vector.broadcast %cst_67 : f32 to vector<16x1xf32>
    %188 = arith.addf %184, %187 : vector<16x1xf32>
    %189 = math.rsqrt %188 : vector<16x1xf32>
    %190 = vector.broadcast %189 : vector<16x1xf32> to vector<16x32xf32>
    %191 = arith.mulf %186, %190 : vector<16x32xf32>
    %192 = vector.broadcast %50 : vector<1x32xf32> to vector<16x32xf32>
    %193 = arith.mulf %191, %192 : vector<16x32xf32>
    %194 = vector.broadcast %51 : vector<1x32xf32> to vector<16x32xf32>
    %195 = arith.addf %193, %194 : vector<16x32xf32>
    %c1 = arith.constant 1 : index
    %c0_68 = arith.constant 0 : index
    %c0_69 = arith.constant 0 : index
    %196 = vector.load %arg5[%c1, %c0_68, %c0_69] : memref<2x32x96xf32, #tpu.memory_space<vmem>>, vector<1x32x96xf32>
    %197 = vector.shape_cast %196 : vector<1x32x96xf32> to vector<32x96xf32>
    %c1_70 = arith.constant 1 : index
    %c0_71 = arith.constant 0 : index
    %c0_72 = arith.constant 0 : index
    %198 = vector.load %arg6[%c1_70, %c0_71, %c0_72] : memref<2x1x96xf32, #tpu.memory_space<vmem>>, vector<1x1x96xf32>
    %199 = vector.shape_cast %198 : vector<1x1x96xf32> to vector<1x96xf32>
    %c1_73 = arith.constant 1 : index
    %c0_74 = arith.constant 0 : index
    %c0_75 = arith.constant 0 : index
    %200 = vector.load %arg7[%c1_73, %c0_74, %c0_75] : memref<2x32x32xf32, #tpu.memory_space<vmem>>, vector<1x32x32xf32>
    %201 = vector.shape_cast %200 : vector<1x32x32xf32> to vector<32x32xf32>
    %c1_76 = arith.constant 1 : index
    %c0_77 = arith.constant 0 : index
    %c0_78 = arith.constant 0 : index
    %202 = vector.load %arg8[%c1_76, %c0_77, %c0_78] : memref<2x32x64xf32, #tpu.memory_space<vmem>>, vector<1x32x64xf32>
    %203 = vector.shape_cast %202 : vector<1x32x64xf32> to vector<32x64xf32>
    %c1_79 = arith.constant 1 : index
    %c0_80 = arith.constant 0 : index
    %c0_81 = arith.constant 0 : index
    %204 = vector.load %arg9[%c1_79, %c0_80, %c0_81] : memref<2x1x64xf32, #tpu.memory_space<vmem>>, vector<1x1x64xf32>
    %205 = vector.shape_cast %204 : vector<1x1x64xf32> to vector<1x64xf32>
    %c1_82 = arith.constant 1 : index
    %c0_83 = arith.constant 0 : index
    %c0_84 = arith.constant 0 : index
    %206 = vector.load %arg10[%c1_82, %c0_83, %c0_84] : memref<2x64x32xf32, #tpu.memory_space<vmem>>, vector<1x64x32xf32>
    %207 = vector.shape_cast %206 : vector<1x64x32xf32> to vector<64x32xf32>
    %c1_85 = arith.constant 1 : index
    %c0_86 = arith.constant 0 : index
    %c0_87 = arith.constant 0 : index
    %208 = vector.load %arg11[%c1_85, %c0_86, %c0_87] : memref<2x6x32xf32, #tpu.memory_space<vmem>>, vector<1x6x32xf32>
    %209 = vector.shape_cast %208 : vector<1x6x32xf32> to vector<6x32xf32>
    %210 = vector.extract_strided_slice %209 {offsets = [0, 0], sizes = [1, 32], strides = [1, 1]} : vector<6x32xf32> to vector<1x32xf32>
    %211 = vector.extract_strided_slice %209 {offsets = [1, 0], sizes = [1, 32], strides = [1, 1]} : vector<6x32xf32> to vector<1x32xf32>
    %212 = vector.extract_strided_slice %209 {offsets = [2, 0], sizes = [1, 32], strides = [1, 1]} : vector<6x32xf32> to vector<1x32xf32>
    %213 = vector.extract_strided_slice %209 {offsets = [3, 0], sizes = [1, 32], strides = [1, 1]} : vector<6x32xf32> to vector<1x32xf32>
    %214 = vector.extract_strided_slice %209 {offsets = [4, 0], sizes = [1, 32], strides = [1, 1]} : vector<6x32xf32> to vector<1x32xf32>
    %215 = vector.extract_strided_slice %209 {offsets = [5, 0], sizes = [1, 32], strides = [1, 1]} : vector<6x32xf32> to vector<1x32xf32>
    %cst_88 = arith.constant dense<0.000000e+00> : vector<16x96xf32>
    %216 = tpu.matmul %195, %197, %cst_88 {dimension_numbers = #tpu.dot_dimension_numbers<[1], [0], [0], [1], [0, 0, 1, 1], [], []>} : vector<16x32xf32>, vector<32x96xf32>, vector<16x96xf32> -> vector<16x96xf32>
    %217 = vector.broadcast %199 : vector<1x96xf32> to vector<16x96xf32>
    %218 = arith.addf %216, %217 : vector<16x96xf32>
    %cst_89 = arith.constant 0.000000e+00 : f32
    %219 = vector.broadcast %cst_89 : f32 to vector<16x32xf32>
    %220 = vector.extract_strided_slice %218 {offsets = [0, 0], sizes = [16, 8], strides = [1, 1]} : vector<16x96xf32> to vector<16x8xf32>
    %221 = vector.extract_strided_slice %218 {offsets = [0, 32], sizes = [16, 8], strides = [1, 1]} : vector<16x96xf32> to vector<16x8xf32>
    %222 = vector.extract_strided_slice %218 {offsets = [0, 64], sizes = [16, 8], strides = [1, 1]} : vector<16x96xf32> to vector<16x8xf32>
    %cst_90 = arith.constant dense<0.000000e+00> : vector<16x16xf32>
    %223 = tpu.matmul %220, %221, %cst_90 {dimension_numbers = #tpu.dot_dimension_numbers<[1], [1], [0], [0], [0, 0, 1, 0], [], []>} : vector<16x8xf32>, vector<16x8xf32>, vector<16x16xf32> -> vector<16x16xf32>
    %cst_91 = arith.constant 0.353553385 : f32
    %224 = vector.broadcast %cst_91 : f32 to vector<16x16xf32>
    %225 = arith.mulf %223, %224 : vector<16x16xf32>
    %226 = arith.addf %225, %31 : vector<16x16xf32>
    %cst_92 = arith.constant dense<0xFF800000> : vector<16xf32>
    %227 = vector.multi_reduction <maximumf>, %226, %cst_92 [1] : vector<16x16xf32> to vector<16xf32>
    %228 = vector.shape_cast %227 : vector<16xf32> to vector<16x1xf32>
    %229 = vector.broadcast %228 : vector<16x1xf32> to vector<16x16xf32>
    %230 = arith.subf %226, %229 : vector<16x16xf32>
    %231 = math.exp %230 : vector<16x16xf32>
    %cst_93 = arith.constant dense<0.000000e+00> : vector<16xf32>
    %232 = vector.multi_reduction <add>, %231, %cst_93 [1] : vector<16x16xf32> to vector<16xf32>
    %233 = vector.shape_cast %232 : vector<16xf32> to vector<16x1xf32>
    %234 = tpu.reciprocal %233 {approx = true} : vector<16x1xf32> -> vector<16x1xf32>
    %235 = vector.broadcast %234 : vector<16x1xf32> to vector<16x16xf32>
    %236 = arith.mulf %231, %235 : vector<16x16xf32>
    %cst_94 = arith.constant dense<0.000000e+00> : vector<16x8xf32>
    %237 = tpu.matmul %236, %222, %cst_94 {dimension_numbers = #tpu.dot_dimension_numbers<[1], [0], [0], [1], [0, 0, 1, 1], [], []>} : vector<16x16xf32>, vector<16x8xf32>, vector<16x8xf32> -> vector<16x8xf32>
    %238 = vector.extract_strided_slice %201 {offsets = [0, 0], sizes = [8, 32], strides = [1, 1]} : vector<32x32xf32> to vector<8x32xf32>
    %cst_95 = arith.constant dense<0.000000e+00> : vector<16x32xf32>
    %239 = tpu.matmul %237, %238, %cst_95 {dimension_numbers = #tpu.dot_dimension_numbers<[1], [0], [0], [1], [0, 0, 1, 1], [], []>} : vector<16x8xf32>, vector<8x32xf32>, vector<16x32xf32> -> vector<16x32xf32>
    %240 = arith.addf %219, %239 : vector<16x32xf32>
    %241 = vector.extract_strided_slice %218 {offsets = [0, 8], sizes = [16, 8], strides = [1, 1]} : vector<16x96xf32> to vector<16x8xf32>
    %242 = vector.extract_strided_slice %218 {offsets = [0, 40], sizes = [16, 8], strides = [1, 1]} : vector<16x96xf32> to vector<16x8xf32>
    %243 = vector.extract_strided_slice %218 {offsets = [0, 72], sizes = [16, 8], strides = [1, 1]} : vector<16x96xf32> to vector<16x8xf32>
    %cst_96 = arith.constant dense<0.000000e+00> : vector<16x16xf32>
    %244 = tpu.matmul %241, %242, %cst_96 {dimension_numbers = #tpu.dot_dimension_numbers<[1], [1], [0], [0], [0, 0, 1, 0], [], []>} : vector<16x8xf32>, vector<16x8xf32>, vector<16x16xf32> -> vector<16x16xf32>
    %cst_97 = arith.constant 0.353553385 : f32
    %245 = vector.broadcast %cst_97 : f32 to vector<16x16xf32>
    %246 = arith.mulf %244, %245 : vector<16x16xf32>
    %247 = arith.addf %246, %31 : vector<16x16xf32>
    %cst_98 = arith.constant dense<0xFF800000> : vector<16xf32>
    %248 = vector.multi_reduction <maximumf>, %247, %cst_98 [1] : vector<16x16xf32> to vector<16xf32>
    %249 = vector.shape_cast %248 : vector<16xf32> to vector<16x1xf32>
    %250 = vector.broadcast %249 : vector<16x1xf32> to vector<16x16xf32>
    %251 = arith.subf %247, %250 : vector<16x16xf32>
    %252 = math.exp %251 : vector<16x16xf32>
    %cst_99 = arith.constant dense<0.000000e+00> : vector<16xf32>
    %253 = vector.multi_reduction <add>, %252, %cst_99 [1] : vector<16x16xf32> to vector<16xf32>
    %254 = vector.shape_cast %253 : vector<16xf32> to vector<16x1xf32>
    %255 = tpu.reciprocal %254 {approx = true} : vector<16x1xf32> -> vector<16x1xf32>
    %256 = vector.broadcast %255 : vector<16x1xf32> to vector<16x16xf32>
    %257 = arith.mulf %252, %256 : vector<16x16xf32>
    %cst_100 = arith.constant dense<0.000000e+00> : vector<16x8xf32>
    %258 = tpu.matmul %257, %243, %cst_100 {dimension_numbers = #tpu.dot_dimension_numbers<[1], [0], [0], [1], [0, 0, 1, 1], [], []>} : vector<16x16xf32>, vector<16x8xf32>, vector<16x8xf32> -> vector<16x8xf32>
    %259 = vector.extract_strided_slice %201 {offsets = [8, 0], sizes = [8, 32], strides = [1, 1]} : vector<32x32xf32> to vector<8x32xf32>
    %cst_101 = arith.constant dense<0.000000e+00> : vector<16x32xf32>
    %260 = tpu.matmul %258, %259, %cst_101 {dimension_numbers = #tpu.dot_dimension_numbers<[1], [0], [0], [1], [0, 0, 1, 1], [], []>} : vector<16x8xf32>, vector<8x32xf32>, vector<16x32xf32> -> vector<16x32xf32>
    %261 = arith.addf %240, %260 : vector<16x32xf32>
    %262 = vector.extract_strided_slice %218 {offsets = [0, 16], sizes = [16, 8], strides = [1, 1]} : vector<16x96xf32> to vector<16x8xf32>
    %263 = vector.extract_strided_slice %218 {offsets = [0, 48], sizes = [16, 8], strides = [1, 1]} : vector<16x96xf32> to vector<16x8xf32>
    %264 = vector.extract_strided_slice %218 {offsets = [0, 80], sizes = [16, 8], strides = [1, 1]} : vector<16x96xf32> to vector<16x8xf32>
    %cst_102 = arith.constant dense<0.000000e+00> : vector<16x16xf32>
    %265 = tpu.matmul %262, %263, %cst_102 {dimension_numbers = #tpu.dot_dimension_numbers<[1], [1], [0], [0], [0, 0, 1, 0], [], []>} : vector<16x8xf32>, vector<16x8xf32>, vector<16x16xf32> -> vector<16x16xf32>
    %cst_103 = arith.constant 0.353553385 : f32
    %266 = vector.broadcast %cst_103 : f32 to vector<16x16xf32>
    %267 = arith.mulf %265, %266 : vector<16x16xf32>
    %268 = arith.addf %267, %31 : vector<16x16xf32>
    %cst_104 = arith.constant dense<0xFF800000> : vector<16xf32>
    %269 = vector.multi_reduction <maximumf>, %268, %cst_104 [1] : vector<16x16xf32> to vector<16xf32>
    %270 = vector.shape_cast %269 : vector<16xf32> to vector<16x1xf32>
    %271 = vector.broadcast %270 : vector<16x1xf32> to vector<16x16xf32>
    %272 = arith.subf %268, %271 : vector<16x16xf32>
    %273 = math.exp %272 : vector<16x16xf32>
    %cst_105 = arith.constant dense<0.000000e+00> : vector<16xf32>
    %274 = vector.multi_reduction <add>, %273, %cst_105 [1] : vector<16x16xf32> to vector<16xf32>
    %275 = vector.shape_cast %274 : vector<16xf32> to vector<16x1xf32>
    %276 = tpu.reciprocal %275 {approx = true} : vector<16x1xf32> -> vector<16x1xf32>
    %277 = vector.broadcast %276 : vector<16x1xf32> to vector<16x16xf32>
    %278 = arith.mulf %273, %277 : vector<16x16xf32>
    %cst_106 = arith.constant dense<0.000000e+00> : vector<16x8xf32>
    %279 = tpu.matmul %278, %264, %cst_106 {dimension_numbers = #tpu.dot_dimension_numbers<[1], [0], [0], [1], [0, 0, 1, 1], [], []>} : vector<16x16xf32>, vector<16x8xf32>, vector<16x8xf32> -> vector<16x8xf32>
    %280 = vector.extract_strided_slice %201 {offsets = [16, 0], sizes = [8, 32], strides = [1, 1]} : vector<32x32xf32> to vector<8x32xf32>
    %cst_107 = arith.constant dense<0.000000e+00> : vector<16x32xf32>
    %281 = tpu.matmul %279, %280, %cst_107 {dimension_numbers = #tpu.dot_dimension_numbers<[1], [0], [0], [1], [0, 0, 1, 1], [], []>} : vector<16x8xf32>, vector<8x32xf32>, vector<16x32xf32> -> vector<16x32xf32>
    %282 = arith.addf %261, %281 : vector<16x32xf32>
    %283 = vector.extract_strided_slice %218 {offsets = [0, 24], sizes = [16, 8], strides = [1, 1]} : vector<16x96xf32> to vector<16x8xf32>
    %284 = vector.extract_strided_slice %218 {offsets = [0, 56], sizes = [16, 8], strides = [1, 1]} : vector<16x96xf32> to vector<16x8xf32>
    %285 = vector.extract_strided_slice %218 {offsets = [0, 88], sizes = [16, 8], strides = [1, 1]} : vector<16x96xf32> to vector<16x8xf32>
    %cst_108 = arith.constant dense<0.000000e+00> : vector<16x16xf32>
    %286 = tpu.matmul %283, %284, %cst_108 {dimension_numbers = #tpu.dot_dimension_numbers<[1], [1], [0], [0], [0, 0, 1, 0], [], []>} : vector<16x8xf32>, vector<16x8xf32>, vector<16x16xf32> -> vector<16x16xf32>
    %cst_109 = arith.constant 0.353553385 : f32
    %287 = vector.broadcast %cst_109 : f32 to vector<16x16xf32>
    %288 = arith.mulf %286, %287 : vector<16x16xf32>
    %289 = arith.addf %288, %31 : vector<16x16xf32>
    %cst_110 = arith.constant dense<0xFF800000> : vector<16xf32>
    %290 = vector.multi_reduction <maximumf>, %289, %cst_110 [1] : vector<16x16xf32> to vector<16xf32>
    %291 = vector.shape_cast %290 : vector<16xf32> to vector<16x1xf32>
    %292 = vector.broadcast %291 : vector<16x1xf32> to vector<16x16xf32>
    %293 = arith.subf %289, %292 : vector<16x16xf32>
    %294 = math.exp %293 : vector<16x16xf32>
    %cst_111 = arith.constant dense<0.000000e+00> : vector<16xf32>
    %295 = vector.multi_reduction <add>, %294, %cst_111 [1] : vector<16x16xf32> to vector<16xf32>
    %296 = vector.shape_cast %295 : vector<16xf32> to vector<16x1xf32>
    %297 = tpu.reciprocal %296 {approx = true} : vector<16x1xf32> -> vector<16x1xf32>
    %298 = vector.broadcast %297 : vector<16x1xf32> to vector<16x16xf32>
    %299 = arith.mulf %294, %298 : vector<16x16xf32>
    %cst_112 = arith.constant dense<0.000000e+00> : vector<16x8xf32>
    %300 = tpu.matmul %299, %285, %cst_112 {dimension_numbers = #tpu.dot_dimension_numbers<[1], [0], [0], [1], [0, 0, 1, 1], [], []>} : vector<16x16xf32>, vector<16x8xf32>, vector<16x8xf32> -> vector<16x8xf32>
    %301 = vector.extract_strided_slice %201 {offsets = [24, 0], sizes = [8, 32], strides = [1, 1]} : vector<32x32xf32> to vector<8x32xf32>
    %cst_113 = arith.constant dense<0.000000e+00> : vector<16x32xf32>
    %302 = tpu.matmul %300, %301, %cst_113 {dimension_numbers = #tpu.dot_dimension_numbers<[1], [0], [0], [1], [0, 0, 1, 1], [], []>} : vector<16x8xf32>, vector<8x32xf32>, vector<16x32xf32> -> vector<16x32xf32>
    %303 = arith.addf %282, %302 : vector<16x32xf32>
    %304 = vector.broadcast %210 : vector<1x32xf32> to vector<16x32xf32>
    %305 = arith.addf %303, %304 : vector<16x32xf32>
    %306 = arith.addf %195, %305 : vector<16x32xf32>
    %cst_114 = arith.constant dense<0.000000e+00> : vector<16xf32>
    %307 = vector.multi_reduction <add>, %306, %cst_114 [1] : vector<16x32xf32> to vector<16xf32>
    %308 = vector.shape_cast %307 : vector<16xf32> to vector<16x1xf32>
    %cst_115 = arith.constant 3.200000e+01 : f32
    %309 = vector.broadcast %cst_115 : f32 to vector<16x1xf32>
    %310 = arith.divf %308, %309 : vector<16x1xf32>
    %311 = vector.broadcast %310 : vector<16x1xf32> to vector<16x32xf32>
    %312 = arith.subf %306, %311 : vector<16x32xf32>
    %313 = arith.mulf %312, %312 : vector<16x32xf32>
    %cst_116 = arith.constant dense<0.000000e+00> : vector<16xf32>
    %314 = vector.multi_reduction <add>, %313, %cst_116 [1] : vector<16x32xf32> to vector<16xf32>
    %315 = vector.shape_cast %314 : vector<16xf32> to vector<16x1xf32>
    %cst_117 = arith.constant 3.200000e+01 : f32
    %316 = vector.broadcast %cst_117 : f32 to vector<16x1xf32>
    %317 = arith.divf %315, %316 : vector<16x1xf32>
    %318 = vector.broadcast %310 : vector<16x1xf32> to vector<16x32xf32>
    %319 = arith.subf %306, %318 : vector<16x32xf32>
    %cst_118 = arith.constant 9.99999974E-6 : f32
    %320 = vector.broadcast %cst_118 : f32 to vector<16x1xf32>
    %321 = arith.addf %317, %320 : vector<16x1xf32>
    %322 = math.rsqrt %321 : vector<16x1xf32>
    %323 = vector.broadcast %322 : vector<16x1xf32> to vector<16x32xf32>
    %324 = arith.mulf %319, %323 : vector<16x32xf32>
    %325 = vector.broadcast %211 : vector<1x32xf32> to vector<16x32xf32>
    %326 = arith.mulf %324, %325 : vector<16x32xf32>
    %327 = vector.broadcast %212 : vector<1x32xf32> to vector<16x32xf32>
    %328 = arith.addf %326, %327 : vector<16x32xf32>
    %cst_119 = arith.constant dense<0.000000e+00> : vector<16x64xf32>
    %329 = tpu.matmul %328, %203, %cst_119 {dimension_numbers = #tpu.dot_dimension_numbers<[1], [0], [0], [1], [0, 0, 1, 1], [], []>} : vector<16x32xf32>, vector<32x64xf32>, vector<16x64xf32> -> vector<16x64xf32>
    %330 = vector.broadcast %205 : vector<1x64xf32> to vector<16x64xf32>
    %331 = arith.addf %329, %330 : vector<16x64xf32>
    %cst_120 = arith.constant 0.000000e+00 : f32
    %332 = vector.broadcast %cst_120 : f32 to vector<16x64xf32>
    %333 = arith.maximumf %331, %332 : vector<16x64xf32>
    %cst_121 = arith.constant dense<0.000000e+00> : vector<16x32xf32>
    %334 = tpu.matmul %333, %207, %cst_121 {dimension_numbers = #tpu.dot_dimension_numbers<[1], [0], [0], [1], [0, 0, 1, 1], [], []>} : vector<16x64xf32>, vector<64x32xf32>, vector<16x32xf32> -> vector<16x32xf32>
    %335 = vector.broadcast %213 : vector<1x32xf32> to vector<16x32xf32>
    %336 = arith.addf %334, %335 : vector<16x32xf32>
    %337 = arith.addf %328, %336 : vector<16x32xf32>
    %cst_122 = arith.constant dense<0.000000e+00> : vector<16xf32>
    %338 = vector.multi_reduction <add>, %337, %cst_122 [1] : vector<16x32xf32> to vector<16xf32>
    %339 = vector.shape_cast %338 : vector<16xf32> to vector<16x1xf32>
    %cst_123 = arith.constant 3.200000e+01 : f32
    %340 = vector.broadcast %cst_123 : f32 to vector<16x1xf32>
    %341 = arith.divf %339, %340 : vector<16x1xf32>
    %342 = vector.broadcast %341 : vector<16x1xf32> to vector<16x32xf32>
    %343 = arith.subf %337, %342 : vector<16x32xf32>
    %344 = arith.mulf %343, %343 : vector<16x32xf32>
    %cst_124 = arith.constant dense<0.000000e+00> : vector<16xf32>
    %345 = vector.multi_reduction <add>, %344, %cst_124 [1] : vector<16x32xf32> to vector<16xf32>
    %346 = vector.shape_cast %345 : vector<16xf32> to vector<16x1xf32>
    %cst_125 = arith.constant 3.200000e+01 : f32
    %347 = vector.broadcast %cst_125 : f32 to vector<16x1xf32>
    %348 = arith.divf %346, %347 : vector<16x1xf32>
    %349 = vector.broadcast %341 : vector<16x1xf32> to vector<16x32xf32>
    %350 = arith.subf %337, %349 : vector<16x32xf32>
    %cst_126 = arith.constant 9.99999974E-6 : f32
    %351 = vector.broadcast %cst_126 : f32 to vector<16x1xf32>
    %352 = arith.addf %348, %351 : vector<16x1xf32>
    %353 = math.rsqrt %352 : vector<16x1xf32>
    %354 = vector.broadcast %353 : vector<16x1xf32> to vector<16x32xf32>
    %355 = arith.mulf %350, %354 : vector<16x32xf32>
    %356 = vector.broadcast %214 : vector<1x32xf32> to vector<16x32xf32>
    %357 = arith.mulf %355, %356 : vector<16x32xf32>
    %358 = vector.broadcast %215 : vector<1x32xf32> to vector<16x32xf32>
    %359 = arith.addf %357, %358 : vector<16x32xf32>
    %c0_127 = arith.constant 0 : index
    %c0_128 = arith.constant 0 : index
    %360 = vector.load %arg12[%c0_127, %c0_128] : memref<32x128xf32, #tpu.memory_space<vmem>>, vector<32x128xf32>
    %cst_129 = arith.constant dense<0.000000e+00> : vector<16x128xf32>
    %361 = tpu.matmul %359, %360, %cst_129 {dimension_numbers = #tpu.dot_dimension_numbers<[1], [0], [0], [1], [0, 0, 1, 1], [], []>} : vector<16x32xf32>, vector<32x128xf32>, vector<16x128xf32> -> vector<16x128xf32>
    %c0_130 = arith.constant 0 : index
    %c0_131 = arith.constant 0 : index
    %362 = vector.load %arg13[%c0_130, %c0_131] : memref<1x128xf32, #tpu.memory_space<vmem>>, vector<1x128xf32>
    %363 = vector.broadcast %362 : vector<1x128xf32> to vector<16x128xf32>
    %364 = arith.addf %361, %363 : vector<16x128xf32>
    %c0_132 = arith.constant 0 : index
    %c0_133 = arith.constant 0 : index
    %365 = vector.load %arg14[%c0_132, %c0_133] : memref<16x128xf32, #tpu.memory_space<vmem>>, vector<16x128xf32>
    tpu.vector_store %arg14[%c0_132, %c0_133], %364 {strides = array<i32>} : memref<16x128xf32, #tpu.memory_space<vmem>>, vector<16x128xf32>,
    return
  }
  func.func @transform_0(%arg0: i32) -> (i32, i32) {
    %c0_i32 = arith.constant 0 : i32
    %c0_i32_0 = arith.constant 0 : i32
    %c0_i32_1 = arith.constant 0 : i32
    return %c0_i32, %c0_i32_0 : i32, i32
  }
  func.func @transform_1(%arg0: i32) -> (i32, i32) {
    %c0_i32 = arith.constant 0 : i32
    %c0_i32_0 = arith.constant 0 : i32
    %c0_i32_1 = arith.constant 0 : i32
    return %c0_i32, %c0_i32_0 : i32, i32
  }
  func.func @transform_2(%arg0: i32) -> (i32, i32) {
    %c0_i32 = arith.constant 0 : i32
    %c0_i32_0 = arith.constant 0 : i32
    %c0_i32_1 = arith.constant 0 : i32
    return %c0_i32, %c0_i32_0 : i32, i32
  }
  func.func @transform_3(%arg0: i32) -> (i32, i32) {
    %c0_i32 = arith.constant 0 : i32
    %c0_i32_0 = arith.constant 0 : i32
    %c0_i32_1 = arith.constant 0 : i32
    return %c0_i32, %c0_i32_0 : i32, i32
  }
  func.func @transform_4(%arg0: i32) -> (i32, i32, i32) {
    %c0_i32 = arith.constant 0 : i32
    %c0_i32_0 = arith.constant 0 : i32
    %c0_i32_1 = arith.constant 0 : i32
    %c0_i32_2 = arith.constant 0 : i32
    return %c0_i32, %c0_i32_0, %c0_i32_1 : i32, i32, i32
  }
  func.func @transform_5(%arg0: i32) -> (i32, i32, i32) {
    %c0_i32 = arith.constant 0 : i32
    %c0_i32_0 = arith.constant 0 : i32
    %c0_i32_1 = arith.constant 0 : i32
    %c0_i32_2 = arith.constant 0 : i32
    return %c0_i32, %c0_i32_0, %c0_i32_1 : i32, i32, i32
  }
  func.func @transform_6(%arg0: i32) -> (i32, i32, i32) {
    %c0_i32 = arith.constant 0 : i32
    %c0_i32_0 = arith.constant 0 : i32
    %c0_i32_1 = arith.constant 0 : i32
    %c0_i32_2 = arith.constant 0 : i32
    return %c0_i32, %c0_i32_0, %c0_i32_1 : i32, i32, i32
  }
  func.func @transform_7(%arg0: i32) -> (i32, i32, i32) {
    %c0_i32 = arith.constant 0 : i32
    %c0_i32_0 = arith.constant 0 : i32
    %c0_i32_1 = arith.constant 0 : i32
    %c0_i32_2 = arith.constant 0 : i32
    return %c0_i32, %c0_i32_0, %c0_i32_1 : i32, i32, i32
  }
  func.func @transform_8(%arg0: i32) -> (i32, i32, i32) {
    %c0_i32 = arith.constant 0 : i32
    %c0_i32_0 = arith.constant 0 : i32
    %c0_i32_1 = arith.constant 0 : i32
    %c0_i32_2 = arith.constant 0 : i32
    return %c0_i32, %c0_i32_0, %c0_i32_1 : i32, i32, i32
  }
  func.func @transform_9(%arg0: i32) -> (i32, i32, i32) {
    %c0_i32 = arith.constant 0 : i32
    %c0_i32_0 = arith.constant 0 : i32
    %c0_i32_1 = arith.constant 0 : i32
    %c0_i32_2 = arith.constant 0 : i32
    return %c0_i32, %c0_i32_0, %c0_i32_1 : i32, i32, i32
  }
  func.func @transform_10(%arg0: i32) -> (i32, i32, i32) {
    %c0_i32 = arith.constant 0 : i32
    %c0_i32_0 = arith.constant 0 : i32
    %c0_i32_1 = arith.constant 0 : i32
    %c0_i32_2 = arith.constant 0 : i32
    return %c0_i32, %c0_i32_0, %c0_i32_1 : i32, i32, i32
  }
  func.func @transform_11(%arg0: i32) -> (i32, i32) {
    %c0_i32 = arith.constant 0 : i32
    %c0_i32_0 = arith.constant 0 : i32
    %c0_i32_1 = arith.constant 0 : i32
    return %c0_i32, %c0_i32_0 : i32, i32
  }
  func.func @transform_12(%arg0: i32) -> (i32, i32) {
    %c0_i32 = arith.constant 0 : i32
    %c0_i32_0 = arith.constant 0 : i32
    %c0_i32_1 = arith.constant 0 : i32
    return %c0_i32, %c0_i32_0 : i32, i32
  }
  func.func @transform_13(%arg0: i32) -> (i32, i32) {
    %c0_i32 = arith.constant 0 : i32
    %c0_i32_0 = arith.constant 0 : i32
    %c0_i32_1 = arith.constant 0 : i32
    return %c0_i32, %c0_i32_0 : i32, i32
  }
}

</mosaic_0001>

<llo_original>
// kernel: cond_prim_forward.1
$region0: #{cond_prim_forward.1}
  #allocation0 [shape = 'u32[]', space=smem, size = 0x4, offset = 0x4, fixed_abs, tag = 'smem constant byte address 0x4 - core index']
  #allocation1 [shape = 'u32[144,128]{1,0:T(1,128)}', space=vmem, size = 0x12000, scoped, tag = 'internal scratch']
  %s0 = inlined_call_operand.vmem [shape: s32[16,3], index: 0, kind: input, shape index: {}]
  %s1 = inlined_call_operand.vmem [shape: f32[8,32], index: 1, kind: input, shape index: {}]
  %s2 = inlined_call_operand.vmem [shape: f32[16,16], index: 2, kind: input, shape index: {}]
  %s3 = inlined_call_operand.vmem [shape: f32[40,32], index: 3, kind: input, shape index: {}]
  %s4 = inlined_call_operand.vmem [shape: f32[2,32,96], index: 4, kind: input, shape index: {}]
  %s5 = inlined_call_operand.vmem [shape: f32[2,1,96], index: 5, kind: input, shape index: {}]
  %s6 = inlined_call_operand.vmem [shape: f32[2,32,32], index: 6, kind: input, shape index: {}]
  %s7 = inlined_call_operand.vmem [shape: f32[2,32,64], index: 7, kind: input, shape index: {}]
  %s8 = inlined_call_operand.vmem [shape: f32[2,1,64], index: 8, kind: input, shape index: {}]
  %s9 = inlined_call_operand.vmem [shape: f32[2,64,32], index: 9, kind: input, shape index: {}]
  %s10 = inlined_call_operand.vmem [shape: f32[2,6,32], index: 10, kind: input, shape index: {}]
  %s11 = inlined_call_operand.vmem [shape: f32[32,128], index: 11, kind: input, shape index: {}]
  %s12 = inlined_call_operand.vmem [shape: f32[1,128], index: 12, kind: input, shape index: {}]
  %s13 = inlined_call_operand.vmem [shape: f32[16,128], index: 13, kind: output, shape index: {}]
  %s14 = sld [smem:[#allocation0]]
  $region62: #{cond_prim_forward.1} parent=0
    _
  %s16 = ssub.s32 1, %s14
  %s17 = scalar_select 0, %s16, %s14
  // Predicated region
  $region2: #{cond_prim_forward.1} parent=0 // pred_check
    _
  $region3: #{cond_prim_forward.1} parent=0 // pred_check_branch
    %19 = sbr.rel (0) target = $region5
  $region4: #{cond_prim_forward.1} parent=0 // pred_region
    _
  $region5: #{cond_prim_forward.1} parent=0 // pred_fallthru
    _
  // Predicated region
  $region6: #{cond_prim_forward.1} parent=0 // pred_check
    _
  $region7: #{cond_prim_forward.1} parent=0 // pred_check_branch
    %21 = sbr.rel (0) target = $region9
  $region8: #{cond_prim_forward.1} parent=0 // pred_region
    _
  $region9: #{cond_prim_forward.1} parent=0 // pred_fallthru
    _
  // Predicated region
  $region10: #{cond_prim_forward.1} parent=0 // pred_check
    _
  $region11: #{cond_prim_forward.1} parent=0 // pred_check_branch
    %23 = sbr.rel (0) target = $region13
  $region12: #{cond_prim_forward.1} parent=0 // pred_region
    _
  $region13: #{cond_prim_forward.1} parent=0 // pred_fallthru
    _
  // Predicated region
  $region14: #{cond_prim_forward.1} parent=0 // pred_check
    _
  $region15: #{cond_prim_forward.1} parent=0 // pred_check_branch
    %25 = sbr.rel (0) target = $region17
  $region16: #{cond_prim_forward.1} parent=0 // pred_region
    _
  $region17: #{cond_prim_forward.1} parent=0 // pred_fallthru
    _
  // Predicated region
  $region18: #{cond_prim_forward.1} parent=0 // pred_check
    _
  $region19: #{cond_prim_forward.1} parent=0 // pred_check_branch
    %27 = sbr.rel (0) target = $region21
  $region20: #{cond_prim_forward.1} parent=0 // pred_region
    _
  $region21: #{cond_prim_forward.1} parent=0 // pred_fallthru
    _
  // Predicated region
  $region22: #{cond_prim_forward.1} parent=0 // pred_check
    _
  $region23: #{cond_prim_forward.1} parent=0 // pred_check_branch
    %29 = sbr.rel (0) target = $region25
  $region24: #{cond_prim_forward.1} parent=0 // pred_region
    _
  $region25: #{cond_prim_forward.1} parent=0 // pred_fallthru
    _
  // Predicated region
  $region26: #{cond_prim_forward.1} parent=0 // pred_check
    _
  $region27: #{cond_prim_forward.1} parent=0 // pred_check_branch
    %31 = sbr.rel (0) target = $region29
  $region28: #{cond_prim_forward.1} parent=0 // pred_region
    _
  $region29: #{cond_prim_forward.1} parent=0 // pred_fallthru
    _
  // Predicated region
  $region30: #{cond_prim_forward.1} parent=0 // pred_check
    _
  $region31: #{cond_prim_forward.1} parent=0 // pred_check_branch
    %33 = sbr.rel (0) target = $region33
  $region32: #{cond_prim_forward.1} parent=0 // pred_region
    _
  $region33: #{cond_prim_forward.1} parent=0 // pred_fallthru
    _
  // Predicated region
  $region34: #{cond_prim_forward.1} parent=0 // pred_check
    _
  $region35: #{cond_prim_forward.1} parent=0 // pred_check_branch
    %35 = sbr.rel (0) target = $region37
  $region36: #{cond_prim_forward.1} parent=0 // pred_region
    _
  $region37: #{cond_prim_forward.1} parent=0 // pred_fallthru
    _
  // Predicated region
  $region38: #{cond_prim_forward.1} parent=0 // pred_check
    _
  $region39: #{cond_prim_forward.1} parent=0 // pred_check_branch
    %37 = sbr.rel (0) target = $region41
  $region40: #{cond_prim_forward.1} parent=0 // pred_region
    _
  $region41: #{cond_prim_forward.1} parent=0 // pred_fallthru
    _
  // Predicated region
  $region42: #{cond_prim_forward.1} parent=0 // pred_check
    _
  $region43: #{cond_prim_forward.1} parent=0 // pred_check_branch
    %39 = sbr.rel (0) target = $region45
  $region44: #{cond_prim_forward.1} parent=0 // pred_region
    _
  $region45: #{cond_prim_forward.1} parent=0 // pred_fallthru
    _
  // Predicated region
  $region46: #{cond_prim_forward.1} parent=0 // pred_check
    _
  $region47: #{cond_prim_forward.1} parent=0 // pred_check_branch
    %41 = sbr.rel (0) target = $region49
  $region48: #{cond_prim_forward.1} parent=0 // pred_region
    _
  $region49: #{cond_prim_forward.1} parent=0 // pred_fallthru
    _
  // Predicated region
  $region50: #{cond_prim_forward.1} parent=0 // pred_check
    _
  $region51: #{cond_prim_forward.1} parent=0 // pred_check_branch
    %43 = sbr.rel (0) target = $region53
  $region52: #{cond_prim_forward.1} parent=0 // pred_region
    _
  $region53: #{cond_prim_forward.1} parent=0 // pred_fallthru
    _
  %v44 = vld [vmem:[%s0] sm:$0xff]
  %v45 = vld [vmem:[%s0 + $0x8] sm:$0xff]
  %v46 = vlaneseq
  %v47 = vand.u32 %v46, 127
  %48 = vset.pattern.permute.xlu0 0
  %49 = vperm.xlu0 %48, %v44
  %v50 = vpop.permute.xlu0 %49
  %51 = vset.pattern.permute.xlu0 0
  %52 = vperm.xlu0 %51, %v45
  %v53 = vpop.permute.xlu0 %52
  %vm54 = vcmp.eq.s32.totalorder %v47, %v50
  %vm55 = vcmp.eq.s32.totalorder %v47, %v53
  %v56 = vsel %vm54, 1, 0
  %v57 = vsel %vm55, 1, 0
  %v58 = vcvt.s32.f32 %v56
  %v59 = vcvt.s32.f32 %v57
  %60 = vset.pattern.permute.xlu0 1
  %61 = vperm.xlu0 %60, %v44
  %v62 = vpop.permute.xlu0 %61
  %63 = vset.pattern.permute.xlu0 1
  %64 = vperm.xlu0 %63, %v45
  %v65 = vpop.permute.xlu0 %64
  %vm66 = vcmp.eq.s32.totalorder %v47, %v62
  %vm67 = vcmp.eq.s32.totalorder %v47, %v65
  %v68 = vsel %vm66, 1, 0
  %v69 = vsel %vm67, 1, 0
  %v70 = vcvt.s32.f32 %v68
  %v71 = vcvt.s32.f32 %v69
  %v72 = vadd.f32 %v58, %v70
  %v73 = vadd.f32 %v59, %v71
  %74 = vset.pattern.permute.xlu0 2
  %75 = vperm.xlu0 %74, %v44
  %v76 = vpop.permute.xlu0 %75
  %77 = vset.pattern.permute.xlu0 2
  %78 = vperm.xlu0 %77, %v45
  %v79 = vpop.permute.xlu0 %78
  %vm80 = vcmp.eq.s32.totalorder %v47, %v76
  %vm81 = vcmp.eq.s32.totalorder %v47, %v79
  %v82 = vsel %vm80, 1, 0
  %v83 = vsel %vm81, 1, 0
  %v84 = vcvt.s32.f32 %v82
  %v85 = vcvt.s32.f32 %v83
  %v86 = vadd.f32 %v72, %v84
  %v87 = vadd.f32 %v73, %v85
  %v88 = vld [vmem:[%s3] sm:$0xff]
  %v89 = vld [vmem:[%s3 + $0x8] sm:$0xff]
  %v90 = vld [vmem:[%s3 + $0x10] sm:$0xff]
  %v91 = vld [vmem:[%s3 + $0x18] sm:$0xff]
  %v92 = vld [vmem:[%s3 + $0x20] sm:$0xff]
  %v93 = vlaneseq
  %v94 = vshrl.u32 %v93, 7
  %v95 = vadd.s32 %v94, 8
  %v96 = vmul.u32 %v47, 8
  %vm97 = vcmp.eq.s32.totalorder %v94, %v96
  %vm98 = vcmp.eq.s32.totalorder %v95, %v96
  %v99 = vsel %vm97, 1, 0
  %v100 = vsel %vm98, 1, 0
  %v101 = vcvt.s32.f32 %v99
  %v102 = vcvt.s32.f32 %v100
  %v103 = vld [vmem:[%s1] sm:$0xff]
  %vm104 = vcmask 64512
  %v106 = vsel %vm104, %v101, 0
  %v109 = vsel %vm104, %v102, 0
  %111 = vmatprep.subr.mxu0 0.0
  %112 = vmatpush1.msra.mxu0 0.0
  %113 = vmatprep.subr.mxu0 0.0
  %114 = vmatpush1.msra.mxu0 0.0
  %115 = vmatprep.subr.mxu0 0.0
  %116 = vmatpush1.msra.mxu0 0.0
  %117 = vmatprep.subr.mxu0 0.0
  %118 = vmatpush1.msra.mxu0 0.0
  %119 = vmatprep.subr.mxu0 0.0
  %120 = vmatpush1.msra.mxu0 0.0
  %121 = vmatprep.subr.mxu0 0.0
  %122 = vmatpush1.msra.mxu0 0.0
  %123 = vmatprep.subr.mxu0 0.0
  %124 = vmatpush1.msra.mxu0 0.0
  %125 = vmatprep.subr.mxu0 0.0
  %126 = vmatpush1.msra.mxu0 0.0
  %127 = vmatprep.subr.mxu0 0.0
  %128 = vmatpush1.msra.mxu0 0.0
  %129 = vmatprep.subr.mxu0 0.0
  %130 = vmatpush1.msra.mxu0 0.0
  %131 = vmatprep.subr.mxu0 0.0
  %132 = vmatpush1.msra.mxu0 0.0
  %133 = vmatprep.subr.mxu0 0.0
  %134 = vmatpush1.msra.mxu0 0.0
  %135 = vmatprep.subr.mxu0 0.0
  %136 = vmatpush1.msra.mxu0 0.0
  %137 = vmatprep.subr.mxu0 0.0
  %138 = vmatpush1.msra.mxu0 0.0
  %139 = vmatprep.subr.mxu0 0.0
  %140 = vmatpush1.msra.mxu0 0.0
  %141 = vmatprep.subr.mxu0 0.0
  %142 = vmatpush1.msra.mxu0 %v103
  %143 = vmatprep.subr.mxu0 0.0
  %144 = vmatpush2.msra.mxu0 0.0
  %145 = vmatprep.subr.mxu0 0.0
  %146 = vmatpush2.msra.mxu0 0.0
  %147 = vmatprep.subr.mxu0 0.0
  %148 = vmatpush2.msra.mxu0 0.0
  %149 = vmatprep.subr.mxu0 0.0
  %150 = vmatpush2.msra.mxu0 0.0
  %151 = vmatprep.subr.mxu0 0.0
  %152 = vmatpush2.msra.mxu0 0.0
  %153 = vmatprep.subr.mxu0 0.0
  %154 = vmatpush2.msra.mxu0 0.0
  %155 = vmatprep.subr.mxu0 0.0
  %156 = vmatpush2.msra.mxu0 0.0
  %157 = vmatprep.subr.mxu0 0.0
  %158 = vmatpush2.msra.mxu0 0.0
  %159 = vmatprep.subr.mxu0 0.0
  %160 = vmatpush2.msra.mxu0 0.0
  %161 = vmatprep.subr.mxu0 0.0
  %162 = vmatpush2.msra.mxu0 0.0
  %163 = vmatprep.subr.mxu0 0.0
  %164 = vmatpush2.msra.mxu0 0.0
  %165 = vmatprep.subr.mxu0 0.0
  %166 = vmatpush2.msra.mxu0 0.0
  %167 = vmatprep.subr.mxu0 0.0
  %168 = vmatpush2.msra.mxu0 0.0
  %169 = vmatprep.subr.mxu0 0.0
  %170 = vmatpush2.msra.mxu0 0.0
  %171 = vmatprep.subr.mxu0 0.0
  %172 = vmatpush2.msra.mxu0 0.0
  %173 = vmatprep.subr.mxu0 0.0
  %174 = vmatpush2.msra.mxu0 0.0
  %175 = vmatprep.mubr.f32.mxu0 0.0
  %176 = vmatmul.mubr.f32.gmra.mxu0 %v106
  %v177 = vpop.f32.mrf.mxu0
  %v178 = vadd.f32 0.0, %v177
  %v179 = vpop.f32.mrf.mxu0
  %180 = vmatprep.mubr.f32.mxu0 0.0
  %181 = vmatmul.mubr.f32.gmra.mxu0 %v109
  %v182 = vpop.f32.mrf.mxu0
  %v183 = vadd.f32 0.0, %v182
  %v184 = vpop.f32.mrf.mxu0
  %185 = vdwg.mxu0
  %vm186 = vcmask 326656
  %v188 = vsel %vm186, %v86, 0
  %v191 = vsel %vm186, %v87, 0
  %193 = vmatprep.subr.mxu0 0.0
  %194 = vmatpush1.msra.mxu0 0.0
  %195 = vmatprep.subr.mxu0 0.0
  %196 = vmatpush1.msra.mxu0 0.0
  %197 = vmatprep.subr.mxu0 0.0
  %198 = vmatpush1.msra.mxu0 0.0
  %199 = vmatprep.subr.mxu0 0.0
  %200 = vmatpush1.msra.mxu0 0.0
  %201 = vmatprep.subr.mxu0 0.0
  %202 = vmatpush1.msra.mxu0 0.0
  %203 = vmatprep.subr.mxu0 0.0
  %204 = vmatpush1.msra.mxu0 0.0
  %205 = vmatprep.subr.mxu0 0.0
  %206 = vmatpush1.msra.mxu0 0.0
  %207 = vmatprep.subr.mxu0 0.0
  %208 = vmatpush1.msra.mxu0 0.0
  %209 = vmatprep.subr.mxu0 0.0
  %210 = vmatpush1.msra.mxu0 0.0
  %211 = vmatprep.subr.mxu0 0.0
  %212 = vmatpush1.msra.mxu0 0.0
  %213 = vmatprep.subr.mxu0 0.0
  %214 = vmatpush1.msra.mxu0 0.0
  %215 = vmatprep.subr.mxu0 0.0
  %216 = vmatpush1.msra.mxu0 %v92
  %217 = vmatprep.subr.mxu0 0.0
  %218 = vmatpush1.msra.mxu0 %v91
  %219 = vmatprep.subr.mxu0 0.0
  %220 = vmatpush1.msra.mxu0 %v90
  %221 = vmatprep.subr.mxu0 0.0
  %222 = vmatpush1.msra.mxu0 %v89
  %223 = vmatprep.subr.mxu0 0.0
  %224 = vmatpush1.msra.mxu0 %v88
  %225 = vmatprep.subr.mxu0 0.0
  %226 = vmatpush2.msra.mxu0 0.0
  %227 = vmatprep.subr.mxu0 0.0
  %228 = vmatpush2.msra.mxu0 0.0
  %229 = vmatprep.subr.mxu0 0.0
  %230 = vmatpush2.msra.mxu0 0.0
  %231 = vmatprep.subr.mxu0 0.0
  %232 = vmatpush2.msra.mxu0 0.0
  %233 = vmatprep.subr.mxu0 0.0
  %234 = vmatpush2.msra.mxu0 0.0
  %235 = vmatprep.subr.mxu0 0.0
  %236 = vmatpush2.msra.mxu0 0.0
  %237 = vmatprep.subr.mxu0 0.0
  %238 = vmatpush2.msra.mxu0 0.0
  %239 = vmatprep.subr.mxu0 0.0
  %240 = vmatpush2.msra.mxu0 0.0
  %241 = vmatprep.subr.mxu0 0.0
  %242 = vmatpush2.msra.mxu0 0.0
  %243 = vmatprep.subr.mxu0 0.0
  %244 = vmatpush2.msra.mxu0 0.0
  %245 = vmatprep.subr.mxu0 0.0
  %246 = vmatpush2.msra.mxu0 0.0
  %247 = vmatprep.subr.mxu0 0.0
  %248 = vmatpush2.msra.mxu0 0.0
  %249 = vmatprep.subr.mxu0 0.0
  %250 = vmatpush2.msra.mxu0 0.0
  %251 = vmatprep.subr.mxu0 0.0
  %252 = vmatpush2.msra.mxu0 0.0
  %253 = vmatprep.subr.mxu0 0.0
  %254 = vmatpush2.msra.mxu0 0.0
  %255 = vmatprep.subr.mxu0 0.0
  %256 = vmatpush2.msra.mxu0 0.0
  %257 = vmatprep.mubr.f32.mxu0 0.0
  %258 = vmatmul.mubr.f32.gmra.mxu0 %v188
  %v259 = vpop.f32.mrf.mxu0
  %v260 = vadd.f32 %v178, %v259
  %v261 = vpop.f32.mrf.mxu0
  %262 = vmatprep.mubr.f32.mxu0 0.0
  %263 = vmatmul.mubr.f32.gmra.mxu0 %v191
  %v264 = vpop.f32.mrf.mxu0
  %v265 = vadd.f32 %v183, %v264
  %v266 = vpop.f32.mrf.mxu0
  %267 = vdwg.mxu0
  %v268 = vld [vmem:[%s2] sm:$0xff]
  %v269 = vld [vmem:[%s2 + $0x8] sm:$0xff]
  %v270 = vld [vmem:[%s4] sm:$0xff]
  %v271 = vld [vmem:[%s4 + $0x8] sm:$0xff]
  %v272 = vld [vmem:[%s4 + $0x10] sm:$0xff]
  %v273 = vld [vmem:[%s4 + $0x18] sm:$0xff]
  %v274 = vld [vmem:[%s5] sm:$0x1]
  %v275 = vld [vmem:[%s6] sm:$0xff]
  %v276 = vld [vmem:[%s6 + $0x8] sm:$0xff]
  %v277 = vld [vmem:[%s6 + $0x10] sm:$0xff]
  %v278 = vld [vmem:[%s6 + $0x18] sm:$0xff]
  %v279 = vld [vmem:[%s7] sm:$0xff]
  %v280 = vld [vmem:[%s7 + $0x8] sm:$0xff]
  %v281 = vld [vmem:[%s7 + $0x10] sm:$0xff]
  %v282 = vld [vmem:[%s7 + $0x18] sm:$0xff]
  %v283 = vld [vmem:[%s8] sm:$0x1]
  %v284 = vld [vmem:[%s9] sm:$0xff]
  %v285 = vld [vmem:[%s9 + $0x8] sm:$0xff]
  %v286 = vld [vmem:[%s9 + $0x10] sm:$0xff]
  %v287 = vld [vmem:[%s9 + $0x18] sm:$0xff]
  %v288 = vld [vmem:[%s9 + $0x20] sm:$0xff]
  %v289 = vld [vmem:[%s9 + $0x28] sm:$0xff]
  %v290 = vld [vmem:[%s9 + $0x30] sm:$0xff]
  %v291 = vld [vmem:[%s9 + $0x38] sm:$0xff]
  %v292 = vld [vmem:[%s10] sm:$0x3f]
  %v294 = vlaneseq
  %v295 = vshrl.u32 %v294, 7
  %v296 = vsub.s32 0, %v295
  %v297 = vrot.slane %v274, %v296
  %vm299 = vcmask 261120
  %v301 = vsel %vm299, %v260, 0
  %v304 = vsel %vm299, %v265, 0
  %306 = vmatprep.subr.mxu0 0.0
  %307 = vmatpush1.msra.mxu0 0.0
  %308 = vmatprep.subr.mxu0 0.0
  %309 = vmatpush1.msra.mxu0 0.0
  %310 = vmatprep.subr.mxu0 0.0
  %311 = vmatpush1.msra.mxu0 0.0
  %312 = vmatprep.subr.mxu0 0.0
  %313 = vmatpush1.msra.mxu0 0.0
  %314 = vmatprep.subr.mxu0 0.0
  %315 = vmatpush1.msra.mxu0 0.0
  %316 = vmatprep.subr.mxu0 0.0
  %317 = vmatpush1.msra.mxu0 0.0
  %318 = vmatprep.subr.mxu0 0.0
  %319 = vmatpush1.msra.mxu0 0.0
  %320 = vmatprep.subr.mxu0 0.0
  %321 = vmatpush1.msra.mxu0 0.0
  %322 = vmatprep.subr.mxu0 0.0
  %323 = vmatpush1.msra.mxu0 0.0
  %324 = vmatprep.subr.mxu0 0.0
  %325 = vmatpush1.msra.mxu0 0.0
  %326 = vmatprep.subr.mxu0 0.0
  %327 = vmatpush1.msra.mxu0 0.0
  %328 = vmatprep.subr.mxu0 0.0
  %329 = vmatpush1.msra.mxu0 0.0
  %330 = vmatprep.subr.mxu0 0.0
  %331 = vmatpush1.msra.mxu0 %v273
  %332 = vmatprep.subr.mxu0 0.0
  %333 = vmatpush1.msra.mxu0 %v272
  %334 = vmatprep.subr.mxu0 0.0
  %335 = vmatpush1.msra.mxu0 %v271
  %336 = vmatprep.subr.mxu0 0.0
  %337 = vmatpush1.msra.mxu0 %v270
  %338 = vmatprep.subr.mxu0 0.0
  %339 = vmatpush2.msra.mxu0 0.0
  %340 = vmatprep.subr.mxu0 0.0
  %341 = vmatpush2.msra.mxu0 0.0
  %342 = vmatprep.subr.mxu0 0.0
  %343 = vmatpush2.msra.mxu0 0.0
  %344 = vmatprep.subr.mxu0 0.0
  %345 = vmatpush2.msra.mxu0 0.0
  %346 = vmatprep.subr.mxu0 0.0
  %347 = vmatpush2.msra.mxu0 0.0
  %348 = vmatprep.subr.mxu0 0.0
  %349 = vmatpush2.msra.mxu0 0.0
  %350 = vmatprep.subr.mxu0 0.0
  %351 = vmatpush2.msra.mxu0 0.0
  %352 = vmatprep.subr.mxu0 0.0
  %353 = vmatpush2.msra.mxu0 0.0
  %354 = vmatprep.subr.mxu0 0.0
  %355 = vmatpush2.msra.mxu0 0.0
  %356 = vmatprep.subr.mxu0 0.0
  %357 = vmatpush2.msra.mxu0 0.0
  %358 = vmatprep.subr.mxu0 0.0
  %359 = vmatpush2.msra.mxu0 0.0
  %360 = vmatprep.subr.mxu0 0.0
  %361 = vmatpush2.msra.mxu0 0.0
  %362 = vmatprep.subr.mxu0 0.0
  %363 = vmatpush2.msra.mxu0 0.0
  %364 = vmatprep.subr.mxu0 0.0
  %365 = vmatpush2.msra.mxu0 0.0
  %366 = vmatprep.subr.mxu0 0.0
  %367 = vmatpush2.msra.mxu0 0.0
  %368 = vmatprep.subr.mxu0 0.0
  %369 = vmatpush2.msra.mxu0 0.0
  %370 = vmatprep.mubr.f32.mxu0 0.0
  %371 = vmatmul.mubr.f32.gmra.mxu0 %v301
  %v372 = vpop.f32.mrf.mxu0
  %v373 = vadd.f32 %v297, %v372
  %v374 = vpop.f32.mrf.mxu0
  %375 = vmatprep.mubr.f32.mxu0 0.0
  %376 = vmatmul.mubr.f32.gmra.mxu0 %v304
  %v377 = vpop.f32.mrf.mxu0
  %v378 = vadd.f32 %v297, %v377
  %v379 = vpop.f32.mrf.mxu0
  %380 = vdwg.mxu0
  %383 = vrot.lane.b32.xlu0 %v373, 96
  %v384 = vpop.permute.xlu0 %383
  %385 = vrot.lane.b32.xlu0 %v378, 96
  %v386 = vpop.permute.xlu0 %385
  %v387 = vsel %vm104, %v373, 0
  %v389 = vsel %vm104, %v378, 0
  %v391 = vsel %vm104, %v384, 0
  %v393 = vsel %vm104, %v386, 0
  %395 = vmatprep.subr.mxu0 0.0
  %396 = vmatpush1.xpose.msra.mxu0 0.0
  %397 = vmatprep.subr.mxu0 0.0
  %398 = vmatpush1.xpose.msra.mxu0 0.0
  %399 = vmatprep.subr.mxu0 0.0
  %400 = vmatpush1.xpose.msra.mxu0 0.0
  %401 = vmatprep.subr.mxu0 0.0
  %402 = vmatpush1.xpose.msra.mxu0 0.0
  %403 = vmatprep.subr.mxu0 0.0
  %404 = vmatpush1.xpose.msra.mxu0 0.0
  %405 = vmatprep.subr.mxu0 0.0
  %406 = vmatpush1.xpose.msra.mxu0 0.0
  %407 = vmatprep.subr.mxu0 0.0
  %408 = vmatpush1.xpose.msra.mxu0 0.0
  %409 = vmatprep.subr.mxu0 0.0
  %410 = vmatpush1.xpose.msra.mxu0 0.0
  %411 = vmatprep.subr.mxu0 0.0
  %412 = vmatpush1.xpose.msra.mxu0 0.0
  %413 = vmatprep.subr.mxu0 0.0
  %414 = vmatpush1.xpose.msra.mxu0 0.0
  %415 = vmatprep.subr.mxu0 0.0
  %416 = vmatpush1.xpose.msra.mxu0 0.0
  %417 = vmatprep.subr.mxu0 0.0
  %418 = vmatpush1.xpose.msra.mxu0 0.0
  %419 = vmatprep.subr.mxu0 0.0
  %420 = vmatpush1.xpose.msra.mxu0 0.0
  %421 = vmatprep.subr.mxu0 0.0
  %422 = vmatpush1.xpose.msra.mxu0 0.0
  %423 = vmatprep.subr.mxu0 0.0
  %424 = vmatpush1.xpose.msra.mxu0 %v393
  %425 = vmatprep.subr.mxu0 0.0
  %426 = vmatpush1.xpose.msra.mxu0 %v391
  %427 = vmatprep.subr.mxu0 0.0
  %428 = vmatpush2.xpose.msra.mxu0 0.0
  %429 = vmatprep.subr.mxu0 0.0
  %430 = vmatpush2.xpose.msra.mxu0 0.0
  %431 = vmatprep.subr.mxu0 0.0
  %432 = vmatpush2.xpose.msra.mxu0 0.0
  %433 = vmatprep.subr.mxu0 0.0
  %434 = vmatpush2.xpose.msra.mxu0 0.0
  %435 = vmatprep.subr.mxu0 0.0
  %436 = vmatpush2.xpose.msra.mxu0 0.0
  %437 = vmatprep.subr.mxu0 0.0
  %438 = vmatpush2.xpose.msra.mxu0 0.0
  %439 = vmatprep.subr.mxu0 0.0
  %440 = vmatpush2.xpose.msra.mxu0 0.0
  %441 = vmatprep.subr.mxu0 0.0
  %442 = vmatpush2.xpose.msra.mxu0 0.0
  %443 = vmatprep.subr.mxu0 0.0
  %444 = vmatpush2.xpose.msra.mxu0 0.0
  %445 = vmatprep.subr.mxu0 0.0
  %446 = vmatpush2.xpose.msra.mxu0 0.0
  %447 = vmatprep.subr.mxu0 0.0
  %448 = vmatpush2.xpose.msra.mxu0 0.0
  %449 = vmatprep.subr.mxu0 0.0
  %450 = vmatpush2.xpose.msra.mxu0 0.0
  %451 = vmatprep.subr.mxu0 0.0
  %452 = vmatpush2.xpose.msra.mxu0 0.0
  %453 = vmatprep.subr.mxu0 0.0
  %454 = vmatpush2.xpose.msra.mxu0 0.0
  %455 = vmatprep.subr.mxu0 0.0
  %456 = vmatpush2.xpose.msra.mxu0 0.0
  %457 = vmatprep.subr.mxu0 0.0
  %458 = vmatpush2.xpose.msra.mxu0 0.0
  %459 = vmatprep.mubr.f32.mxu0 0.0
  %460 = vmatmul.mubr.f32.gmra.mxu0 %v387
  %v461 = vpop.f32.mrf.mxu0
  %v462 = vadd.f32 0.0, %v461
  %v463 = vpop.f32.mrf.mxu0
  %464 = vmatprep.mubr.f32.mxu0 0.0
  %465 = vmatmul.mubr.f32.gmra.mxu0 %v389
  %v466 = vpop.f32.mrf.mxu0
  %v467 = vadd.f32 0.0, %v466
  %v468 = vpop.f32.mrf.mxu0
  %469 = vdwg.mxu0
  %v470 = vmul.f32 %v462, 0.35355338
  %v471 = vmul.f32 %v467, 0.35355338
  %v472 = vadd.f32 %v470, %v268
  %v473 = vadd.f32 %v471, %v269
  %vm474 = vcmask 130048
  %v475 = vsel %vm474, %v472, -inf
  %476 = vmax.xlane.f32.xlu0 %v475
  %v477 = vpop.xlane.xlu0 %476
  %v478 = vsel %vm474, %v473, -inf
  %479 = vmax.xlane.f32.xlu0 %v478
  %v480 = vpop.xlane.xlu0 %479
  %v481 = vsub.f32 %v472, %v477
  %v482 = vsub.f32 %v473, %v480
  %v483 = vmul.f32 %v481, 1.442695
  %v484 = vpow.pop %v483
  %v485 = vmul.f32 %v482, 1.442695
  %v486 = vpow.pop %v485
  %v487 = vsel %vm474, %v484, 0.0
  %488 = vadd.xlane.f32.xlu0 %v487
  %v489 = vpop.xlane.xlu0 %488
  %v490 = vsel %vm474, %v486, 0.0
  %491 = vadd.xlane.f32.xlu0 %v490
  %v492 = vpop.xlane.xlu0 %491
  %v493 = vrcp.pop %v489
  %v494 = vrcp.pop %v492
  %v495 = vmul.f32 %v484, %v493
  %v496 = vmul.f32 %v486, %v494
  %497 = vrot.lane.b32.xlu0 %v373, 64
  %v498 = vpop.permute.xlu0 %497
  %499 = vrot.lane.b32.xlu0 %v378, 64
  %v500 = vpop.permute.xlu0 %499
  %v504 = vsel %vm474, %v495, 0
  %v507 = vsel %vm474, %v496, 0
  %509 = vmatprep.subr.mxu0 0.0
  %510 = vmatpush1.msra.mxu0 0.0
  %511 = vmatprep.subr.mxu0 0.0
  %512 = vmatpush1.msra.mxu0 0.0
  %513 = vmatprep.subr.mxu0 0.0
  %514 = vmatpush1.msra.mxu0 0.0
  %515 = vmatprep.subr.mxu0 0.0
  %516 = vmatpush1.msra.mxu0 0.0
  %517 = vmatprep.subr.mxu0 0.0
  %518 = vmatpush1.msra.mxu0 0.0
  %519 = vmatprep.subr.mxu0 0.0
  %520 = vmatpush1.msra.mxu0 0.0
  %521 = vmatprep.subr.mxu0 0.0
  %522 = vmatpush1.msra.mxu0 0.0
  %523 = vmatprep.subr.mxu0 0.0
  %524 = vmatpush1.msra.mxu0 0.0
  %525 = vmatprep.subr.mxu0 0.0
  %526 = vmatpush1.msra.mxu0 0.0
  %527 = vmatprep.subr.mxu0 0.0
  %528 = vmatpush1.msra.mxu0 0.0
  %529 = vmatprep.subr.mxu0 0.0
  %530 = vmatpush1.msra.mxu0 0.0
  %531 = vmatprep.subr.mxu0 0.0
  %532 = vmatpush1.msra.mxu0 0.0
  %533 = vmatprep.subr.mxu0 0.0
  %534 = vmatpush1.msra.mxu0 0.0
  %535 = vmatprep.subr.mxu0 0.0
  %536 = vmatpush1.msra.mxu0 0.0
  %537 = vmatprep.subr.mxu0 0.0
  %538 = vmatpush1.msra.mxu0 %v500
  %539 = vmatprep.subr.mxu0 0.0
  %540 = vmatpush1.msra.mxu0 %v498
  %541 = vmatprep.subr.mxu0 0.0
  %542 = vmatpush2.msra.mxu0 0.0
  %543 = vmatprep.subr.mxu0 0.0
  %544 = vmatpush2.msra.mxu0 0.0
  %545 = vmatprep.subr.mxu0 0.0
  %546 = vmatpush2.msra.mxu0 0.0
  %547 = vmatprep.subr.mxu0 0.0
  %548 = vmatpush2.msra.mxu0 0.0
  %549 = vmatprep.subr.mxu0 0.0
  %550 = vmatpush2.msra.mxu0 0.0
  %551 = vmatprep.subr.mxu0 0.0
  %552 = vmatpush2.msra.mxu0 0.0
  %553 = vmatprep.subr.mxu0 0.0
  %554 = vmatpush2.msra.mxu0 0.0
  %555 = vmatprep.subr.mxu0 0.0
  %556 = vmatpush2.msra.mxu0 0.0
  %557 = vmatprep.subr.mxu0 0.0
  %558 = vmatpush2.msra.mxu0 0.0
  %559 = vmatprep.subr.mxu0 0.0
  %560 = vmatpush2.msra.mxu0 0.0
  %561 = vmatprep.subr.mxu0 0.0
  %562 = vmatpush2.msra.mxu0 0.0
  %563 = vmatprep.subr.mxu0 0.0
  %564 = vmatpush2.msra.mxu0 0.0
  %565 = vmatprep.subr.mxu0 0.0
  %566 = vmatpush2.msra.mxu0 0.0
  %567 = vmatprep.subr.mxu0 0.0
  %568 = vmatpush2.msra.mxu0 0.0
  %569 = vmatprep.subr.mxu0 0.0
  %570 = vmatpush2.msra.mxu0 0.0
  %571 = vmatprep.subr.mxu0 0.0
  %572 = vmatpush2.msra.mxu0 0.0
  %573 = vmatprep.mubr.f32.mxu0 0.0
  %574 = vmatmul.mubr.f32.gmra.mxu0 %v504
  %v575 = vpop.f32.mrf.mxu0
  %v576 = vadd.f32 0.0, %v575
  %v577 = vpop.f32.mrf.mxu0
  %578 = vmatprep.mubr.f32.mxu0 0.0
  %579 = vmatmul.mubr.f32.gmra.mxu0 %v507
  %v580 = vpop.f32.mrf.mxu0
  %v581 = vadd.f32 0.0, %v580
  %v582 = vpop.f32.mrf.mxu0
  %583 = vdwg.mxu0
  %584 = vrot.lane.b32.xlu0 %v373, 120
  %v585 = vpop.permute.xlu0 %584
  %586 = vrot.lane.b32.xlu0 %v378, 120
  %v587 = vpop.permute.xlu0 %586
  %588 = vrot.lane.b32.xlu0 %v373, 88
  %v589 = vpop.permute.xlu0 %588
  %590 = vrot.lane.b32.xlu0 %v378, 88
  %v591 = vpop.permute.xlu0 %590
  %v592 = vsel %vm104, %v585, 0
  %v594 = vsel %vm104, %v587, 0
  %v596 = vsel %vm104, %v589, 0
  %v598 = vsel %vm104, %v591, 0
  %600 = vmatprep.subr.mxu0 0.0
  %601 = vmatpush1.xpose.msra.mxu0 0.0
  %602 = vmatprep.subr.mxu0 0.0
  %603 = vmatpush1.xpose.msra.mxu0 0.0
  %604 = vmatprep.subr.mxu0 0.0
  %605 = vmatpush1.xpose.msra.mxu0 0.0
  %606 = vmatprep.subr.mxu0 0.0
  %607 = vmatpush1.xpose.msra.mxu0 0.0
  %608 = vmatprep.subr.mxu0 0.0
  %609 = vmatpush1.xpose.msra.mxu0 0.0
  %610 = vmatprep.subr.mxu0 0.0
  %611 = vmatpush1.xpose.msra.mxu0 0.0
  %612 = vmatprep.subr.mxu0 0.0
  %613 = vmatpush1.xpose.msra.mxu0 0.0
  %614 = vmatprep.subr.mxu0 0.0
  %615 = vmatpush1.xpose.msra.mxu0 0.0
  %616 = vmatprep.subr.mxu0 0.0
  %617 = vmatpush1.xpose.msra.mxu0 0.0
  %618 = vmatprep.subr.mxu0 0.0
  %619 = vmatpush1.xpose.msra.mxu0 0.0
  %620 = vmatprep.subr.mxu0 0.0
  %621 = vmatpush1.xpose.msra.mxu0 0.0
  %622 = vmatprep.subr.mxu0 0.0
  %623 = vmatpush1.xpose.msra.mxu0 0.0
  %624 = vmatprep.subr.mxu0 0.0
  %625 = vmatpush1.xpose.msra.mxu0 0.0
  %626 = vmatprep.subr.mxu0 0.0
  %627 = vmatpush1.xpose.msra.mxu0 0.0
  %628 = vmatprep.subr.mxu0 0.0
  %629 = vmatpush1.xpose.msra.mxu0 %v598
  %630 = vmatprep.subr.mxu0 0.0
  %631 = vmatpush1.xpose.msra.mxu0 %v596
  %632 = vmatprep.subr.mxu0 0.0
  %633 = vmatpush2.xpose.msra.mxu0 0.0
  %634 = vmatprep.subr.mxu0 0.0
  %635 = vmatpush2.xpose.msra.mxu0 0.0
  %636 = vmatprep.subr.mxu0 0.0
  %637 = vmatpush2.xpose.msra.mxu0 0.0
  %638 = vmatprep.subr.mxu0 0.0
  %639 = vmatpush2.xpose.msra.mxu0 0.0
  %640 = vmatprep.subr.mxu0 0.0
  %641 = vmatpush2.xpose.msra.mxu0 0.0
  %642 = vmatprep.subr.mxu0 0.0
  %643 = vmatpush2.xpose.msra.mxu0 0.0
  %644 = vmatprep.subr.mxu0 0.0
  %645 = vmatpush2.xpose.msra.mxu0 0.0
  %646 = vmatprep.subr.mxu0 0.0
  %647 = vmatpush2.xpose.msra.mxu0 0.0
  %648 = vmatprep.subr.mxu0 0.0
  %649 = vmatpush2.xpose.msra.mxu0 0.0
  %650 = vmatprep.subr.mxu0 0.0
  %651 = vmatpush2.xpose.msra.mxu0 0.0
  %652 = vmatprep.subr.mxu0 0.0
  %653 = vmatpush2.xpose.msra.mxu0 0.0
  %654 = vmatprep.subr.mxu0 0.0
  %655 = vmatpush2.xpose.msra.mxu0 0.0
  %656 = vmatprep.subr.mxu0 0.0
  %657 = vmatpush2.xpose.msra.mxu0 0.0
  %658 = vmatprep.subr.mxu0 0.0
  %659 = vmatpush2.xpose.msra.mxu0 0.0
  %660 = vmatprep.subr.mxu0 0.0
  %661 = vmatpush2.xpose.msra.mxu0 0.0
  %662 = vmatprep.subr.mxu0 0.0
  %663 = vmatpush2.xpose.msra.mxu0 0.0
  %664 = vmatprep.mubr.f32.mxu0 0.0
  %665 = vmatmul.mubr.f32.gmra.mxu0 %v592
  %v666 = vpop.f32.mrf.mxu0
  %v667 = vadd.f32 0.0, %v666
  %v668 = vpop.f32.mrf.mxu0
  %669 = vmatprep.mubr.f32.mxu0 0.0
  %670 = vmatmul.mubr.f32.gmra.mxu0 %v594
  %v671 = vpop.f32.mrf.mxu0
  %v672 = vadd.f32 0.0, %v671
  %v673 = vpop.f32.mrf.mxu0
  %674 = vdwg.mxu0
  %v675 = vmul.f32 %v667, 0.35355338
  %v676 = vmul.f32 %v672, 0.35355338
  %v677 = vadd.f32 %v675, %v268
  %v678 = vadd.f32 %v676, %v269
  %v679 = vsel %vm474, %v677, -inf
  %680 = vmax.xlane.f32.xlu0 %v679
  %v681 = vpop.xlane.xlu0 %680
  %v682 = vsel %vm474, %v678, -inf
  %683 = vmax.xlane.f32.xlu0 %v682
  %v684 = vpop.xlane.xlu0 %683
  %v685 = vsub.f32 %v677, %v681
  %v686 = vsub.f32 %v678, %v684
  %v687 = vmul.f32 %v685, 1.442695
  %v688 = vpow.pop %v687
  %v689 = vmul.f32 %v686, 1.442695
  %v690 = vpow.pop %v689
  %v691 = vsel %vm474, %v688, 0.0
  %692 = vadd.xlane.f32.xlu0 %v691
  %v693 = vpop.xlane.xlu0 %692
  %v694 = vsel %vm474, %v690, 0.0
  %695 = vadd.xlane.f32.xlu0 %v694
  %v696 = vpop.xlane.xlu0 %695
  %v697 = vrcp.pop %v693
  %v698 = vrcp.pop %v696
  %v699 = vmul.f32 %v688, %v697
  %v700 = vmul.f32 %v690, %v698
  %701 = vrot.lane.b32.xlu0 %v373, 56
  %v702 = vpop.permute.xlu0 %701
  %703 = vrot.lane.b32.xlu0 %v378, 56
  %v704 = vpop.permute.xlu0 %703
  %v708 = vsel %vm474, %v699, 0
  %v711 = vsel %vm474, %v700, 0
  %713 = vmatprep.subr.mxu0 0.0
  %714 = vmatpush1.msra.mxu0 0.0
  %715 = vmatprep.subr.mxu0 0.0
  %716 = vmatpush1.msra.mxu0 0.0
  %717 = vmatprep.subr.mxu0 0.0
  %718 = vmatpush1.msra.mxu0 0.0
  %719 = vmatprep.subr.mxu0 0.0
  %720 = vmatpush1.msra.mxu0 0.0
  %721 = vmatprep.subr.mxu0 0.0
  %722 = vmatpush1.msra.mxu0 0.0
  %723 = vmatprep.subr.mxu0 0.0
  %724 = vmatpush1.msra.mxu0 0.0
  %725 = vmatprep.subr.mxu0 0.0
  %726 = vmatpush1.msra.mxu0 0.0
  %727 = vmatprep.subr.mxu0 0.0
  %728 = vmatpush1.msra.mxu0 0.0
  %729 = vmatprep.subr.mxu0 0.0
  %730 = vmatpush1.msra.mxu0 0.0
  %731 = vmatprep.subr.mxu0 0.0
  %732 = vmatpush1.msra.mxu0 0.0
  %733 = vmatprep.subr.mxu0 0.0
  %734 = vmatpush1.msra.mxu0 0.0
  %735 = vmatprep.subr.mxu0 0.0
  %736 = vmatpush1.msra.mxu0 0.0
  %737 = vmatprep.subr.mxu0 0.0
  %738 = vmatpush1.msra.mxu0 0.0
  %739 = vmatprep.subr.mxu0 0.0
  %740 = vmatpush1.msra.mxu0 0.0
  %741 = vmatprep.subr.mxu0 0.0
  %742 = vmatpush1.msra.mxu0 %v704
  %743 = vmatprep.subr.mxu0 0.0
  %744 = vmatpush1.msra.mxu0 %v702
  %745 = vmatprep.subr.mxu0 0.0
  %746 = vmatpush2.msra.mxu0 0.0
  %747 = vmatprep.subr.mxu0 0.0
  %748 = vmatpush2.msra.mxu0 0.0
  %749 = vmatprep.subr.mxu0 0.0
  %750 = vmatpush2.msra.mxu0 0.0
  %751 = vmatprep.subr.mxu0 0.0
  %752 = vmatpush2.msra.mxu0 0.0
  %753 = vmatprep.subr.mxu0 0.0
  %754 = vmatpush2.msra.mxu0 0.0
  %755 = vmatprep.subr.mxu0 0.0
  %756 = vmatpush2.msra.mxu0 0.0
  %757 = vmatprep.subr.mxu0 0.0
  %758 = vmatpush2.msra.mxu0 0.0
  %759 = vmatprep.subr.mxu0 0.0
  %760 = vmatpush2.msra.mxu0 0.0
  %761 = vmatprep.subr.mxu0 0.0
  %762 = vmatpush2.msra.mxu0 0.0
  %763 = vmatprep.subr.mxu0 0.0
  %764 = vmatpush2.msra.mxu0 0.0
  %765 = vmatprep.subr.mxu0 0.0
  %766 = vmatpush2.msra.mxu0 0.0
  %767 = vmatprep.subr.mxu0 0.0
  %768 = vmatpush2.msra.mxu0 0.0
  %769 = vmatprep.subr.mxu0 0.0
  %770 = vmatpush2.msra.mxu0 0.0
  %771 = vmatprep.subr.mxu0 0.0
  %772 = vmatpush2.msra.mxu0 0.0
  %773 = vmatprep.subr.mxu0 0.0
  %774 = vmatpush2.msra.mxu0 0.0
  %775 = vmatprep.subr.mxu0 0.0
  %776 = vmatpush2.msra.mxu0 0.0
  %777 = vmatprep.mubr.f32.mxu0 0.0
  %778 = vmatmul.mubr.f32.gmra.mxu0 %v708
  %v779 = vpop.f32.mrf.mxu0
  %v780 = vadd.f32 0.0, %v779
  %v781 = vpop.f32.mrf.mxu0
  %782 = vmatprep.mubr.f32.mxu0 0.0
  %783 = vmatmul.mubr.f32.gmra.mxu0 %v711
  %v784 = vpop.f32.mrf.mxu0
  %v785 = vadd.f32 0.0, %v784
  %v786 = vpop.f32.mrf.mxu0
  %787 = vdwg.mxu0
  %v789 = vsel %vm104, %v780, 0
  %v792 = vsel %vm104, %v785, 0
  %794 = vmatprep.subr.mxu0 0.0
  %795 = vmatpush1.msra.mxu0 0.0
  %796 = vmatprep.subr.mxu0 0.0
  %797 = vmatpush1.msra.mxu0 0.0
  %798 = vmatprep.subr.mxu0 0.0
  %799 = vmatpush1.msra.mxu0 0.0
  %800 = vmatprep.subr.mxu0 0.0
  %801 = vmatpush1.msra.mxu0 0.0
  %802 = vmatprep.subr.mxu0 0.0
  %803 = vmatpush1.msra.mxu0 0.0
  %804 = vmatprep.subr.mxu0 0.0
  %805 = vmatpush1.msra.mxu0 0.0
  %806 = vmatprep.subr.mxu0 0.0
  %807 = vmatpush1.msra.mxu0 0.0
  %808 = vmatprep.subr.mxu0 0.0
  %809 = vmatpush1.msra.mxu0 0.0
  %810 = vmatprep.subr.mxu0 0.0
  %811 = vmatpush1.msra.mxu0 0.0
  %812 = vmatprep.subr.mxu0 0.0
  %813 = vmatpush1.msra.mxu0 0.0
  %814 = vmatprep.subr.mxu0 0.0
  %815 = vmatpush1.msra.mxu0 0.0
  %816 = vmatprep.subr.mxu0 0.0
  %817 = vmatpush1.msra.mxu0 0.0
  %818 = vmatprep.subr.mxu0 0.0
  %819 = vmatpush1.msra.mxu0 0.0
  %820 = vmatprep.subr.mxu0 0.0
  %821 = vmatpush1.msra.mxu0 0.0
  %822 = vmatprep.subr.mxu0 0.0
  %823 = vmatpush1.msra.mxu0 0.0
  %824 = vmatprep.subr.mxu0 0.0
  %825 = vmatpush1.msra.mxu0 %v276
  %826 = vmatprep.subr.mxu0 0.0
  %827 = vmatpush2.msra.mxu0 0.0
  %828 = vmatprep.subr.mxu0 0.0
  %829 = vmatpush2.msra.mxu0 0.0
  %830 = vmatprep.subr.mxu0 0.0
  %831 = vmatpush2.msra.mxu0 0.0
  %832 = vmatprep.subr.mxu0 0.0
  %833 = vmatpush2.msra.mxu0 0.0
  %834 = vmatprep.subr.mxu0 0.0
  %835 = vmatpush2.msra.mxu0 0.0
  %836 = vmatprep.subr.mxu0 0.0
  %837 = vmatpush2.msra.mxu0 0.0
  %838 = vmatprep.subr.mxu0 0.0
  %839 = vmatpush2.msra.mxu0 0.0
  %840 = vmatprep.subr.mxu0 0.0
  %841 = vmatpush2.msra.mxu0 0.0
  %842 = vmatprep.subr.mxu0 0.0
  %843 = vmatpush2.msra.mxu0 0.0
  %844 = vmatprep.subr.mxu0 0.0
  %845 = vmatpush2.msra.mxu0 0.0
  %846 = vmatprep.subr.mxu0 0.0
  %847 = vmatpush2.msra.mxu0 0.0
  %848 = vmatprep.subr.mxu0 0.0
  %849 = vmatpush2.msra.mxu0 0.0
  %850 = vmatprep.subr.mxu0 0.0
  %851 = vmatpush2.msra.mxu0 0.0
  %852 = vmatprep.subr.mxu0 0.0
  %853 = vmatpush2.msra.mxu0 0.0
  %854 = vmatprep.subr.mxu0 0.0
  %855 = vmatpush2.msra.mxu0 0.0
  %856 = vmatprep.subr.mxu0 0.0
  %857 = vmatpush2.msra.mxu0 0.0
  %858 = vmatprep.mubr.f32.mxu0 0.0
  %859 = vmatmul.mubr.f32.gmra.mxu0 %v789
  %v860 = vpop.f32.mrf.mxu0
  %v861 = vadd.f32 0.0, %v860
  %v862 = vpop.f32.mrf.mxu0
  %863 = vmatprep.mubr.f32.mxu0 0.0
  %864 = vmatmul.mubr.f32.gmra.mxu0 %v792
  %v865 = vpop.f32.mrf.mxu0
  %v866 = vadd.f32 0.0, %v865
  %v867 = vpop.f32.mrf.mxu0
  %868 = vdwg.mxu0
  %v870 = vsel %vm104, %v576, 0
  %v873 = vsel %vm104, %v581, 0
  %875 = vmatprep.subr.mxu0 0.0
  %876 = vmatpush1.msra.mxu0 0.0
  %877 = vmatprep.subr.mxu0 0.0
  %878 = vmatpush1.msra.mxu0 0.0
  %879 = vmatprep.subr.mxu0 0.0
  %880 = vmatpush1.msra.mxu0 0.0
  %881 = vmatprep.subr.mxu0 0.0
  %882 = vmatpush1.msra.mxu0 0.0
  %883 = vmatprep.subr.mxu0 0.0
  %884 = vmatpush1.msra.mxu0 0.0
  %885 = vmatprep.subr.mxu0 0.0
  %886 = vmatpush1.msra.mxu0 0.0
  %887 = vmatprep.subr.mxu0 0.0
  %888 = vmatpush1.msra.mxu0 0.0
  %889 = vmatprep.subr.mxu0 0.0
  %890 = vmatpush1.msra.mxu0 0.0
  %891 = vmatprep.subr.mxu0 0.0
  %892 = vmatpush1.msra.mxu0 0.0
  %893 = vmatprep.subr.mxu0 0.0
  %894 = vmatpush1.msra.mxu0 0.0
  %895 = vmatprep.subr.mxu0 0.0
  %896 = vmatpush1.msra.mxu0 0.0
  %897 = vmatprep.subr.mxu0 0.0
  %898 = vmatpush1.msra.mxu0 0.0
  %899 = vmatprep.subr.mxu0 0.0
  %900 = vmatpush1.msra.mxu0 0.0
  %901 = vmatprep.subr.mxu0 0.0
  %902 = vmatpush1.msra.mxu0 0.0
  %903 = vmatprep.subr.mxu0 0.0
  %904 = vmatpush1.msra.mxu0 0.0
  %905 = vmatprep.subr.mxu0 0.0
  %906 = vmatpush1.msra.mxu0 %v275
  %907 = vmatprep.subr.mxu0 0.0
  %908 = vmatpush2.msra.mxu0 0.0
  %909 = vmatprep.subr.mxu0 0.0
  %910 = vmatpush2.msra.mxu0 0.0
  %911 = vmatprep.subr.mxu0 0.0
  %912 = vmatpush2.msra.mxu0 0.0
  %913 = vmatprep.subr.mxu0 0.0
  %914 = vmatpush2.msra.mxu0 0.0
  %915 = vmatprep.subr.mxu0 0.0
  %916 = vmatpush2.msra.mxu0 0.0
  %917 = vmatprep.subr.mxu0 0.0
  %918 = vmatpush2.msra.mxu0 0.0
  %919 = vmatprep.subr.mxu0 0.0
  %920 = vmatpush2.msra.mxu0 0.0
  %921 = vmatprep.subr.mxu0 0.0
  %922 = vmatpush2.msra.mxu0 0.0
  %923 = vmatprep.subr.mxu0 0.0
  %924 = vmatpush2.msra.mxu0 0.0
  %925 = vmatprep.subr.mxu0 0.0
  %926 = vmatpush2.msra.mxu0 0.0
  %927 = vmatprep.subr.mxu0 0.0
  %928 = vmatpush2.msra.mxu0 0.0
  %929 = vmatprep.subr.mxu0 0.0
  %930 = vmatpush2.msra.mxu0 0.0
  %931 = vmatprep.subr.mxu0 0.0
  %932 = vmatpush2.msra.mxu0 0.0
  %933 = vmatprep.subr.mxu0 0.0
  %934 = vmatpush2.msra.mxu0 0.0
  %935 = vmatprep.subr.mxu0 0.0
  %936 = vmatpush2.msra.mxu0 0.0
  %937 = vmatprep.subr.mxu0 0.0
  %938 = vmatpush2.msra.mxu0 0.0
  %939 = vmatprep.mubr.f32.mxu0 0.0
  %940 = vmatmul.mubr.f32.gmra.mxu0 %v870
  %v941 = vpop.f32.mrf.mxu0
  %v942 = vadd.f32 %v861, %v941
  %v943 = vpop.f32.mrf.mxu0
  %944 = vmatprep.mubr.f32.mxu0 0.0
  %945 = vmatmul.mubr.f32.gmra.mxu0 %v873
  %v946 = vpop.f32.mrf.mxu0
  %v947 = vadd.f32 %v866, %v946
  %v948 = vpop.f32.mrf.mxu0
  %949 = vdwg.mxu0
  %950 = vrot.lane.b32.xlu0 %v373, 112
  %v951 = vpop.permute.xlu0 %950
  %952 = vrot.lane.b32.xlu0 %v378, 112
  %v953 = vpop.permute.xlu0 %952
  %954 = vrot.lane.b32.xlu0 %v373, 80
  %v955 = vpop.permute.xlu0 %954
  %956 = vrot.lane.b32.xlu0 %v378, 80
  %v957 = vpop.permute.xlu0 %956
  %v958 = vsel %vm104, %v951, 0
  %v960 = vsel %vm104, %v953, 0
  %v962 = vsel %vm104, %v955, 0
  %v964 = vsel %vm104, %v957, 0
  %966 = vmatprep.subr.mxu0 0.0
  %967 = vmatpush1.xpose.msra.mxu0 0.0
  %968 = vmatprep.subr.mxu0 0.0
  %969 = vmatpush1.xpose.msra.mxu0 0.0
  %970 = vmatprep.subr.mxu0 0.0
  %971 = vmatpush1.xpose.msra.mxu0 0.0
  %972 = vmatprep.subr.mxu0 0.0
  %973 = vmatpush1.xpose.msra.mxu0 0.0
  %974 = vmatprep.subr.mxu0 0.0
  %975 = vmatpush1.xpose.msra.mxu0 0.0
  %976 = vmatprep.subr.mxu0 0.0
  %977 = vmatpush1.xpose.msra.mxu0 0.0
  %978 = vmatprep.subr.mxu0 0.0
  %979 = vmatpush1.xpose.msra.mxu0 0.0
  %980 = vmatprep.subr.mxu0 0.0
  %981 = vmatpush1.xpose.msra.mxu0 0.0
  %982 = vmatprep.subr.mxu0 0.0
  %983 = vmatpush1.xpose.msra.mxu0 0.0
  %984 = vmatprep.subr.mxu0 0.0
  %985 = vmatpush1.xpose.msra.mxu0 0.0
  %986 = vmatprep.subr.mxu0 0.0
  %987 = vmatpush1.xpose.msra.mxu0 0.0
  %988 = vmatprep.subr.mxu0 0.0
  %989 = vmatpush1.xpose.msra.mxu0 0.0
  %990 = vmatprep.subr.mxu0 0.0
  %991 = vmatpush1.xpose.msra.mxu0 0.0
  %992 = vmatprep.subr.mxu0 0.0
  %993 = vmatpush1.xpose.msra.mxu0 0.0
  %994 = vmatprep.subr.mxu0 0.0
  %995 = vmatpush1.xpose.msra.mxu0 %v964
  %996 = vmatprep.subr.mxu0 0.0
  %997 = vmatpush1.xpose.msra.mxu0 %v962
  %998 = vmatprep.subr.mxu0 0.0
  %999 = vmatpush2.xpose.msra.mxu0 0.0
  %1000 = vmatprep.subr.mxu0 0.0
  %1001 = vmatpush2.xpose.msra.mxu0 0.0
  %1002 = vmatprep.subr.mxu0 0.0
  %1003 = vmatpush2.xpose.msra.mxu0 0.0
  %1004 = vmatprep.subr.mxu0 0.0
  %1005 = vmatpush2.xpose.msra.mxu0 0.0
  %1006 = vmatprep.subr.mxu0 0.0
  %1007 = vmatpush2.xpose.msra.mxu0 0.0
  %1008 = vmatprep.subr.mxu0 0.0
  %1009 = vmatpush2.xpose.msra.mxu0 0.0
  %1010 = vmatprep.subr.mxu0 0.0
  %1011 = vmatpush2.xpose.msra.mxu0 0.0
  %1012 = vmatprep.subr.mxu0 0.0
  %1013 = vmatpush2.xpose.msra.mxu0 0.0
  %1014 = vmatprep.subr.mxu0 0.0
  %1015 = vmatpush2.xpose.msra.mxu0 0.0
  %1016 = vmatprep.subr.mxu0 0.0
  %1017 = vmatpush2.xpose.msra.mxu0 0.0
  %1018 = vmatprep.subr.mxu0 0.0
  %1019 = vmatpush2.xpose.msra.mxu0 0.0
  %1020 = vmatprep.subr.mxu0 0.0
  %1021 = vmatpush2.xpose.msra.mxu0 0.0
  %1022 = vmatprep.subr.mxu0 0.0
  %1023 = vmatpush2.xpose.msra.mxu0 0.0
  %1024 = vmatprep.subr.mxu0 0.0
  %1025 = vmatpush2.xpose.msra.mxu0 0.0
  %1026 = vmatprep.subr.mxu0 0.0
  %1027 = vmatpush2.xpose.msra.mxu0 0.0
  %1028 = vmatprep.subr.mxu0 0.0
  %1029 = vmatpush2.xpose.msra.mxu0 0.0
  %1030 = vmatprep.mubr.f32.mxu0 0.0
  %1031 = vmatmul.mubr.f32.gmra.mxu0 %v958
  %v1032 = vpop.f32.mrf.mxu0
  %v1033 = vadd.f32 0.0, %v1032
  %v1034 = vpop.f32.mrf.mxu0
  %1035 = vmatprep.mubr.f32.mxu0 0.0
  %1036 = vmatmul.mubr.f32.gmra.mxu0 %v960
  %v1037 = vpop.f32.mrf.mxu0
  %v1038 = vadd.f32 0.0, %v1037
  %v1039 = vpop.f32.mrf.mxu0
  %1040 = vdwg.mxu0
  %v1041 = vmul.f32 %v1033, 0.35355338
  %v1042 = vmul.f32 %v1038, 0.35355338
  %v1043 = vadd.f32 %v1041, %v268
  %v1044 = vadd.f32 %v1042, %v269
  %v1045 = vsel %vm474, %v1043, -inf
  %1046 = vmax.xlane.f32.xlu0 %v1045
  %v1047 = vpop.xlane.xlu0 %1046
  %v1048 = vsel %vm474, %v1044, -inf
  %1049 = vmax.xlane.f32.xlu0 %v1048
  %v1050 = vpop.xlane.xlu0 %1049
  %v1051 = vsub.f32 %v1043, %v1047
  %v1052 = vsub.f32 %v1044, %v1050
  %v1053 = vmul.f32 %v1051, 1.442695
  %v1054 = vpow.pop %v1053
  %v1055 = vmul.f32 %v1052, 1.442695
  %v1056 = vpow.pop %v1055
  %v1057 = vsel %vm474, %v1054, 0.0
  %1058 = vadd.xlane.f32.xlu0 %v1057
  %v1059 = vpop.xlane.xlu0 %1058
  %v1060 = vsel %vm474, %v1056, 0.0
  %1061 = vadd.xlane.f32.xlu0 %v1060
  %v1062 = vpop.xlane.xlu0 %1061
  %v1063 = vrcp.pop %v1059
  %v1064 = vrcp.pop %v1062
  %v1065 = vmul.f32 %v1054, %v1063
  %v1066 = vmul.f32 %v1056, %v1064
  %1067 = vrot.lane.b32.xlu0 %v373, 48
  %v1068 = vpop.permute.xlu0 %1067
  %1069 = vrot.lane.b32.xlu0 %v378, 48
  %v1070 = vpop.permute.xlu0 %1069
  %v1074 = vsel %vm474, %v1065, 0
  %v1077 = vsel %vm474, %v1066, 0
  %1079 = vmatprep.subr.mxu0 0.0
  %1080 = vmatpush1.msra.mxu0 0.0
  %1081 = vmatprep.subr.mxu0 0.0
  %1082 = vmatpush1.msra.mxu0 0.0
  %1083 = vmatprep.subr.mxu0 0.0
  %1084 = vmatpush1.msra.mxu0 0.0
  %1085 = vmatprep.subr.mxu0 0.0
  %1086 = vmatpush1.msra.mxu0 0.0
  %1087 = vmatprep.subr.mxu0 0.0
  %1088 = vmatpush1.msra.mxu0 0.0
  %1089 = vmatprep.subr.mxu0 0.0
  %1090 = vmatpush1.msra.mxu0 0.0
  %1091 = vmatprep.subr.mxu0 0.0
  %1092 = vmatpush1.msra.mxu0 0.0
  %1093 = vmatprep.subr.mxu0 0.0
  %1094 = vmatpush1.msra.mxu0 0.0
  %1095 = vmatprep.subr.mxu0 0.0
  %1096 = vmatpush1.msra.mxu0 0.0
  %1097 = vmatprep.subr.mxu0 0.0
  %1098 = vmatpush1.msra.mxu0 0.0
  %1099 = vmatprep.subr.mxu0 0.0
  %1100 = vmatpush1.msra.mxu0 0.0
  %1101 = vmatprep.subr.mxu0 0.0
  %1102 = vmatpush1.msra.mxu0 0.0
  %1103 = vmatprep.subr.mxu0 0.0
  %1104 = vmatpush1.msra.mxu0 0.0
  %1105 = vmatprep.subr.mxu0 0.0
  %1106 = vmatpush1.msra.mxu0 0.0
  %1107 = vmatprep.subr.mxu0 0.0
  %1108 = vmatpush1.msra.mxu0 %v1070
  %1109 = vmatprep.subr.mxu0 0.0
  %1110 = vmatpush1.msra.mxu0 %v1068
  %1111 = vmatprep.subr.mxu0 0.0
  %1112 = vmatpush2.msra.mxu0 0.0
  %1113 = vmatprep.subr.mxu0 0.0
  %1114 = vmatpush2.msra.mxu0 0.0
  %1115 = vmatprep.subr.mxu0 0.0
  %1116 = vmatpush2.msra.mxu0 0.0
  %1117 = vmatprep.subr.mxu0 0.0
  %1118 = vmatpush2.msra.mxu0 0.0
  %1119 = vmatprep.subr.mxu0 0.0
  %1120 = vmatpush2.msra.mxu0 0.0
  %1121 = vmatprep.subr.mxu0 0.0
  %1122 = vmatpush2.msra.mxu0 0.0
  %1123 = vmatprep.subr.mxu0 0.0
  %1124 = vmatpush2.msra.mxu0 0.0
  %1125 = vmatprep.subr.mxu0 0.0
  %1126 = vmatpush2.msra.mxu0 0.0
  %1127 = vmatprep.subr.mxu0 0.0
  %1128 = vmatpush2.msra.mxu0 0.0
  %1129 = vmatprep.subr.mxu0 0.0
  %1130 = vmatpush2.msra.mxu0 0.0
  %1131 = vmatprep.subr.mxu0 0.0
  %1132 = vmatpush2.msra.mxu0 0.0
  %1133 = vmatprep.subr.mxu0 0.0
  %1134 = vmatpush2.msra.mxu0 0.0
  %1135 = vmatprep.subr.mxu0 0.0
  %1136 = vmatpush2.msra.mxu0 0.0
  %1137 = vmatprep.subr.mxu0 0.0
  %1138 = vmatpush2.msra.mxu0 0.0
  %1139 = vmatprep.subr.mxu0 0.0
  %1140 = vmatpush2.msra.mxu0 0.0
  %1141 = vmatprep.subr.mxu0 0.0
  %1142 = vmatpush2.msra.mxu0 0.0
  %1143 = vmatprep.mubr.f32.mxu0 0.0
  %1144 = vmatmul.mubr.f32.gmra.mxu0 %v1074
  %v1145 = vpop.f32.mrf.mxu0
  %v1146 = vadd.f32 0.0, %v1145
  %v1147 = vpop.f32.mrf.mxu0
  %1148 = vmatprep.mubr.f32.mxu0 0.0
  %1149 = vmatmul.mubr.f32.gmra.mxu0 %v1077
  %v1150 = vpop.f32.mrf.mxu0
  %v1151 = vadd.f32 0.0, %v1150
  %v1152 = vpop.f32.mrf.mxu0
  %1153 = vdwg.mxu0
  %v1155 = vsel %vm104, %v1146, 0
  %v1158 = vsel %vm104, %v1151, 0
  %1160 = vmatprep.subr.mxu0 0.0
  %1161 = vmatpush1.msra.mxu0 0.0
  %1162 = vmatprep.subr.mxu0 0.0
  %1163 = vmatpush1.msra.mxu0 0.0
  %1164 = vmatprep.subr.mxu0 0.0
  %1165 = vmatpush1.msra.mxu0 0.0
  %1166 = vmatprep.subr.mxu0 0.0
  %1167 = vmatpush1.msra.mxu0 0.0
  %1168 = vmatprep.subr.mxu0 0.0
  %1169 = vmatpush1.msra.mxu0 0.0
  %1170 = vmatprep.subr.mxu0 0.0
  %1171 = vmatpush1.msra.mxu0 0.0
  %1172 = vmatprep.subr.mxu0 0.0
  %1173 = vmatpush1.msra.mxu0 0.0
  %1174 = vmatprep.subr.mxu0 0.0
  %1175 = vmatpush1.msra.mxu0 0.0
  %1176 = vmatprep.subr.mxu0 0.0
  %1177 = vmatpush1.msra.mxu0 0.0
  %1178 = vmatprep.subr.mxu0 0.0
  %1179 = vmatpush1.msra.mxu0 0.0
  %1180 = vmatprep.subr.mxu0 0.0
  %1181 = vmatpush1.msra.mxu0 0.0
  %1182 = vmatprep.subr.mxu0 0.0
  %1183 = vmatpush1.msra.mxu0 0.0
  %1184 = vmatprep.subr.mxu0 0.0
  %1185 = vmatpush1.msra.mxu0 0.0
  %1186 = vmatprep.subr.mxu0 0.0
  %1187 = vmatpush1.msra.mxu0 0.0
  %1188 = vmatprep.subr.mxu0 0.0
  %1189 = vmatpush1.msra.mxu0 0.0
  %1190 = vmatprep.subr.mxu0 0.0
  %1191 = vmatpush1.msra.mxu0 %v277
  %1192 = vmatprep.subr.mxu0 0.0
  %1193 = vmatpush2.msra.mxu0 0.0
  %1194 = vmatprep.subr.mxu0 0.0
  %1195 = vmatpush2.msra.mxu0 0.0
  %1196 = vmatprep.subr.mxu0 0.0
  %1197 = vmatpush2.msra.mxu0 0.0
  %1198 = vmatprep.subr.mxu0 0.0
  %1199 = vmatpush2.msra.mxu0 0.0
  %1200 = vmatprep.subr.mxu0 0.0
  %1201 = vmatpush2.msra.mxu0 0.0
  %1202 = vmatprep.subr.mxu0 0.0
  %1203 = vmatpush2.msra.mxu0 0.0
  %1204 = vmatprep.subr.mxu0 0.0
  %1205 = vmatpush2.msra.mxu0 0.0
  %1206 = vmatprep.subr.mxu0 0.0
  %1207 = vmatpush2.msra.mxu0 0.0
  %1208 = vmatprep.subr.mxu0 0.0
  %1209 = vmatpush2.msra.mxu0 0.0
  %1210 = vmatprep.subr.mxu0 0.0
  %1211 = vmatpush2.msra.mxu0 0.0
  %1212 = vmatprep.subr.mxu0 0.0
  %1213 = vmatpush2.msra.mxu0 0.0
  %1214 = vmatprep.subr.mxu0 0.0
  %1215 = vmatpush2.msra.mxu0 0.0
  %1216 = vmatprep.subr.mxu0 0.0
  %1217 = vmatpush2.msra.mxu0 0.0
  %1218 = vmatprep.subr.mxu0 0.0
  %1219 = vmatpush2.msra.mxu0 0.0
  %1220 = vmatprep.subr.mxu0 0.0
  %1221 = vmatpush2.msra.mxu0 0.0
  %1222 = vmatprep.subr.mxu0 0.0
  %1223 = vmatpush2.msra.mxu0 0.0
  %1224 = vmatprep.mubr.f32.mxu0 0.0
  %1225 = vmatmul.mubr.f32.gmra.mxu0 %v1155
  %v1226 = vpop.f32.mrf.mxu0
  %v1227 = vadd.f32 0.0, %v1226
  %v1228 = vpop.f32.mrf.mxu0
  %1229 = vmatprep.mubr.f32.mxu0 0.0
  %1230 = vmatmul.mubr.f32.gmra.mxu0 %v1158
  %v1231 = vpop.f32.mrf.mxu0
  %v1232 = vadd.f32 0.0, %v1231
  %v1233 = vpop.f32.mrf.mxu0
  %1234 = vdwg.mxu0
  %v1235 = vadd.f32 %v942, %v1227
  %v1236 = vadd.f32 %v947, %v1232
  %1237 = vrot.lane.b32.xlu0 %v373, 104
  %v1238 = vpop.permute.xlu0 %1237
  %1239 = vrot.lane.b32.xlu0 %v378, 104
  %v1240 = vpop.permute.xlu0 %1239
  %1241 = vrot.lane.b32.xlu0 %v373, 72
  %v1242 = vpop.permute.xlu0 %1241
  %1243 = vrot.lane.b32.xlu0 %v378, 72
  %v1244 = vpop.permute.xlu0 %1243
  %v1245 = vsel %vm104, %v1238, 0
  %v1247 = vsel %vm104, %v1240, 0
  %v1249 = vsel %vm104, %v1242, 0
  %v1251 = vsel %vm104, %v1244, 0
  %1253 = vmatprep.subr.mxu0 0.0
  %1254 = vmatpush1.xpose.msra.mxu0 0.0
  %1255 = vmatprep.subr.mxu0 0.0
  %1256 = vmatpush1.xpose.msra.mxu0 0.0
  %1257 = vmatprep.subr.mxu0 0.0
  %1258 = vmatpush1.xpose.msra.mxu0 0.0
  %1259 = vmatprep.subr.mxu0 0.0
  %1260 = vmatpush1.xpose.msra.mxu0 0.0
  %1261 = vmatprep.subr.mxu0 0.0
  %1262 = vmatpush1.xpose.msra.mxu0 0.0
  %1263 = vmatprep.subr.mxu0 0.0
  %1264 = vmatpush1.xpose.msra.mxu0 0.0
  %1265 = vmatprep.subr.mxu0 0.0
  %1266 = vmatpush1.xpose.msra.mxu0 0.0
  %1267 = vmatprep.subr.mxu0 0.0
  %1268 = vmatpush1.xpose.msra.mxu0 0.0
  %1269 = vmatprep.subr.mxu0 0.0
  %1270 = vmatpush1.xpose.msra.mxu0 0.0
  %1271 = vmatprep.subr.mxu0 0.0
  %1272 = vmatpush1.xpose.msra.mxu0 0.0
  %1273 = vmatprep.subr.mxu0 0.0
  %1274 = vmatpush1.xpose.msra.mxu0 0.0
  %1275 = vmatprep.subr.mxu0 0.0
  %1276 = vmatpush1.xpose.msra.mxu0 0.0
  %1277 = vmatprep.subr.mxu0 0.0
  %1278 = vmatpush1.xpose.msra.mxu0 0.0
  %1279 = vmatprep.subr.mxu0 0.0
  %1280 = vmatpush1.xpose.msra.mxu0 0.0
  %1281 = vmatprep.subr.mxu0 0.0
  %1282 = vmatpush1.xpose.msra.mxu0 %v1251
  %1283 = vmatprep.subr.mxu0 0.0
  %1284 = vmatpush1.xpose.msra.mxu0 %v1249
  %1285 = vmatprep.subr.mxu0 0.0
  %1286 = vmatpush2.xpose.msra.mxu0 0.0
  %1287 = vmatprep.subr.mxu0 0.0
  %1288 = vmatpush2.xpose.msra.mxu0 0.0
  %1289 = vmatprep.subr.mxu0 0.0
  %1290 = vmatpush2.xpose.msra.mxu0 0.0
  %1291 = vmatprep.subr.mxu0 0.0
  %1292 = vmatpush2.xpose.msra.mxu0 0.0
  %1293 = vmatprep.subr.mxu0 0.0
  %1294 = vmatpush2.xpose.msra.mxu0 0.0
  %1295 = vmatprep.subr.mxu0 0.0
  %1296 = vmatpush2.xpose.msra.mxu0 0.0
  %1297 = vmatprep.subr.mxu0 0.0
  %1298 = vmatpush2.xpose.msra.mxu0 0.0
  %1299 = vmatprep.subr.mxu0 0.0
  %1300 = vmatpush2.xpose.msra.mxu0 0.0
  %1301 = vmatprep.subr.mxu0 0.0
  %1302 = vmatpush2.xpose.msra.mxu0 0.0
  %1303 = vmatprep.subr.mxu0 0.0
  %1304 = vmatpush2.xpose.msra.mxu0 0.0
  %1305 = vmatprep.subr.mxu0 0.0
  %1306 = vmatpush2.xpose.msra.mxu0 0.0
  %1307 = vmatprep.subr.mxu0 0.0
  %1308 = vmatpush2.xpose.msra.mxu0 0.0
  %1309 = vmatprep.subr.mxu0 0.0
  %1310 = vmatpush2.xpose.msra.mxu0 0.0
  %1311 = vmatprep.subr.mxu0 0.0
  %1312 = vmatpush2.xpose.msra.mxu0 0.0
  %1313 = vmatprep.subr.mxu0 0.0
  %1314 = vmatpush2.xpose.msra.mxu0 0.0
  %1315 = vmatprep.subr.mxu0 0.0
  %1316 = vmatpush2.xpose.msra.mxu0 0.0
  %1317 = vmatprep.mubr.f32.mxu0 0.0
  %1318 = vmatmul.mubr.f32.gmra.mxu0 %v1245
  %v1319 = vpop.f32.mrf.mxu0
  %v1320 = vadd.f32 0.0, %v1319
  %v1321 = vpop.f32.mrf.mxu0
  %1322 = vmatprep.mubr.f32.mxu0 0.0
  %1323 = vmatmul.mubr.f32.gmra.mxu0 %v1247
  %v1324 = vpop.f32.mrf.mxu0
  %v1325 = vadd.f32 0.0, %v1324
  %v1326 = vpop.f32.mrf.mxu0
  %1327 = vdwg.mxu0
  %v1328 = vmul.f32 %v1320, 0.35355338
  %v1329 = vmul.f32 %v1325, 0.35355338
  %v1330 = vadd.f32 %v1328, %v268
  %v1331 = vadd.f32 %v1329, %v269
  %v1332 = vsel %vm474, %v1330, -inf
  %1333 = vmax.xlane.f32.xlu0 %v1332
  %v1334 = vpop.xlane.xlu0 %1333
  %v1335 = vsel %vm474, %v1331, -inf
  %1336 = vmax.xlane.f32.xlu0 %v1335
  %v1337 = vpop.xlane.xlu0 %1336
  %v1338 = vsub.f32 %v1330, %v1334
  %v1339 = vsub.f32 %v1331, %v1337
  %v1340 = vmul.f32 %v1338, 1.442695
  %v1341 = vpow.pop %v1340
  %v1342 = vmul.f32 %v1339, 1.442695
  %v1343 = vpow.pop %v1342
  %v1344 = vsel %vm474, %v1341, 0.0
  %1345 = vadd.xlane.f32.xlu0 %v1344
  %v1346 = vpop.xlane.xlu0 %1345
  %v1347 = vsel %vm474, %v1343, 0.0
  %1348 = vadd.xlane.f32.xlu0 %v1347
  %v1349 = vpop.xlane.xlu0 %1348
  %v1350 = vrcp.pop %v1346
  %v1351 = vrcp.pop %v1349
  %v1352 = vmul.f32 %v1341, %v1350
  %v1353 = vmul.f32 %v1343, %v1351
  %1354 = vrot.lane.b32.xlu0 %v373, 40
  %v1355 = vpop.permute.xlu0 %1354
  %1356 = vrot.lane.b32.xlu0 %v378, 40
  %v1357 = vpop.permute.xlu0 %1356
  %v1361 = vsel %vm474, %v1352, 0
  %v1364 = vsel %vm474, %v1353, 0
  %1366 = vmatprep.subr.mxu0 0.0
  %1367 = vmatpush1.msra.mxu0 0.0
  %1368 = vmatprep.subr.mxu0 0.0
  %1369 = vmatpush1.msra.mxu0 0.0
  %1370 = vmatprep.subr.mxu0 0.0
  %1371 = vmatpush1.msra.mxu0 0.0
  %1372 = vmatprep.subr.mxu0 0.0
  %1373 = vmatpush1.msra.mxu0 0.0
  %1374 = vmatprep.subr.mxu0 0.0
  %1375 = vmatpush1.msra.mxu0 0.0
  %1376 = vmatprep.subr.mxu0 0.0
  %1377 = vmatpush1.msra.mxu0 0.0
  %1378 = vmatprep.subr.mxu0 0.0
  %1379 = vmatpush1.msra.mxu0 0.0
  %1380 = vmatprep.subr.mxu0 0.0
  %1381 = vmatpush1.msra.mxu0 0.0
  %1382 = vmatprep.subr.mxu0 0.0
  %1383 = vmatpush1.msra.mxu0 0.0
  %1384 = vmatprep.subr.mxu0 0.0
  %1385 = vmatpush1.msra.mxu0 0.0
  %1386 = vmatprep.subr.mxu0 0.0
  %1387 = vmatpush1.msra.mxu0 0.0
  %1388 = vmatprep.subr.mxu0 0.0
  %1389 = vmatpush1.msra.mxu0 0.0
  %1390 = vmatprep.subr.mxu0 0.0
  %1391 = vmatpush1.msra.mxu0 0.0
  %1392 = vmatprep.subr.mxu0 0.0
  %1393 = vmatpush1.msra.mxu0 0.0
  %1394 = vmatprep.subr.mxu0 0.0
  %1395 = vmatpush1.msra.mxu0 %v1357
  %1396 = vmatprep.subr.mxu0 0.0
  %1397 = vmatpush1.msra.mxu0 %v1355
  %1398 = vmatprep.subr.mxu0 0.0
  %1399 = vmatpush2.msra.mxu0 0.0
  %1400 = vmatprep.subr.mxu0 0.0
  %1401 = vmatpush2.msra.mxu0 0.0
  %1402 = vmatprep.subr.mxu0 0.0
  %1403 = vmatpush2.msra.mxu0 0.0
  %1404 = vmatprep.subr.mxu0 0.0
  %1405 = vmatpush2.msra.mxu0 0.0
  %1406 = vmatprep.subr.mxu0 0.0
  %1407 = vmatpush2.msra.mxu0 0.0
  %1408 = vmatprep.subr.mxu0 0.0
  %1409 = vmatpush2.msra.mxu0 0.0
  %1410 = vmatprep.subr.mxu0 0.0
  %1411 = vmatpush2.msra.mxu0 0.0
  %1412 = vmatprep.subr.mxu0 0.0
  %1413 = vmatpush2.msra.mxu0 0.0
  %1414 = vmatprep.subr.mxu0 0.0
  %1415 = vmatpush2.msra.mxu0 0.0
  %1416 = vmatprep.subr.mxu0 0.0
  %1417 = vmatpush2.msra.mxu0 0.0
  %1418 = vmatprep.subr.mxu0 0.0
  %1419 = vmatpush2.msra.mxu0 0.0
  %1420 = vmatprep.subr.mxu0 0.0
  %1421 = vmatpush2.msra.mxu0 0.0
  %1422 = vmatprep.subr.mxu0 0.0
  %1423 = vmatpush2.msra.mxu0 0.0
  %1424 = vmatprep.subr.mxu0 0.0
  %1425 = vmatpush2.msra.mxu0 0.0
  %1426 = vmatprep.subr.mxu0 0.0
  %1427 = vmatpush2.msra.mxu0 0.0
  %1428 = vmatprep.subr.mxu0 0.0
  %1429 = vmatpush2.msra.mxu0 0.0
  %1430 = vmatprep.mubr.f32.mxu0 0.0
  %1431 = vmatmul.mubr.f32.gmra.mxu0 %v1361
  %v1432 = vpop.f32.mrf.mxu0
  %v1433 = vadd.f32 0.0, %v1432
  %v1434 = vpop.f32.mrf.mxu0
  %1435 = vmatprep.mubr.f32.mxu0 0.0
  %1436 = vmatmul.mubr.f32.gmra.mxu0 %v1364
  %v1437 = vpop.f32.mrf.mxu0
  %v1438 = vadd.f32 0.0, %v1437
  %v1439 = vpop.f32.mrf.mxu0
  %1440 = vdwg.mxu0
  %v1442 = vsel %vm104, %v1433, 0
  %v1445 = vsel %vm104, %v1438, 0
  %1447 = vmatprep.subr.mxu0 0.0
  %1448 = vmatpush1.msra.mxu0 0.0
  %1449 = vmatprep.subr.mxu0 0.0
  %1450 = vmatpush1.msra.mxu0 0.0
  %1451 = vmatprep.subr.mxu0 0.0
  %1452 = vmatpush1.msra.mxu0 0.0
  %1453 = vmatprep.subr.mxu0 0.0
  %1454 = vmatpush1.msra.mxu0 0.0
  %1455 = vmatprep.subr.mxu0 0.0
  %1456 = vmatpush1.msra.mxu0 0.0
  %1457 = vmatprep.subr.mxu0 0.0
  %1458 = vmatpush1.msra.mxu0 0.0
  %1459 = vmatprep.subr.mxu0 0.0
  %1460 = vmatpush1.msra.mxu0 0.0
  %1461 = vmatprep.subr.mxu0 0.0
  %1462 = vmatpush1.msra.mxu0 0.0
  %1463 = vmatprep.subr.mxu0 0.0
  %1464 = vmatpush1.msra.mxu0 0.0
  %1465 = vmatprep.subr.mxu0 0.0
  %1466 = vmatpush1.msra.mxu0 0.0
  %1467 = vmatprep.subr.mxu0 0.0
  %1468 = vmatpush1.msra.mxu0 0.0
  %1469 = vmatprep.subr.mxu0 0.0
  %1470 = vmatpush1.msra.mxu0 0.0
  %1471 = vmatprep.subr.mxu0 0.0
  %1472 = vmatpush1.msra.mxu0 0.0
  %1473 = vmatprep.subr.mxu0 0.0
  %1474 = vmatpush1.msra.mxu0 0.0
  %1475 = vmatprep.subr.mxu0 0.0
  %1476 = vmatpush1.msra.mxu0 0.0
  %1477 = vmatprep.subr.mxu0 0.0
  %1478 = vmatpush1.msra.mxu0 %v278
  %1479 = vmatprep.subr.mxu0 0.0
  %1480 = vmatpush2.msra.mxu0 0.0
  %1481 = vmatprep.subr.mxu0 0.0
  %1482 = vmatpush2.msra.mxu0 0.0
  %1483 = vmatprep.subr.mxu0 0.0
  %1484 = vmatpush2.msra.mxu0 0.0
  %1485 = vmatprep.subr.mxu0 0.0
  %1486 = vmatpush2.msra.mxu0 0.0
  %1487 = vmatprep.subr.mxu0 0.0
  %1488 = vmatpush2.msra.mxu0 0.0
  %1489 = vmatprep.subr.mxu0 0.0
  %1490 = vmatpush2.msra.mxu0 0.0
  %1491 = vmatprep.subr.mxu0 0.0
  %1492 = vmatpush2.msra.mxu0 0.0
  %1493 = vmatprep.subr.mxu0 0.0
  %1494 = vmatpush2.msra.mxu0 0.0
  %1495 = vmatprep.subr.mxu0 0.0
  %1496 = vmatpush2.msra.mxu0 0.0
  %1497 = vmatprep.subr.mxu0 0.0
  %1498 = vmatpush2.msra.mxu0 0.0
  %1499 = vmatprep.subr.mxu0 0.0
  %1500 = vmatpush2.msra.mxu0 0.0
  %1501 = vmatprep.subr.mxu0 0.0
  %1502 = vmatpush2.msra.mxu0 0.0
  %1503 = vmatprep.subr.mxu0 0.0
  %1504 = vmatpush2.msra.mxu0 0.0
  %1505 = vmatprep.subr.mxu0 0.0
  %1506 = vmatpush2.msra.mxu0 0.0
  %1507 = vmatprep.subr.mxu0 0.0
  %1508 = vmatpush2.msra.mxu0 0.0
  %1509 = vmatprep.subr.mxu0 0.0
  %1510 = vmatpush2.msra.mxu0 0.0
  %1511 = vmatprep.mubr.f32.mxu0 0.0
  %1512 = vmatmul.mubr.f32.gmra.mxu0 %v1442
  %v1513 = vpop.f32.mrf.mxu0
  %v1514 = vadd.f32 0.0, %v1513
  %v1515 = vpop.f32.mrf.mxu0
  %1516 = vmatprep.mubr.f32.mxu0 0.0
  %1517 = vmatmul.mubr.f32.gmra.mxu0 %v1445
  %v1518 = vpop.f32.mrf.mxu0
  %v1519 = vadd.f32 0.0, %v1518
  %v1520 = vpop.f32.mrf.mxu0
  %1521 = vdwg.mxu0
  %v1522 = vadd.f32 %v1235, %v1514
  %v1523 = vadd.f32 %v1236, %v1519
  %v1524 = vlaneseq
  %v1525 = vshrl.u32 %v1524, 7
  %v1526 = vsub.s32 0, %v1525
  %v1527 = vrot.slane %v292, %v1526
  %v1528 = vadd.f32 %v1522, %v1527
  %v1529 = vadd.f32 %v1523, %v1527
  %v1530 = vadd.f32 %v260, %v1528
  %v1531 = vadd.f32 %v265, %v1529
  %v1532 = vsel %vm299, %v1530, 0.0
  %1533 = vadd.xlane.f32.xlu0 %v1532
  %v1534 = vpop.xlane.xlu0 %1533
  %v1535 = vsel %vm299, %v1531, 0.0
  %1536 = vadd.xlane.f32.xlu0 %v1535
  %v1537 = vpop.xlane.xlu0 %1536
  %v1538 = vrcp.pop 32.0
  %v1539 = vmul.f32 %v1534, %v1538
  %v1540 = vmul.f32 %v1537, %v1538
  %v1541 = vsub.f32 %v1530, %v1539
  %v1542 = vsub.f32 %v1531, %v1540
  %v1543 = vmul.f32 %v1541, %v1541
  %v1544 = vmul.f32 %v1542, %v1542
  %v1545 = vsel %vm299, %v1543, 0.0
  %1546 = vadd.xlane.f32.xlu0 %v1545
  %v1547 = vpop.xlane.xlu0 %1546
  %v1548 = vsel %vm299, %v1544, 0.0
  %1549 = vadd.xlane.f32.xlu0 %v1548
  %v1550 = vpop.xlane.xlu0 %1549
  %v1551 = vmul.f32 %v1547, %v1538
  %v1552 = vmul.f32 %v1550, %v1538
  %v1553 = vadd.f32 %v1551, 1e-05
  %v1554 = vadd.f32 %v1552, 1e-05
  %v1555 = vrsqrt.pop %v1553
  %v1556 = vrsqrt.pop %v1554
  %v1557 = vmul.f32 %v1541, %v1555
  %v1558 = vmul.f32 %v1542, %v1556
  %v1559 = vlaneseq
  %v1560 = vshrl.u32 %v1559, 7
  %v1561 = vsub.s32 1, %v1560
  %v1562 = vrot.slane %v292, %v1561
  %v1563 = vmul.f32 %v1557, %v1562
  %v1564 = vmul.f32 %v1558, %v1562
  %v1565 = vlaneseq
  %v1566 = vshrl.u32 %v1565, 7
  %v1567 = vsub.s32 2, %v1566
  %v1568 = vrot.slane %v292, %v1567
  %v1569 = vadd.f32 %v1563, %v1568
  %v1570 = vadd.f32 %v1564, %v1568
  %v1572 = vlaneseq
  %v1573 = vshrl.u32 %v1572, 7
  %v1574 = vsub.s32 0, %v1573
  %v1575 = vrot.slane %v283, %v1574
  %v1578 = vsel %vm299, %v1569, 0
  %v1581 = vsel %vm299, %v1570, 0
  %1583 = vmatprep.subr.mxu0 0.0
  %1584 = vmatpush1.msra.mxu0 0.0
  %1585 = vmatprep.subr.mxu0 0.0
  %1586 = vmatpush1.msra.mxu0 0.0
  %1587 = vmatprep.subr.mxu0 0.0
  %1588 = vmatpush1.msra.mxu0 0.0
  %1589 = vmatprep.subr.mxu0 0.0
  %1590 = vmatpush1.msra.mxu0 0.0
  %1591 = vmatprep.subr.mxu0 0.0
  %1592 = vmatpush1.msra.mxu0 0.0
  %1593 = vmatprep.subr.mxu0 0.0
  %1594 = vmatpush1.msra.mxu0 0.0
  %1595 = vmatprep.subr.mxu0 0.0
  %1596 = vmatpush1.msra.mxu0 0.0
  %1597 = vmatprep.subr.mxu0 0.0
  %1598 = vmatpush1.msra.mxu0 0.0
  %1599 = vmatprep.subr.mxu0 0.0
  %1600 = vmatpush1.msra.mxu0 0.0
  %1601 = vmatprep.subr.mxu0 0.0
  %1602 = vmatpush1.msra.mxu0 0.0
  %1603 = vmatprep.subr.mxu0 0.0
  %1604 = vmatpush1.msra.mxu0 0.0
  %1605 = vmatprep.subr.mxu0 0.0
  %1606 = vmatpush1.msra.mxu0 0.0
  %1607 = vmatprep.subr.mxu0 0.0
  %1608 = vmatpush1.msra.mxu0 %v282
  %1609 = vmatprep.subr.mxu0 0.0
  %1610 = vmatpush1.msra.mxu0 %v281
  %1611 = vmatprep.subr.mxu0 0.0
  %1612 = vmatpush1.msra.mxu0 %v280
  %1613 = vmatprep.subr.mxu0 0.0
  %1614 = vmatpush1.msra.mxu0 %v279
  %1615 = vmatprep.subr.mxu0 0.0
  %1616 = vmatpush2.msra.mxu0 0.0
  %1617 = vmatprep.subr.mxu0 0.0
  %1618 = vmatpush2.msra.mxu0 0.0
  %1619 = vmatprep.subr.mxu0 0.0
  %1620 = vmatpush2.msra.mxu0 0.0
  %1621 = vmatprep.subr.mxu0 0.0
  %1622 = vmatpush2.msra.mxu0 0.0
  %1623 = vmatprep.subr.mxu0 0.0
  %1624 = vmatpush2.msra.mxu0 0.0
  %1625 = vmatprep.subr.mxu0 0.0
  %1626 = vmatpush2.msra.mxu0 0.0
  %1627 = vmatprep.subr.mxu0 0.0
  %1628 = vmatpush2.msra.mxu0 0.0
  %1629 = vmatprep.subr.mxu0 0.0
  %1630 = vmatpush2.msra.mxu0 0.0
  %1631 = vmatprep.subr.mxu0 0.0
  %1632 = vmatpush2.msra.mxu0 0.0
  %1633 = vmatprep.subr.mxu0 0.0
  %1634 = vmatpush2.msra.mxu0 0.0
  %1635 = vmatprep.subr.mxu0 0.0
  %1636 = vmatpush2.msra.mxu0 0.0
  %1637 = vmatprep.subr.mxu0 0.0
  %1638 = vmatpush2.msra.mxu0 0.0
  %1639 = vmatprep.subr.mxu0 0.0
  %1640 = vmatpush2.msra.mxu0 0.0
  %1641 = vmatprep.subr.mxu0 0.0
  %1642 = vmatpush2.msra.mxu0 0.0
  %1643 = vmatprep.subr.mxu0 0.0
  %1644 = vmatpush2.msra.mxu0 0.0
  %1645 = vmatprep.subr.mxu0 0.0
  %1646 = vmatpush2.msra.mxu0 0.0
  %1647 = vmatprep.mubr.f32.mxu0 0.0
  %1648 = vmatmul.mubr.f32.gmra.mxu0 %v1578
  %v1649 = vpop.f32.mrf.mxu0
  %v1650 = vadd.f32 %v1575, %v1649
  %v1651 = vpop.f32.mrf.mxu0
  %1652 = vmatprep.mubr.f32.mxu0 0.0
  %1653 = vmatmul.mubr.f32.gmra.mxu0 %v1581
  %v1654 = vpop.f32.mrf.mxu0
  %v1655 = vadd.f32 %v1575, %v1654
  %v1656 = vpop.f32.mrf.mxu0
  %1657 = vdwg.mxu0
  %v1658 = vmax.f32 %v1650, 0.0
  %v1659 = vmax.f32 %v1655, 0.0
  %v1660 = vlaneseq
  %v1661 = vshrl.u32 %v1660, 7
  %v1662 = vsub.s32 3, %v1661
  %v1663 = vrot.slane %v292, %v1662
  %vm1664 = vcmask 523264
  %v1666 = vsel %vm1664, %v1658, 0
  %v1669 = vsel %vm1664, %v1659, 0
  %1671 = vmatprep.subr.mxu0 0.0
  %1672 = vmatpush1.msra.mxu0 0.0
  %1673 = vmatprep.subr.mxu0 0.0
  %1674 = vmatpush1.msra.mxu0 0.0
  %1675 = vmatprep.subr.mxu0 0.0
  %1676 = vmatpush1.msra.mxu0 0.0
  %1677 = vmatprep.subr.mxu0 0.0
  %1678 = vmatpush1.msra.mxu0 0.0
  %1679 = vmatprep.subr.mxu0 0.0
  %1680 = vmatpush1.msra.mxu0 0.0
  %1681 = vmatprep.subr.mxu0 0.0
  %1682 = vmatpush1.msra.mxu0 0.0
  %1683 = vmatprep.subr.mxu0 0.0
  %1684 = vmatpush1.msra.mxu0 0.0
  %1685 = vmatprep.subr.mxu0 0.0
  %1686 = vmatpush1.msra.mxu0 0.0
  %1687 = vmatprep.subr.mxu0 0.0
  %1688 = vmatpush1.msra.mxu0 %v291
  %1689 = vmatprep.subr.mxu0 0.0
  %1690 = vmatpush1.msra.mxu0 %v290
  %1691 = vmatprep.subr.mxu0 0.0
  %1692 = vmatpush1.msra.mxu0 %v289
  %1693 = vmatprep.subr.mxu0 0.0
  %1694 = vmatpush1.msra.mxu0 %v288
  %1695 = vmatprep.subr.mxu0 0.0
  %1696 = vmatpush1.msra.mxu0 %v287
  %1697 = vmatprep.subr.mxu0 0.0
  %1698 = vmatpush1.msra.mxu0 %v286
  %1699 = vmatprep.subr.mxu0 0.0
  %1700 = vmatpush1.msra.mxu0 %v285
  %1701 = vmatprep.subr.mxu0 0.0
  %1702 = vmatpush1.msra.mxu0 %v284
  %1703 = vmatprep.subr.mxu0 0.0
  %1704 = vmatpush2.msra.mxu0 0.0
  %1705 = vmatprep.subr.mxu0 0.0
  %1706 = vmatpush2.msra.mxu0 0.0
  %1707 = vmatprep.subr.mxu0 0.0
  %1708 = vmatpush2.msra.mxu0 0.0
  %1709 = vmatprep.subr.mxu0 0.0
  %1710 = vmatpush2.msra.mxu0 0.0
  %1711 = vmatprep.subr.mxu0 0.0
  %1712 = vmatpush2.msra.mxu0 0.0
  %1713 = vmatprep.subr.mxu0 0.0
  %1714 = vmatpush2.msra.mxu0 0.0
  %1715 = vmatprep.subr.mxu0 0.0
  %1716 = vmatpush2.msra.mxu0 0.0
  %1717 = vmatprep.subr.mxu0 0.0
  %1718 = vmatpush2.msra.mxu0 0.0
  %1719 = vmatprep.subr.mxu0 0.0
  %1720 = vmatpush2.msra.mxu0 0.0
  %1721 = vmatprep.subr.mxu0 0.0
  %1722 = vmatpush2.msra.mxu0 0.0
  %1723 = vmatprep.subr.mxu0 0.0
  %1724 = vmatpush2.msra.mxu0 0.0
  %1725 = vmatprep.subr.mxu0 0.0
  %1726 = vmatpush2.msra.mxu0 0.0
  %1727 = vmatprep.subr.mxu0 0.0
  %1728 = vmatpush2.msra.mxu0 0.0
  %1729 = vmatprep.subr.mxu0 0.0
  %1730 = vmatpush2.msra.mxu0 0.0
  %1731 = vmatprep.subr.mxu0 0.0
  %1732 = vmatpush2.msra.mxu0 0.0
  %1733 = vmatprep.subr.mxu0 0.0
  %1734 = vmatpush2.msra.mxu0 0.0
  %1735 = vmatprep.mubr.f32.mxu0 0.0
  %1736 = vmatmul.mubr.f32.gmra.mxu0 %v1666
  %v1737 = vpop.f32.mrf.mxu0
  %v1738 = vadd.f32 %v1663, %v1737
  %v1739 = vpop.f32.mrf.mxu0
  %1740 = vmatprep.mubr.f32.mxu0 0.0
  %1741 = vmatmul.mubr.f32.gmra.mxu0 %v1669
  %v1742 = vpop.f32.mrf.mxu0
  %v1743 = vadd.f32 %v1663, %v1742
  %v1744 = vpop.f32.mrf.mxu0
  %1745 = vdwg.mxu0
  %v1746 = vadd.f32 %v1569, %v1738
  %v1747 = vadd.f32 %v1570, %v1743
  %v1748 = vsel %vm299, %v1746, 0.0
  %1749 = vadd.xlane.f32.xlu0 %v1748
  %v1750 = vpop.xlane.xlu0 %1749
  %v1751 = vsel %vm299, %v1747, 0.0
  %1752 = vadd.xlane.f32.xlu0 %v1751
  %v1753 = vpop.xlane.xlu0 %1752
  %v1754 = vmul.f32 %v1750, %v1538
  %v1755 = vmul.f32 %v1753, %v1538
  %v1756 = vsub.f32 %v1746, %v1754
  %v1757 = vsub.f32 %v1747, %v1755
  %v1758 = vmul.f32 %v1756, %v1756
  %v1759 = vmul.f32 %v1757, %v1757
  %v1760 = vsel %vm299, %v1758, 0.0
  %1761 = vadd.xlane.f32.xlu0 %v1760
  %v1762 = vpop.xlane.xlu0 %1761
  %v1763 = vsel %vm299, %v1759, 0.0
  %1764 = vadd.xlane.f32.xlu0 %v1763
  %v1765 = vpop.xlane.xlu0 %1764
  %v1766 = vmul.f32 %v1762, %v1538
  %v1767 = vmul.f32 %v1765, %v1538
  %v1768 = vadd.f32 %v1766, 1e-05
  %v1769 = vadd.f32 %v1767, 1e-05
  %v1770 = vrsqrt.pop %v1768
  %v1771 = vrsqrt.pop %v1769
  %v1772 = vmul.f32 %v1756, %v1770
  %v1773 = vmul.f32 %v1757, %v1771
  %v1774 = vlaneseq
  %v1775 = vshrl.u32 %v1774, 7
  %v1776 = vsub.s32 4, %v1775
  %v1777 = vrot.slane %v292, %v1776
  %v1778 = vmul.f32 %v1772, %v1777
  %v1779 = vmul.f32 %v1773, %v1777
  %v1780 = vlaneseq
  %v1781 = vshrl.u32 %v1780, 7
  %v1782 = vsub.s32 5, %v1781
  %v1783 = vrot.slane %v292, %v1782
  %v1784 = vadd.f32 %v1778, %v1783
  %v1785 = vadd.f32 %v1779, %v1783
  %s1786 = scalar_lea.vmem %s4, 32
  %v1787 = vld [vmem:[%s1786] sm:$0xff]
  %v1788 = vld [vmem:[%s1786 + $0x8] sm:$0xff]
  %v1789 = vld [vmem:[%s1786 + $0x10] sm:$0xff]
  %v1790 = vld [vmem:[%s1786 + $0x18] sm:$0xff]
  %s1791 = scalar_lea.vmem %s5, 1
  %v1792 = vld [vmem:[%s1791] sm:$0x1]
  %s1793 = scalar_lea.vmem %s6, 32
  %v1794 = vld [vmem:[%s1793] sm:$0xff]
  %v1795 = vld [vmem:[%s1793 + $0x8] sm:$0xff]
  %v1796 = vld [vmem:[%s1793 + $0x10] sm:$0xff]
  %v1797 = vld [vmem:[%s1793 + $0x18] sm:$0xff]
  %s1798 = scalar_lea.vmem %s7, 32
  %v1799 = vld [vmem:[%s1798] sm:$0xff]
  %v1800 = vld [vmem:[%s1798 + $0x8] sm:$0xff]
  %v1801 = vld [vmem:[%s1798 + $0x10] sm:$0xff]
  %v1802 = vld [vmem:[%s1798 + $0x18] sm:$0xff]
  %s1803 = scalar_lea.vmem %s8, 1
  %v1804 = vld [vmem:[%s1803] sm:$0x1]
  %s1805 = scalar_lea.vmem %s9, 64
  %v1806 = vld [vmem:[%s1805] sm:$0xff]
  %v1807 = vld [vmem:[%s1805 + $0x8] sm:$0xff]
  %v1808 = vld [vmem:[%s1805 + $0x10] sm:$0xff]
  %v1809 = vld [vmem:[%s1805 + $0x18] sm:$0xff]
  %v1810 = vld [vmem:[%s1805 + $0x20] sm:$0xff]
  %v1811 = vld [vmem:[%s1805 + $0x28] sm:$0xff]
  %v1812 = vld [vmem:[%s1805 + $0x30] sm:$0xff]
  %v1813 = vld [vmem:[%s1805 + $0x38] sm:$0xff]
  %s1814 = scalar_lea.vmem %s10, 8
  %v1815 = vld [vmem:[%s1814] sm:$0x3f]
  %v1817 = vlaneseq
  %v1818 = vshrl.u32 %v1817, 7
  %v1819 = vsub.s32 0, %v1818
  %v1820 = vrot.slane %v1792, %v1819
  %v1823 = vsel %vm299, %v1784, 0
  %v1826 = vsel %vm299, %v1785, 0
  %1828 = vmatprep.subr.mxu0 0.0
  %1829 = vmatpush1.msra.mxu0 0.0
  %1830 = vmatprep.subr.mxu0 0.0
  %1831 = vmatpush1.msra.mxu0 0.0
  %1832 = vmatprep.subr.mxu0 0.0
  %1833 = vmatpush1.msra.mxu0 0.0
  %1834 = vmatprep.subr.mxu0 0.0
  %1835 = vmatpush1.msra.mxu0 0.0
  %1836 = vmatprep.subr.mxu0 0.0
  %1837 = vmatpush1.msra.mxu0 0.0
  %1838 = vmatprep.subr.mxu0 0.0
  %1839 = vmatpush1.msra.mxu0 0.0
  %1840 = vmatprep.subr.mxu0 0.0
  %1841 = vmatpush1.msra.mxu0 0.0
  %1842 = vmatprep.subr.mxu0 0.0
  %1843 = vmatpush1.msra.mxu0 0.0
  %1844 = vmatprep.subr.mxu0 0.0
  %1845 = vmatpush1.msra.mxu0 0.0
  %1846 = vmatprep.subr.mxu0 0.0
  %1847 = vmatpush1.msra.mxu0 0.0
  %1848 = vmatprep.subr.mxu0 0.0
  %1849 = vmatpush1.msra.mxu0 0.0
  %1850 = vmatprep.subr.mxu0 0.0
  %1851 = vmatpush1.msra.mxu0 0.0
  %1852 = vmatprep.subr.mxu0 0.0
  %1853 = vmatpush1.msra.mxu0 %v1790
  %1854 = vmatprep.subr.mxu0 0.0
  %1855 = vmatpush1.msra.mxu0 %v1789
  %1856 = vmatprep.subr.mxu0 0.0
  %1857 = vmatpush1.msra.mxu0 %v1788
  %1858 = vmatprep.subr.mxu0 0.0
  %1859 = vmatpush1.msra.mxu0 %v1787
  %1860 = vmatprep.subr.mxu0 0.0
  %1861 = vmatpush2.msra.mxu0 0.0
  %1862 = vmatprep.subr.mxu0 0.0
  %1863 = vmatpush2.msra.mxu0 0.0
  %1864 = vmatprep.subr.mxu0 0.0
  %1865 = vmatpush2.msra.mxu0 0.0
  %1866 = vmatprep.subr.mxu0 0.0
  %1867 = vmatpush2.msra.mxu0 0.0
  %1868 = vmatprep.subr.mxu0 0.0
  %1869 = vmatpush2.msra.mxu0 0.0
  %1870 = vmatprep.subr.mxu0 0.0
  %1871 = vmatpush2.msra.mxu0 0.0
  %1872 = vmatprep.subr.mxu0 0.0
  %1873 = vmatpush2.msra.mxu0 0.0
  %1874 = vmatprep.subr.mxu0 0.0
  %1875 = vmatpush2.msra.mxu0 0.0
  %1876 = vmatprep.subr.mxu0 0.0
  %1877 = vmatpush2.msra.mxu0 0.0
  %1878 = vmatprep.subr.mxu0 0.0
  %1879 = vmatpush2.msra.mxu0 0.0
  %1880 = vmatprep.subr.mxu0 0.0
  %1881 = vmatpush2.msra.mxu0 0.0
  %1882 = vmatprep.subr.mxu0 0.0
  %1883 = vmatpush2.msra.mxu0 0.0
  %1884 = vmatprep.subr.mxu0 0.0
  %1885 = vmatpush2.msra.mxu0 0.0
  %1886 = vmatprep.subr.mxu0 0.0
  %1887 = vmatpush2.msra.mxu0 0.0
  %1888 = vmatprep.subr.mxu0 0.0
  %1889 = vmatpush2.msra.mxu0 0.0
  %1890 = vmatprep.subr.mxu0 0.0
  %1891 = vmatpush2.msra.mxu0 0.0
  %1892 = vmatprep.mubr.f32.mxu0 0.0
  %1893 = vmatmul.mubr.f32.gmra.mxu0 %v1823
  %v1894 = vpop.f32.mrf.mxu0
  %v1895 = vadd.f32 %v1820, %v1894
  %v1896 = vpop.f32.mrf.mxu0
  %1897 = vmatprep.mubr.f32.mxu0 0.0
  %1898 = vmatmul.mubr.f32.gmra.mxu0 %v1826
  %v1899 = vpop.f32.mrf.mxu0
  %v1900 = vadd.f32 %v1820, %v1899
  %v1901 = vpop.f32.mrf.mxu0
  %1902 = vdwg.mxu0
  %1905 = vrot.lane.b32.xlu0 %v1895, 96
  %v1906 = vpop.permute.xlu0 %1905
  %1907 = vrot.lane.b32.xlu0 %v1900, 96
  %v1908 = vpop.permute.xlu0 %1907
  %v1909 = vsel %vm104, %v1895, 0
  %v1911 = vsel %vm104, %v1900, 0
  %v1913 = vsel %vm104, %v1906, 0
  %v1915 = vsel %vm104, %v1908, 0
  %1917 = vmatprep.subr.mxu0 0.0
  %1918 = vmatpush1.xpose.msra.mxu0 0.0
  %1919 = vmatprep.subr.mxu0 0.0
  %1920 = vmatpush1.xpose.msra.mxu0 0.0
  %1921 = vmatprep.subr.mxu0 0.0
  %1922 = vmatpush1.xpose.msra.mxu0 0.0
  %1923 = vmatprep.subr.mxu0 0.0
  %1924 = vmatpush1.xpose.msra.mxu0 0.0
  %1925 = vmatprep.subr.mxu0 0.0
  %1926 = vmatpush1.xpose.msra.mxu0 0.0
  %1927 = vmatprep.subr.mxu0 0.0
  %1928 = vmatpush1.xpose.msra.mxu0 0.0
  %1929 = vmatprep.subr.mxu0 0.0
  %1930 = vmatpush1.xpose.msra.mxu0 0.0
  %1931 = vmatprep.subr.mxu0 0.0
  %1932 = vmatpush1.xpose.msra.mxu0 0.0
  %1933 = vmatprep.subr.mxu0 0.0
  %1934 = vmatpush1.xpose.msra.mxu0 0.0
  %1935 = vmatprep.subr.mxu0 0.0
  %1936 = vmatpush1.xpose.msra.mxu0 0.0
  %1937 = vmatprep.subr.mxu0 0.0
  %1938 = vmatpush1.xpose.msra.mxu0 0.0
  %1939 = vmatprep.subr.mxu0 0.0
  %1940 = vmatpush1.xpose.msra.mxu0 0.0
  %1941 = vmatprep.subr.mxu0 0.0
  %1942 = vmatpush1.xpose.msra.mxu0 0.0
  %1943 = vmatprep.subr.mxu0 0.0
  %1944 = vmatpush1.xpose.msra.mxu0 0.0
  %1945 = vmatprep.subr.mxu0 0.0
  %1946 = vmatpush1.xpose.msra.mxu0 %v1915
  %1947 = vmatprep.subr.mxu0 0.0
  %1948 = vmatpush1.xpose.msra.mxu0 %v1913
  %1949 = vmatprep.subr.mxu0 0.0
  %1950 = vmatpush2.xpose.msra.mxu0 0.0
  %1951 = vmatprep.subr.mxu0 0.0
  %1952 = vmatpush2.xpose.msra.mxu0 0.0
  %1953 = vmatprep.subr.mxu0 0.0
  %1954 = vmatpush2.xpose.msra.mxu0 0.0
  %1955 = vmatprep.subr.mxu0 0.0
  %1956 = vmatpush2.xpose.msra.mxu0 0.0
  %1957 = vmatprep.subr.mxu0 0.0
  %1958 = vmatpush2.xpose.msra.mxu0 0.0
  %1959 = vmatprep.subr.mxu0 0.0
  %1960 = vmatpush2.xpose.msra.mxu0 0.0
  %1961 = vmatprep.subr.mxu0 0.0
  %1962 = vmatpush2.xpose.msra.mxu0 0.0
  %1963 = vmatprep.subr.mxu0 0.0
  %1964 = vmatpush2.xpose.msra.mxu0 0.0
  %1965 = vmatprep.subr.mxu0 0.0
  %1966 = vmatpush2.xpose.msra.mxu0 0.0
  %1967 = vmatprep.subr.mxu0 0.0
  %1968 = vmatpush2.xpose.msra.mxu0 0.0
  %1969 = vmatprep.subr.mxu0 0.0
  %1970 = vmatpush2.xpose.msra.mxu0 0.0
  %1971 = vmatprep.subr.mxu0 0.0
  %1972 = vmatpush2.xpose.msra.mxu0 0.0
  %1973 = vmatprep.subr.mxu0 0.0
  %1974 = vmatpush2.xpose.msra.mxu0 0.0
  %1975 = vmatprep.subr.mxu0 0.0
  %1976 = vmatpush2.xpose.msra.mxu0 0.0
  %1977 = vmatprep.subr.mxu0 0.0
  %1978 = vmatpush2.xpose.msra.mxu0 0.0
  %1979 = vmatprep.subr.mxu0 0.0
  %1980 = vmatpush2.xpose.msra.mxu0 0.0
  %1981 = vmatprep.mubr.f32.mxu0 0.0
  %1982 = vmatmul.mubr.f32.gmra.mxu0 %v1909
  %v1983 = vpop.f32.mrf.mxu0
  %v1984 = vadd.f32 0.0, %v1983
  %v1985 = vpop.f32.mrf.mxu0
  %1986 = vmatprep.mubr.f32.mxu0 0.0
  %1987 = vmatmul.mubr.f32.gmra.mxu0 %v1911
  %v1988 = vpop.f32.mrf.mxu0
  %v1989 = vadd.f32 0.0, %v1988
  %v1990 = vpop.f32.mrf.mxu0
  %1991 = vdwg.mxu0
  %v1992 = vmul.f32 %v1984, 0.35355338
  %v1993 = vmul.f32 %v1989, 0.35355338
  %v1994 = vadd.f32 %v1992, %v268
  %v1995 = vadd.f32 %v1993, %v269
  %v1996 = vsel %vm474, %v1994, -inf
  %1997 = vmax.xlane.f32.xlu0 %v1996
  %v1998 = vpop.xlane.xlu0 %1997
  %v1999 = vsel %vm474, %v1995, -inf
  %2000 = vmax.xlane.f32.xlu0 %v1999
  %v2001 = vpop.xlane.xlu0 %2000
  %v2002 = vsub.f32 %v1994, %v1998
  %v2003 = vsub.f32 %v1995, %v2001
  %v2004 = vmul.f32 %v2002, 1.442695
  %v2005 = vpow.pop %v2004
  %v2006 = vmul.f32 %v2003, 1.442695
  %v2007 = vpow.pop %v2006
  %v2008 = vsel %vm474, %v2005, 0.0
  %2009 = vadd.xlane.f32.xlu0 %v2008
  %v2010 = vpop.xlane.xlu0 %2009
  %v2011 = vsel %vm474, %v2007, 0.0
  %2012 = vadd.xlane.f32.xlu0 %v2011
  %v2013 = vpop.xlane.xlu0 %2012
  %v2014 = vrcp.pop %v2010
  %v2015 = vrcp.pop %v2013
  %v2016 = vmul.f32 %v2005, %v2014
  %v2017 = vmul.f32 %v2007, %v2015
  %2018 = vrot.lane.b32.xlu0 %v1895, 64
  %v2019 = vpop.permute.xlu0 %2018
  %2020 = vrot.lane.b32.xlu0 %v1900, 64
  %v2021 = vpop.permute.xlu0 %2020
  %v2025 = vsel %vm474, %v2016, 0
  %v2028 = vsel %vm474, %v2017, 0
  %2030 = vmatprep.subr.mxu0 0.0
  %2031 = vmatpush1.msra.mxu0 0.0
  %2032 = vmatprep.subr.mxu0 0.0
  %2033 = vmatpush1.msra.mxu0 0.0
  %2034 = vmatprep.subr.mxu0 0.0
  %2035 = vmatpush1.msra.mxu0 0.0
  %2036 = vmatprep.subr.mxu0 0.0
  %2037 = vmatpush1.msra.mxu0 0.0
  %2038 = vmatprep.subr.mxu0 0.0
  %2039 = vmatpush1.msra.mxu0 0.0
  %2040 = vmatprep.subr.mxu0 0.0
  %2041 = vmatpush1.msra.mxu0 0.0
  %2042 = vmatprep.subr.mxu0 0.0
  %2043 = vmatpush1.msra.mxu0 0.0
  %2044 = vmatprep.subr.mxu0 0.0
  %2045 = vmatpush1.msra.mxu0 0.0
  %2046 = vmatprep.subr.mxu0 0.0
  %2047 = vmatpush1.msra.mxu0 0.0
  %2048 = vmatprep.subr.mxu0 0.0
  %2049 = vmatpush1.msra.mxu0 0.0
  %2050 = vmatprep.subr.mxu0 0.0
  %2051 = vmatpush1.msra.mxu0 0.0
  %2052 = vmatprep.subr.mxu0 0.0
  %2053 = vmatpush1.msra.mxu0 0.0
  %2054 = vmatprep.subr.mxu0 0.0
  %2055 = vmatpush1.msra.mxu0 0.0
  %2056 = vmatprep.subr.mxu0 0.0
  %2057 = vmatpush1.msra.mxu0 0.0
  %2058 = vmatprep.subr.mxu0 0.0
  %2059 = vmatpush1.msra.mxu0 %v2021
  %2060 = vmatprep.subr.mxu0 0.0
  %2061 = vmatpush1.msra.mxu0 %v2019
  %2062 = vmatprep.subr.mxu0 0.0
  %2063 = vmatpush2.msra.mxu0 0.0
  %2064 = vmatprep.subr.mxu0 0.0
  %2065 = vmatpush2.msra.mxu0 0.0
  %2066 = vmatprep.subr.mxu0 0.0
  %2067 = vmatpush2.msra.mxu0 0.0
  %2068 = vmatprep.subr.mxu0 0.0
  %2069 = vmatpush2.msra.mxu0 0.0
  %2070 = vmatprep.subr.mxu0 0.0
  %2071 = vmatpush2.msra.mxu0 0.0
  %2072 = vmatprep.subr.mxu0 0.0
  %2073 = vmatpush2.msra.mxu0 0.0
  %2074 = vmatprep.subr.mxu0 0.0
  %2075 = vmatpush2.msra.mxu0 0.0
  %2076 = vmatprep.subr.mxu0 0.0
  %2077 = vmatpush2.msra.mxu0 0.0
  %2078 = vmatprep.subr.mxu0 0.0
  %2079 = vmatpush2.msra.mxu0 0.0
  %2080 = vmatprep.subr.mxu0 0.0
  %2081 = vmatpush2.msra.mxu0 0.0
  %2082 = vmatprep.subr.mxu0 0.0
  %2083 = vmatpush2.msra.mxu0 0.0
  %2084 = vmatprep.subr.mxu0 0.0
  %2085 = vmatpush2.msra.mxu0 0.0
  %2086 = vmatprep.subr.mxu0 0.0
  %2087 = vmatpush2.msra.mxu0 0.0
  %2088 = vmatprep.subr.mxu0 0.0
  %2089 = vmatpush2.msra.mxu0 0.0
  %2090 = vmatprep.subr.mxu0 0.0
  %2091 = vmatpush2.msra.mxu0 0.0
  %2092 = vmatprep.subr.mxu0 0.0
  %2093 = vmatpush2.msra.mxu0 0.0
  %2094 = vmatprep.mubr.f32.mxu0 0.0
  %2095 = vmatmul.mubr.f32.gmra.mxu0 %v2025
  %v2096 = vpop.f32.mrf.mxu0
  %v2097 = vadd.f32 0.0, %v2096
  %v2098 = vpop.f32.mrf.mxu0
  %2099 = vmatprep.mubr.f32.mxu0 0.0
  %2100 = vmatmul.mubr.f32.gmra.mxu0 %v2028
  %v2101 = vpop.f32.mrf.mxu0
  %v2102 = vadd.f32 0.0, %v2101
  %v2103 = vpop.f32.mrf.mxu0
  %2104 = vdwg.mxu0
  %2105 = vrot.lane.b32.xlu0 %v1895, 120
  %v2106 = vpop.permute.xlu0 %2105
  %2107 = vrot.lane.b32.xlu0 %v1900, 120
  %v2108 = vpop.permute.xlu0 %2107
  %2109 = vrot.lane.b32.xlu0 %v1895, 88
  %v2110 = vpop.permute.xlu0 %2109
  %2111 = vrot.lane.b32.xlu0 %v1900, 88
  %v2112 = vpop.permute.xlu0 %2111
  %v2113 = vsel %vm104, %v2106, 0
  %v2115 = vsel %vm104, %v2108, 0
  %v2117 = vsel %vm104, %v2110, 0
  %v2119 = vsel %vm104, %v2112, 0
  %2121 = vmatprep.subr.mxu0 0.0
  %2122 = vmatpush1.xpose.msra.mxu0 0.0
  %2123 = vmatprep.subr.mxu0 0.0
  %2124 = vmatpush1.xpose.msra.mxu0 0.0
  %2125 = vmatprep.subr.mxu0 0.0
  %2126 = vmatpush1.xpose.msra.mxu0 0.0
  %2127 = vmatprep.subr.mxu0 0.0
  %2128 = vmatpush1.xpose.msra.mxu0 0.0
  %2129 = vmatprep.subr.mxu0 0.0
  %2130 = vmatpush1.xpose.msra.mxu0 0.0
  %2131 = vmatprep.subr.mxu0 0.0
  %2132 = vmatpush1.xpose.msra.mxu0 0.0
  %2133 = vmatprep.subr.mxu0 0.0
  %2134 = vmatpush1.xpose.msra.mxu0 0.0
  %2135 = vmatprep.subr.mxu0 0.0
  %2136 = vmatpush1.xpose.msra.mxu0 0.0
  %2137 = vmatprep.subr.mxu0 0.0
  %2138 = vmatpush1.xpose.msra.mxu0 0.0
  %2139 = vmatprep.subr.mxu0 0.0
  %2140 = vmatpush1.xpose.msra.mxu0 0.0
  %2141 = vmatprep.subr.mxu0 0.0
  %2142 = vmatpush1.xpose.msra.mxu0 0.0
  %2143 = vmatprep.subr.mxu0 0.0
  %2144 = vmatpush1.xpose.msra.mxu0 0.0
  %2145 = vmatprep.subr.mxu0 0.0
  %2146 = vmatpush1.xpose.msra.mxu0 0.0
  %2147 = vmatprep.subr.mxu0 0.0
  %2148 = vmatpush1.xpose.msra.mxu0 0.0
  %2149 = vmatprep.subr.mxu0 0.0
  %2150 = vmatpush1.xpose.msra.mxu0 %v2119
  %2151 = vmatprep.subr.mxu0 0.0
  %2152 = vmatpush1.xpose.msra.mxu0 %v2117
  %2153 = vmatprep.subr.mxu0 0.0
  %2154 = vmatpush2.xpose.msra.mxu0 0.0
  %2155 = vmatprep.subr.mxu0 0.0
  %2156 = vmatpush2.xpose.msra.mxu0 0.0
  %2157 = vmatprep.subr.mxu0 0.0
  %2158 = vmatpush2.xpose.msra.mxu0 0.0
  %2159 = vmatprep.subr.mxu0 0.0
  %2160 = vmatpush2.xpose.msra.mxu0 0.0
  %2161 = vmatprep.subr.mxu0 0.0
  %2162 = vmatpush2.xpose.msra.mxu0 0.0
  %2163 = vmatprep.subr.mxu0 0.0
  %2164 = vmatpush2.xpose.msra.mxu0 0.0
  %2165 = vmatprep.subr.mxu0 0.0
  %2166 = vmatpush2.xpose.msra.mxu0 0.0
  %2167 = vmatprep.subr.mxu0 0.0
  %2168 = vmatpush2.xpose.msra.mxu0 0.0
  %2169 = vmatprep.subr.mxu0 0.0
  %2170 = vmatpush2.xpose.msra.mxu0 0.0
  %2171 = vmatprep.subr.mxu0 0.0
  %2172 = vmatpush2.xpose.msra.mxu0 0.0
  %2173 = vmatprep.subr.mxu0 0.0
  %2174 = vmatpush2.xpose.msra.mxu0 0.0
  %2175 = vmatprep.subr.mxu0 0.0
  %2176 = vmatpush2.xpose.msra.mxu0 0.0
  %2177 = vmatprep.subr.mxu0 0.0
  %2178 = vmatpush2.xpose.msra.mxu0 0.0
  %2179 = vmatprep.subr.mxu0 0.0
  %2180 = vmatpush2.xpose.msra.mxu0 0.0
  %2181 = vmatprep.subr.mxu0 0.0
  %2182 = vmatpush2.xpose.msra.mxu0 0.0
  %2183 = vmatprep.subr.mxu0 0.0
  %2184 = vmatpush2.xpose.msra.mxu0 0.0
  %2185 = vmatprep.mubr.f32.mxu0 0.0
  %2186 = vmatmul.mubr.f32.gmra.mxu0 %v2113
  %v2187 = vpop.f32.mrf.mxu0
  %v2188 = vadd.f32 0.0, %v2187
  %v2189 = vpop.f32.mrf.mxu0
  %2190 = vmatprep.mubr.f32.mxu0 0.0
  %2191 = vmatmul.mubr.f32.gmra.mxu0 %v2115
  %v2192 = vpop.f32.mrf.mxu0
  %v2193 = vadd.f32 0.0, %v2192
  %v2194 = vpop.f32.mrf.mxu0
  %2195 = vdwg.mxu0
  %v2196 = vmul.f32 %v2188, 0.35355338
  %v2197 = vmul.f32 %v2193, 0.35355338
  %v2198 = vadd.f32 %v2196, %v268
  %v2199 = vadd.f32 %v2197, %v269
  %v2200 = vsel %vm474, %v2198, -inf
  %2201 = vmax.xlane.f32.xlu0 %v2200
  %v2202 = vpop.xlane.xlu0 %2201
  %v2203 = vsel %vm474, %v2199, -inf
  %2204 = vmax.xlane.f32.xlu0 %v2203
  %v2205 = vpop.xlane.xlu0 %2204
  %v2206 = vsub.f32 %v2198, %v2202
  %v2207 = vsub.f32 %v2199, %v2205
  %v2208 = vmul.f32 %v2206, 1.442695
  %v2209 = vpow.pop %v2208
  %v2210 = vmul.f32 %v2207, 1.442695
  %v2211 = vpow.pop %v2210
  %v2212 = vsel %vm474, %v2209, 0.0
  %2213 = vadd.xlane.f32.xlu0 %v2212
  %v2214 = vpop.xlane.xlu0 %2213
  %v2215 = vsel %vm474, %v2211, 0.0
  %2216 = vadd.xlane.f32.xlu0 %v2215
  %v2217 = vpop.xlane.xlu0 %2216
  %v2218 = vrcp.pop %v2214
  %v2219 = vrcp.pop %v2217
  %v2220 = vmul.f32 %v2209, %v2218
  %v2221 = vmul.f32 %v2211, %v2219
  %2222 = vrot.lane.b32.xlu0 %v1895, 56
  %v2223 = vpop.permute.xlu0 %2222
  %2224 = vrot.lane.b32.xlu0 %v1900, 56
  %v2225 = vpop.permute.xlu0 %2224
  %v2229 = vsel %vm474, %v2220, 0
  %v2232 = vsel %vm474, %v2221, 0
  %2234 = vmatprep.subr.mxu0 0.0
  %2235 = vmatpush1.msra.mxu0 0.0
  %2236 = vmatprep.subr.mxu0 0.0
  %2237 = vmatpush1.msra.mxu0 0.0
  %2238 = vmatprep.subr.mxu0 0.0
  %2239 = vmatpush1.msra.mxu0 0.0
  %2240 = vmatprep.subr.mxu0 0.0
  %2241 = vmatpush1.msra.mxu0 0.0
  %2242 = vmatprep.subr.mxu0 0.0
  %2243 = vmatpush1.msra.mxu0 0.0
  %2244 = vmatprep.subr.mxu0 0.0
  %2245 = vmatpush1.msra.mxu0 0.0
  %2246 = vmatprep.subr.mxu0 0.0
  %2247 = vmatpush1.msra.mxu0 0.0
  %2248 = vmatprep.subr.mxu0 0.0
  %2249 = vmatpush1.msra.mxu0 0.0
  %2250 = vmatprep.subr.mxu0 0.0
  %2251 = vmatpush1.msra.mxu0 0.0
  %2252 = vmatprep.subr.mxu0 0.0
  %2253 = vmatpush1.msra.mxu0 0.0
  %2254 = vmatprep.subr.mxu0 0.0
  %2255 = vmatpush1.msra.mxu0 0.0
  %2256 = vmatprep.subr.mxu0 0.0
  %2257 = vmatpush1.msra.mxu0 0.0
  %2258 = vmatprep.subr.mxu0 0.0
  %2259 = vmatpush1.msra.mxu0 0.0
  %2260 = vmatprep.subr.mxu0 0.0
  %2261 = vmatpush1.msra.mxu0 0.0
  %2262 = vmatprep.subr.mxu0 0.0
  %2263 = vmatpush1.msra.mxu0 %v2225
  %2264 = vmatprep.subr.mxu0 0.0
  %2265 = vmatpush1.msra.mxu0 %v2223
  %2266 = vmatprep.subr.mxu0 0.0
  %2267 = vmatpush2.msra.mxu0 0.0
  %2268 = vmatprep.subr.mxu0 0.0
  %2269 = vmatpush2.msra.mxu0 0.0
  %2270 = vmatprep.subr.mxu0 0.0
  %2271 = vmatpush2.msra.mxu0 0.0
  %2272 = vmatprep.subr.mxu0 0.0
  %2273 = vmatpush2.msra.mxu0 0.0
  %2274 = vmatprep.subr.mxu0 0.0
  %2275 = vmatpush2.msra.mxu0 0.0
  %2276 = vmatprep.subr.mxu0 0.0
  %2277 = vmatpush2.msra.mxu0 0.0
  %2278 = vmatprep.subr.mxu0 0.0
  %2279 = vmatpush2.msra.mxu0 0.0
  %2280 = vmatprep.subr.mxu0 0.0
  %2281 = vmatpush2.msra.mxu0 0.0
  %2282 = vmatprep.subr.mxu0 0.0
  %2283 = vmatpush2.msra.mxu0 0.0
  %2284 = vmatprep.subr.mxu0 0.0
  %2285 = vmatpush2.msra.mxu0 0.0
  %2286 = vmatprep.subr.mxu0 0.0
  %2287 = vmatpush2.msra.mxu0 0.0
  %2288 = vmatprep.subr.mxu0 0.0
  %2289 = vmatpush2.msra.mxu0 0.0
  %2290 = vmatprep.subr.mxu0 0.0
  %2291 = vmatpush2.msra.mxu0 0.0
  %2292 = vmatprep.subr.mxu0 0.0
  %2293 = vmatpush2.msra.mxu0 0.0
  %2294 = vmatprep.subr.mxu0 0.0
  %2295 = vmatpush2.msra.mxu0 0.0
  %2296 = vmatprep.subr.mxu0 0.0
  %2297 = vmatpush2.msra.mxu0 0.0
  %2298 = vmatprep.mubr.f32.mxu0 0.0
  %2299 = vmatmul.mubr.f32.gmra.mxu0 %v2229
  %v2300 = vpop.f32.mrf.mxu0
  %v2301 = vadd.f32 0.0, %v2300
  %v2302 = vpop.f32.mrf.mxu0
  %2303 = vmatprep.mubr.f32.mxu0 0.0
  %2304 = vmatmul.mubr.f32.gmra.mxu0 %v2232
  %v2305 = vpop.f32.mrf.mxu0
  %v2306 = vadd.f32 0.0, %v2305
  %v2307 = vpop.f32.mrf.mxu0
  %2308 = vdwg.mxu0
  %v2310 = vsel %vm104, %v2301, 0
  %v2313 = vsel %vm104, %v2306, 0
  %2315 = vmatprep.subr.mxu0 0.0
  %2316 = vmatpush1.msra.mxu0 0.0
  %2317 = vmatprep.subr.mxu0 0.0
  %2318 = vmatpush1.msra.mxu0 0.0
  %2319 = vmatprep.subr.mxu0 0.0
  %2320 = vmatpush1.msra.mxu0 0.0
  %2321 = vmatprep.subr.mxu0 0.0
  %2322 = vmatpush1.msra.mxu0 0.0
  %2323 = vmatprep.subr.mxu0 0.0
  %2324 = vmatpush1.msra.mxu0 0.0
  %2325 = vmatprep.subr.mxu0 0.0
  %2326 = vmatpush1.msra.mxu0 0.0
  %2327 = vmatprep.subr.mxu0 0.0
  %2328 = vmatpush1.msra.mxu0 0.0
  %2329 = vmatprep.subr.mxu0 0.0
  %2330 = vmatpush1.msra.mxu0 0.0
  %2331 = vmatprep.subr.mxu0 0.0
  %2332 = vmatpush1.msra.mxu0 0.0
  %2333 = vmatprep.subr.mxu0 0.0
  %2334 = vmatpush1.msra.mxu0 0.0
  %2335 = vmatprep.subr.mxu0 0.0
  %2336 = vmatpush1.msra.mxu0 0.0
  %2337 = vmatprep.subr.mxu0 0.0
  %2338 = vmatpush1.msra.mxu0 0.0
  %2339 = vmatprep.subr.mxu0 0.0
  %2340 = vmatpush1.msra.mxu0 0.0
  %2341 = vmatprep.subr.mxu0 0.0
  %2342 = vmatpush1.msra.mxu0 0.0
  %2343 = vmatprep.subr.mxu0 0.0
  %2344 = vmatpush1.msra.mxu0 0.0
  %2345 = vmatprep.subr.mxu0 0.0
  %2346 = vmatpush1.msra.mxu0 %v1795
  %2347 = vmatprep.subr.mxu0 0.0
  %2348 = vmatpush2.msra.mxu0 0.0
  %2349 = vmatprep.subr.mxu0 0.0
  %2350 = vmatpush2.msra.mxu0 0.0
  %2351 = vmatprep.subr.mxu0 0.0
  %2352 = vmatpush2.msra.mxu0 0.0
  %2353 = vmatprep.subr.mxu0 0.0
  %2354 = vmatpush2.msra.mxu0 0.0
  %2355 = vmatprep.subr.mxu0 0.0
  %2356 = vmatpush2.msra.mxu0 0.0
  %2357 = vmatprep.subr.mxu0 0.0
  %2358 = vmatpush2.msra.mxu0 0.0
  %2359 = vmatprep.subr.mxu0 0.0
  %2360 = vmatpush2.msra.mxu0 0.0
  %2361 = vmatprep.subr.mxu0 0.0
  %2362 = vmatpush2.msra.mxu0 0.0
  %2363 = vmatprep.subr.mxu0 0.0
  %2364 = vmatpush2.msra.mxu0 0.0
  %2365 = vmatprep.subr.mxu0 0.0
  %2366 = vmatpush2.msra.mxu0 0.0
  %2367 = vmatprep.subr.mxu0 0.0
  %2368 = vmatpush2.msra.mxu0 0.0
  %2369 = vmatprep.subr.mxu0 0.0
  %2370 = vmatpush2.msra.mxu0 0.0
  %2371 = vmatprep.subr.mxu0 0.0
  %2372 = vmatpush2.msra.mxu0 0.0
  %2373 = vmatprep.subr.mxu0 0.0
  %2374 = vmatpush2.msra.mxu0 0.0
  %2375 = vmatprep.subr.mxu0 0.0
  %2376 = vmatpush2.msra.mxu0 0.0
  %2377 = vmatprep.subr.mxu0 0.0
  %2378 = vmatpush2.msra.mxu0 0.0
  %2379 = vmatprep.mubr.f32.mxu0 0.0
  %2380 = vmatmul.mubr.f32.gmra.mxu0 %v2310
  %v2381 = vpop.f32.mrf.mxu0
  %v2382 = vadd.f32 0.0, %v2381
  %v2383 = vpop.f32.mrf.mxu0
  %2384 = vmatprep.mubr.f32.mxu0 0.0
  %2385 = vmatmul.mubr.f32.gmra.mxu0 %v2313
  %v2386 = vpop.f32.mrf.mxu0
  %v2387 = vadd.f32 0.0, %v2386
  %v2388 = vpop.f32.mrf.mxu0
  %2389 = vdwg.mxu0
  %v2391 = vsel %vm104, %v2097, 0
  %v2394 = vsel %vm104, %v2102, 0
  %2396 = vmatprep.subr.mxu0 0.0
  %2397 = vmatpush1.msra.mxu0 0.0
  %2398 = vmatprep.subr.mxu0 0.0
  %2399 = vmatpush1.msra.mxu0 0.0
  %2400 = vmatprep.subr.mxu0 0.0
  %2401 = vmatpush1.msra.mxu0 0.0
  %2402 = vmatprep.subr.mxu0 0.0
  %2403 = vmatpush1.msra.mxu0 0.0
  %2404 = vmatprep.subr.mxu0 0.0
  %2405 = vmatpush1.msra.mxu0 0.0
  %2406 = vmatprep.subr.mxu0 0.0
  %2407 = vmatpush1.msra.mxu0 0.0
  %2408 = vmatprep.subr.mxu0 0.0
  %2409 = vmatpush1.msra.mxu0 0.0
  %2410 = vmatprep.subr.mxu0 0.0
  %2411 = vmatpush1.msra.mxu0 0.0
  %2412 = vmatprep.subr.mxu0 0.0
  %2413 = vmatpush1.msra.mxu0 0.0
  %2414 = vmatprep.subr.mxu0 0.0
  %2415 = vmatpush1.msra.mxu0 0.0
  %2416 = vmatprep.subr.mxu0 0.0
  %2417 = vmatpush1.msra.mxu0 0.0
  %2418 = vmatprep.subr.mxu0 0.0
  %2419 = vmatpush1.msra.mxu0 0.0
  %2420 = vmatprep.subr.mxu0 0.0
  %2421 = vmatpush1.msra.mxu0 0.0
  %2422 = vmatprep.subr.mxu0 0.0
  %2423 = vmatpush1.msra.mxu0 0.0
  %2424 = vmatprep.subr.mxu0 0.0
  %2425 = vmatpush1.msra.mxu0 0.0
  %2426 = vmatprep.subr.mxu0 0.0
  %2427 = vmatpush1.msra.mxu0 %v1794
  %2428 = vmatprep.subr.mxu0 0.0
  %2429 = vmatpush2.msra.mxu0 0.0
  %2430 = vmatprep.subr.mxu0 0.0
  %2431 = vmatpush2.msra.mxu0 0.0
  %2432 = vmatprep.subr.mxu0 0.0
  %2433 = vmatpush2.msra.mxu0 0.0
  %2434 = vmatprep.subr.mxu0 0.0
  %2435 = vmatpush2.msra.mxu0 0.0
  %2436 = vmatprep.subr.mxu0 0.0
  %2437 = vmatpush2.msra.mxu0 0.0
  %2438 = vmatprep.subr.mxu0 0.0
  %2439 = vmatpush2.msra.mxu0 0.0
  %2440 = vmatprep.subr.mxu0 0.0
  %2441 = vmatpush2.msra.mxu0 0.0
  %2442 = vmatprep.subr.mxu0 0.0
  %2443 = vmatpush2.msra.mxu0 0.0
  %2444 = vmatprep.subr.mxu0 0.0
  %2445 = vmatpush2.msra.mxu0 0.0
  %2446 = vmatprep.subr.mxu0 0.0
  %2447 = vmatpush2.msra.mxu0 0.0
  %2448 = vmatprep.subr.mxu0 0.0
  %2449 = vmatpush2.msra.mxu0 0.0
  %2450 = vmatprep.subr.mxu0 0.0
  %2451 = vmatpush2.msra.mxu0 0.0
  %2452 = vmatprep.subr.mxu0 0.0
  %2453 = vmatpush2.msra.mxu0 0.0
  %2454 = vmatprep.subr.mxu0 0.0
  %2455 = vmatpush2.msra.mxu0 0.0
  %2456 = vmatprep.subr.mxu0 0.0
  %2457 = vmatpush2.msra.mxu0 0.0
  %2458 = vmatprep.subr.mxu0 0.0
  %2459 = vmatpush2.msra.mxu0 0.0
  %2460 = vmatprep.mubr.f32.mxu0 0.0
  %2461 = vmatmul.mubr.f32.gmra.mxu0 %v2391
  %v2462 = vpop.f32.mrf.mxu0
  %v2463 = vadd.f32 %v2382, %v2462
  %v2464 = vpop.f32.mrf.mxu0
  %2465 = vmatprep.mubr.f32.mxu0 0.0
  %2466 = vmatmul.mubr.f32.gmra.mxu0 %v2394
  %v2467 = vpop.f32.mrf.mxu0
  %v2468 = vadd.f32 %v2387, %v2467
  %v2469 = vpop.f32.mrf.mxu0
  %2470 = vdwg.mxu0
  %2471 = vrot.lane.b32.xlu0 %v1895, 112
  %v2472 = vpop.permute.xlu0 %2471
  %2473 = vrot.lane.b32.xlu0 %v1900, 112
  %v2474 = vpop.permute.xlu0 %2473
  %2475 = vrot.lane.b32.xlu0 %v1895, 80
  %v2476 = vpop.permute.xlu0 %2475
  %2477 = vrot.lane.b32.xlu0 %v1900, 80
  %v2478 = vpop.permute.xlu0 %2477
  %v2479 = vsel %vm104, %v2472, 0
  %v2481 = vsel %vm104, %v2474, 0
  %v2483 = vsel %vm104, %v2476, 0
  %v2485 = vsel %vm104, %v2478, 0
  %2487 = vmatprep.subr.mxu0 0.0
  %2488 = vmatpush1.xpose.msra.mxu0 0.0
  %2489 = vmatprep.subr.mxu0 0.0
  %2490 = vmatpush1.xpose.msra.mxu0 0.0
  %2491 = vmatprep.subr.mxu0 0.0
  %2492 = vmatpush1.xpose.msra.mxu0 0.0
  %2493 = vmatprep.subr.mxu0 0.0
  %2494 = vmatpush1.xpose.msra.mxu0 0.0
  %2495 = vmatprep.subr.mxu0 0.0
  %2496 = vmatpush1.xpose.msra.mxu0 0.0
  %2497 = vmatprep.subr.mxu0 0.0
  %2498 = vmatpush1.xpose.msra.mxu0 0.0
  %2499 = vmatprep.subr.mxu0 0.0
  %2500 = vmatpush1.xpose.msra.mxu0 0.0
  %2501 = vmatprep.subr.mxu0 0.0
  %2502 = vmatpush1.xpose.msra.mxu0 0.0
  %2503 = vmatprep.subr.mxu0 0.0
  %2504 = vmatpush1.xpose.msra.mxu0 0.0
  %2505 = vmatprep.subr.mxu0 0.0
  %2506 = vmatpush1.xpose.msra.mxu0 0.0
  %2507 = vmatprep.subr.mxu0 0.0
  %2508 = vmatpush1.xpose.msra.mxu0 0.0
  %2509 = vmatprep.subr.mxu0 0.0
  %2510 = vmatpush1.xpose.msra.mxu0 0.0
  %2511 = vmatprep.subr.mxu0 0.0
  %2512 = vmatpush1.xpose.msra.mxu0 0.0
  %2513 = vmatprep.subr.mxu0 0.0
  %2514 = vmatpush1.xpose.msra.mxu0 0.0
  %2515 = vmatprep.subr.mxu0 0.0
  %2516 = vmatpush1.xpose.msra.mxu0 %v2485
  %2517 = vmatprep.subr.mxu0 0.0
  %2518 = vmatpush1.xpose.msra.mxu0 %v2483
  %2519 = vmatprep.subr.mxu0 0.0
  %2520 = vmatpush2.xpose.msra.mxu0 0.0
  %2521 = vmatprep.subr.mxu0 0.0
  %2522 = vmatpush2.xpose.msra.mxu0 0.0
  %2523 = vmatprep.subr.mxu0 0.0
  %2524 = vmatpush2.xpose.msra.mxu0 0.0
  %2525 = vmatprep.subr.mxu0 0.0
  %2526 = vmatpush2.xpose.msra.mxu0 0.0
  %2527 = vmatprep.subr.mxu0 0.0
  %2528 = vmatpush2.xpose.msra.mxu0 0.0
  %2529 = vmatprep.subr.mxu0 0.0
  %2530 = vmatpush2.xpose.msra.mxu0 0.0
  %2531 = vmatprep.subr.mxu0 0.0
  %2532 = vmatpush2.xpose.msra.mxu0 0.0
  %2533 = vmatprep.subr.mxu0 0.0
  %2534 = vmatpush2.xpose.msra.mxu0 0.0
  %2535 = vmatprep.subr.mxu0 0.0
  %2536 = vmatpush2.xpose.msra.mxu0 0.0
  %2537 = vmatprep.subr.mxu0 0.0
  %2538 = vmatpush2.xpose.msra.mxu0 0.0
  %2539 = vmatprep.subr.mxu0 0.0
  %2540 = vmatpush2.xpose.msra.mxu0 0.0
  %2541 = vmatprep.subr.mxu0 0.0
  %2542 = vmatpush2.xpose.msra.mxu0 0.0
  %2543 = vmatprep.subr.mxu0 0.0
  %2544 = vmatpush2.xpose.msra.mxu0 0.0
  %2545 = vmatprep.subr.mxu0 0.0
  %2546 = vmatpush2.xpose.msra.mxu0 0.0
  %2547 = vmatprep.subr.mxu0 0.0
  %2548 = vmatpush2.xpose.msra.mxu0 0.0
  %2549 = vmatprep.subr.mxu0 0.0
  %2550 = vmatpush2.xpose.msra.mxu0 0.0
  %2551 = vmatprep.mubr.f32.mxu0 0.0
  %2552 = vmatmul.mubr.f32.gmra.mxu0 %v2479
  %v2553 = vpop.f32.mrf.mxu0
  %v2554 = vadd.f32 0.0, %v2553
  %v2555 = vpop.f32.mrf.mxu0
  %2556 = vmatprep.mubr.f32.mxu0 0.0
  %2557 = vmatmul.mubr.f32.gmra.mxu0 %v2481
  %v2558 = vpop.f32.mrf.mxu0
  %v2559 = vadd.f32 0.0, %v2558
  %v2560 = vpop.f32.mrf.mxu0
  %2561 = vdwg.mxu0
  %v2562 = vmul.f32 %v2554, 0.35355338
  %v2563 = vmul.f32 %v2559, 0.35355338
  %v2564 = vadd.f32 %v2562, %v268
  %v2565 = vadd.f32 %v2563, %v269
  %v2566 = vsel %vm474, %v2564, -inf
  %2567 = vmax.xlane.f32.xlu0 %v2566
  %v2568 = vpop.xlane.xlu0 %2567
  %v2569 = vsel %vm474, %v2565, -inf
  %2570 = vmax.xlane.f32.xlu0 %v2569
  %v2571 = vpop.xlane.xlu0 %2570
  %v2572 = vsub.f32 %v2564, %v2568
  %v2573 = vsub.f32 %v2565, %v2571
  %v2574 = vmul.f32 %v2572, 1.442695
  %v2575 = vpow.pop %v2574
  %v2576 = vmul.f32 %v2573, 1.442695
  %v2577 = vpow.pop %v2576
  %v2578 = vsel %vm474, %v2575, 0.0
  %2579 = vadd.xlane.f32.xlu0 %v2578
  %v2580 = vpop.xlane.xlu0 %2579
  %v2581 = vsel %vm474, %v2577, 0.0
  %2582 = vadd.xlane.f32.xlu0 %v2581
  %v2583 = vpop.xlane.xlu0 %2582
  %v2584 = vrcp.pop %v2580
  %v2585 = vrcp.pop %v2583
  %v2586 = vmul.f32 %v2575, %v2584
  %v2587 = vmul.f32 %v2577, %v2585
  %2588 = vrot.lane.b32.xlu0 %v1895, 48
  %v2589 = vpop.permute.xlu0 %2588
  %2590 = vrot.lane.b32.xlu0 %v1900, 48
  %v2591 = vpop.permute.xlu0 %2590
  %v2595 = vsel %vm474, %v2586, 0
  %v2598 = vsel %vm474, %v2587, 0
  %2600 = vmatprep.subr.mxu0 0.0
  %2601 = vmatpush1.msra.mxu0 0.0
  %2602 = vmatprep.subr.mxu0 0.0
  %2603 = vmatpush1.msra.mxu0 0.0
  %2604 = vmatprep.subr.mxu0 0.0
  %2605 = vmatpush1.msra.mxu0 0.0
  %2606 = vmatprep.subr.mxu0 0.0
  %2607 = vmatpush1.msra.mxu0 0.0
  %2608 = vmatprep.subr.mxu0 0.0
  %2609 = vmatpush1.msra.mxu0 0.0
  %2610 = vmatprep.subr.mxu0 0.0
  %2611 = vmatpush1.msra.mxu0 0.0
  %2612 = vmatprep.subr.mxu0 0.0
  %2613 = vmatpush1.msra.mxu0 0.0
  %2614 = vmatprep.subr.mxu0 0.0
  %2615 = vmatpush1.msra.mxu0 0.0
  %2616 = vmatprep.subr.mxu0 0.0
  %2617 = vmatpush1.msra.mxu0 0.0
  %2618 = vmatprep.subr.mxu0 0.0
  %2619 = vmatpush1.msra.mxu0 0.0
  %2620 = vmatprep.subr.mxu0 0.0
  %2621 = vmatpush1.msra.mxu0 0.0
  %2622 = vmatprep.subr.mxu0 0.0
  %2623 = vmatpush1.msra.mxu0 0.0
  %2624 = vmatprep.subr.mxu0 0.0
  %2625 = vmatpush1.msra.mxu0 0.0
  %2626 = vmatprep.subr.mxu0 0.0
  %2627 = vmatpush1.msra.mxu0 0.0
  %2628 = vmatprep.subr.mxu0 0.0
  %2629 = vmatpush1.msra.mxu0 %v2591
  %2630 = vmatprep.subr.mxu0 0.0
  %2631 = vmatpush1.msra.mxu0 %v2589
  %2632 = vmatprep.subr.mxu0 0.0
  %2633 = vmatpush2.msra.mxu0 0.0
  %2634 = vmatprep.subr.mxu0 0.0
  %2635 = vmatpush2.msra.mxu0 0.0
  %2636 = vmatprep.subr.mxu0 0.0
  %2637 = vmatpush2.msra.mxu0 0.0
  %2638 = vmatprep.subr.mxu0 0.0
  %2639 = vmatpush2.msra.mxu0 0.0
  %2640 = vmatprep.subr.mxu0 0.0
  %2641 = vmatpush2.msra.mxu0 0.0
  %2642 = vmatprep.subr.mxu0 0.0
  %2643 = vmatpush2.msra.mxu0 0.0
  %2644 = vmatprep.subr.mxu0 0.0
  %2645 = vmatpush2.msra.mxu0 0.0
  %2646 = vmatprep.subr.mxu0 0.0
  %2647 = vmatpush2.msra.mxu0 0.0
  %2648 = vmatprep.subr.mxu0 0.0
  %2649 = vmatpush2.msra.mxu0 0.0
  %2650 = vmatprep.subr.mxu0 0.0
  %2651 = vmatpush2.msra.mxu0 0.0
  %2652 = vmatprep.subr.mxu0 0.0
  %2653 = vmatpush2.msra.mxu0 0.0
  %2654 = vmatprep.subr.mxu0 0.0
  %2655 = vmatpush2.msra.mxu0 0.0
  %2656 = vmatprep.subr.mxu0 0.0
  %2657 = vmatpush2.msra.mxu0 0.0
  %2658 = vmatprep.subr.mxu0 0.0
  %2659 = vmatpush2.msra.mxu0 0.0
  %2660 = vmatprep.subr.mxu0 0.0
  %2661 = vmatpush2.msra.mxu0 0.0
  %2662 = vmatprep.subr.mxu0 0.0
  %2663 = vmatpush2.msra.mxu0 0.0
  %2664 = vmatprep.mubr.f32.mxu0 0.0
  %2665 = vmatmul.mubr.f32.gmra.mxu0 %v2595
  %v2666 = vpop.f32.mrf.mxu0
  %v2667 = vadd.f32 0.0, %v2666
  %v2668 = vpop.f32.mrf.mxu0
  %2669 = vmatprep.mubr.f32.mxu0 0.0
  %2670 = vmatmul.mubr.f32.gmra.mxu0 %v2598
  %v2671 = vpop.f32.mrf.mxu0
  %v2672 = vadd.f32 0.0, %v2671
  %v2673 = vpop.f32.mrf.mxu0
  %2674 = vdwg.mxu0
  %v2676 = vsel %vm104, %v2667, 0
  %v2679 = vsel %vm104, %v2672, 0
  %2681 = vmatprep.subr.mxu0 0.0
  %2682 = vmatpush1.msra.mxu0 0.0
  %2683 = vmatprep.subr.mxu0 0.0
  %2684 = vmatpush1.msra.mxu0 0.0
  %2685 = vmatprep.subr.mxu0 0.0
  %2686 = vmatpush1.msra.mxu0 0.0
  %2687 = vmatprep.subr.mxu0 0.0
  %2688 = vmatpush1.msra.mxu0 0.0
  %2689 = vmatprep.subr.mxu0 0.0
  %2690 = vmatpush1.msra.mxu0 0.0
  %2691 = vmatprep.subr.mxu0 0.0
  %2692 = vmatpush1.msra.mxu0 0.0
  %2693 = vmatprep.subr.mxu0 0.0
  %2694 = vmatpush1.msra.mxu0 0.0
  %2695 = vmatprep.subr.mxu0 0.0
  %2696 = vmatpush1.msra.mxu0 0.0
  %2697 = vmatprep.subr.mxu0 0.0
  %2698 = vmatpush1.msra.mxu0 0.0
  %2699 = vmatprep.subr.mxu0 0.0
  %2700 = vmatpush1.msra.mxu0 0.0
  %2701 = vmatprep.subr.mxu0 0.0
  %2702 = vmatpush1.msra.mxu0 0.0
  %2703 = vmatprep.subr.mxu0 0.0
  %2704 = vmatpush1.msra.mxu0 0.0
  %2705 = vmatprep.subr.mxu0 0.0
  %2706 = vmatpush1.msra.mxu0 0.0
  %2707 = vmatprep.subr.mxu0 0.0
  %2708 = vmatpush1.msra.mxu0 0.0
  %2709 = vmatprep.subr.mxu0 0.0
  %2710 = vmatpush1.msra.mxu0 0.0
  %2711 = vmatprep.subr.mxu0 0.0
  %2712 = vmatpush1.msra.mxu0 %v1796
  %2713 = vmatprep.subr.mxu0 0.0
  %2714 = vmatpush2.msra.mxu0 0.0
  %2715 = vmatprep.subr.mxu0 0.0
  %2716 = vmatpush2.msra.mxu0 0.0
  %2717 = vmatprep.subr.mxu0 0.0
  %2718 = vmatpush2.msra.mxu0 0.0
  %2719 = vmatprep.subr.mxu0 0.0
  %2720 = vmatpush2.msra.mxu0 0.0
  %2721 = vmatprep.subr.mxu0 0.0
  %2722 = vmatpush2.msra.mxu0 0.0
  %2723 = vmatprep.subr.mxu0 0.0
  %2724 = vmatpush2.msra.mxu0 0.0
  %2725 = vmatprep.subr.mxu0 0.0
  %2726 = vmatpush2.msra.mxu0 0.0
  %2727 = vmatprep.subr.mxu0 0.0
  %2728 = vmatpush2.msra.mxu0 0.0
  %2729 = vmatprep.subr.mxu0 0.0
  %2730 = vmatpush2.msra.mxu0 0.0
  %2731 = vmatprep.subr.mxu0 0.0
  %2732 = vmatpush2.msra.mxu0 0.0
  %2733 = vmatprep.subr.mxu0 0.0
  %2734 = vmatpush2.msra.mxu0 0.0
  %2735 = vmatprep.subr.mxu0 0.0
  %2736 = vmatpush2.msra.mxu0 0.0
  %2737 = vmatprep.subr.mxu0 0.0
  %2738 = vmatpush2.msra.mxu0 0.0
  %2739 = vmatprep.subr.mxu0 0.0
  %2740 = vmatpush2.msra.mxu0 0.0
  %2741 = vmatprep.subr.mxu0 0.0
  %2742 = vmatpush2.msra.mxu0 0.0
  %2743 = vmatprep.subr.mxu0 0.0
  %2744 = vmatpush2.msra.mxu0 0.0
  %2745 = vmatprep.mubr.f32.mxu0 0.0
  %2746 = vmatmul.mubr.f32.gmra.mxu0 %v2676
  %v2747 = vpop.f32.mrf.mxu0
  %v2748 = vadd.f32 0.0, %v2747
  %v2749 = vpop.f32.mrf.mxu0
  %2750 = vmatprep.mubr.f32.mxu0 0.0
  %2751 = vmatmul.mubr.f32.gmra.mxu0 %v2679
  %v2752 = vpop.f32.mrf.mxu0
  %v2753 = vadd.f32 0.0, %v2752
  %v2754 = vpop.f32.mrf.mxu0
  %2755 = vdwg.mxu0
  %v2756 = vadd.f32 %v2463, %v2748
  %v2757 = vadd.f32 %v2468, %v2753
  %2758 = vrot.lane.b32.xlu0 %v1895, 104
  %v2759 = vpop.permute.xlu0 %2758
  %2760 = vrot.lane.b32.xlu0 %v1900, 104
  %v2761 = vpop.permute.xlu0 %2760
  %2762 = vrot.lane.b32.xlu0 %v1895, 72
  %v2763 = vpop.permute.xlu0 %2762
  %2764 = vrot.lane.b32.xlu0 %v1900, 72
  %v2765 = vpop.permute.xlu0 %2764
  %v2766 = vsel %vm104, %v2759, 0
  %v2768 = vsel %vm104, %v2761, 0
  %v2770 = vsel %vm104, %v2763, 0
  %v2772 = vsel %vm104, %v2765, 0
  %2774 = vmatprep.subr.mxu0 0.0
  %2775 = vmatpush1.xpose.msra.mxu0 0.0
  %2776 = vmatprep.subr.mxu0 0.0
  %2777 = vmatpush1.xpose.msra.mxu0 0.0
  %2778 = vmatprep.subr.mxu0 0.0
  %2779 = vmatpush1.xpose.msra.mxu0 0.0
  %2780 = vmatprep.subr.mxu0 0.0
  %2781 = vmatpush1.xpose.msra.mxu0 0.0
  %2782 = vmatprep.subr.mxu0 0.0
  %2783 = vmatpush1.xpose.msra.mxu0 0.0
  %2784 = vmatprep.subr.mxu0 0.0
  %2785 = vmatpush1.xpose.msra.mxu0 0.0
  %2786 = vmatprep.subr.mxu0 0.0
  %2787 = vmatpush1.xpose.msra.mxu0 0.0
  %2788 = vmatprep.subr.mxu0 0.0
  %2789 = vmatpush1.xpose.msra.mxu0 0.0
  %2790 = vmatprep.subr.mxu0 0.0
  %2791 = vmatpush1.xpose.msra.mxu0 0.0
  %2792 = vmatprep.subr.mxu0 0.0
  %2793 = vmatpush1.xpose.msra.mxu0 0.0
  %2794 = vmatprep.subr.mxu0 0.0
  %2795 = vmatpush1.xpose.msra.mxu0 0.0
  %2796 = vmatprep.subr.mxu0 0.0
  %2797 = vmatpush1.xpose.msra.mxu0 0.0
  %2798 = vmatprep.subr.mxu0 0.0
  %2799 = vmatpush1.xpose.msra.mxu0 0.0
  %2800 = vmatprep.subr.mxu0 0.0
  %2801 = vmatpush1.xpose.msra.mxu0 0.0
  %2802 = vmatprep.subr.mxu0 0.0
  %2803 = vmatpush1.xpose.msra.mxu0 %v2772
  %2804 = vmatprep.subr.mxu0 0.0
  %2805 = vmatpush1.xpose.msra.mxu0 %v2770
  %2806 = vmatprep.subr.mxu0 0.0
  %2807 = vmatpush2.xpose.msra.mxu0 0.0
  %2808 = vmatprep.subr.mxu0 0.0
  %2809 = vmatpush2.xpose.msra.mxu0 0.0
  %2810 = vmatprep.subr.mxu0 0.0
  %2811 = vmatpush2.xpose.msra.mxu0 0.0
  %2812 = vmatprep.subr.mxu0 0.0
  %2813 = vmatpush2.xpose.msra.mxu0 0.0
  %2814 = vmatprep.subr.mxu0 0.0
  %2815 = vmatpush2.xpose.msra.mxu0 0.0
  %2816 = vmatprep.subr.mxu0 0.0
  %2817 = vmatpush2.xpose.msra.mxu0 0.0
  %2818 = vmatprep.subr.mxu0 0.0
  %2819 = vmatpush2.xpose.msra.mxu0 0.0
  %2820 = vmatprep.subr.mxu0 0.0
  %2821 = vmatpush2.xpose.msra.mxu0 0.0
  %2822 = vmatprep.subr.mxu0 0.0
  %2823 = vmatpush2.xpose.msra.mxu0 0.0
  %2824 = vmatprep.subr.mxu0 0.0
  %2825 = vmatpush2.xpose.msra.mxu0 0.0
  %2826 = vmatprep.subr.mxu0 0.0
  %2827 = vmatpush2.xpose.msra.mxu0 0.0
  %2828 = vmatprep.subr.mxu0 0.0
  %2829 = vmatpush2.xpose.msra.mxu0 0.0
  %2830 = vmatprep.subr.mxu0 0.0
  %2831 = vmatpush2.xpose.msra.mxu0 0.0
  %2832 = vmatprep.subr.mxu0 0.0
  %2833 = vmatpush2.xpose.msra.mxu0 0.0
  %2834 = vmatprep.subr.mxu0 0.0
  %2835 = vmatpush2.xpose.msra.mxu0 0.0
  %2836 = vmatprep.subr.mxu0 0.0
  %2837 = vmatpush2.xpose.msra.mxu0 0.0
  %2838 = vmatprep.mubr.f32.mxu0 0.0
  %2839 = vmatmul.mubr.f32.gmra.mxu0 %v2766
  %v2840 = vpop.f32.mrf.mxu0
  %v2841 = vadd.f32 0.0, %v2840
  %v2842 = vpop.f32.mrf.mxu0
  %2843 = vmatprep.mubr.f32.mxu0 0.0
  %2844 = vmatmul.mubr.f32.gmra.mxu0 %v2768
  %v2845 = vpop.f32.mrf.mxu0
  %v2846 = vadd.f32 0.0, %v2845
  %v2847 = vpop.f32.mrf.mxu0
  %2848 = vdwg.mxu0
  %v2849 = vmul.f32 %v2841, 0.35355338
  %v2850 = vmul.f32 %v2846, 0.35355338
  %v2851 = vadd.f32 %v2849, %v268
  %v2852 = vadd.f32 %v2850, %v269
  %v2853 = vsel %vm474, %v2851, -inf
  %2854 = vmax.xlane.f32.xlu0 %v2853
  %v2855 = vpop.xlane.xlu0 %2854
  %v2856 = vsel %vm474, %v2852, -inf
  %2857 = vmax.xlane.f32.xlu0 %v2856
  %v2858 = vpop.xlane.xlu0 %2857
  %v2859 = vsub.f32 %v2851, %v2855
  %v2860 = vsub.f32 %v2852, %v2858
  %v2861 = vmul.f32 %v2859, 1.442695
  %v2862 = vpow.pop %v2861
  %v2863 = vmul.f32 %v2860, 1.442695
  %v2864 = vpow.pop %v2863
  %v2865 = vsel %vm474, %v2862, 0.0
  %2866 = vadd.xlane.f32.xlu0 %v2865
  %v2867 = vpop.xlane.xlu0 %2866
  %v2868 = vsel %vm474, %v2864, 0.0
  %2869 = vadd.xlane.f32.xlu0 %v2868
  %v2870 = vpop.xlane.xlu0 %2869
  %v2871 = vrcp.pop %v2867
  %v2872 = vrcp.pop %v2870
  %v2873 = vmul.f32 %v2862, %v2871
  %v2874 = vmul.f32 %v2864, %v2872
  %2875 = vrot.lane.b32.xlu0 %v1895, 40
  %v2876 = vpop.permute.xlu0 %2875
  %2877 = vrot.lane.b32.xlu0 %v1900, 40
  %v2878 = vpop.permute.xlu0 %2877
  %v2882 = vsel %vm474, %v2873, 0
  %v2885 = vsel %vm474, %v2874, 0
  %2887 = vmatprep.subr.mxu0 0.0
  %2888 = vmatpush1.msra.mxu0 0.0
  %2889 = vmatprep.subr.mxu0 0.0
  %2890 = vmatpush1.msra.mxu0 0.0
  %2891 = vmatprep.subr.mxu0 0.0
  %2892 = vmatpush1.msra.mxu0 0.0
  %2893 = vmatprep.subr.mxu0 0.0
  %2894 = vmatpush1.msra.mxu0 0.0
  %2895 = vmatprep.subr.mxu0 0.0
  %2896 = vmatpush1.msra.mxu0 0.0
  %2897 = vmatprep.subr.mxu0 0.0
  %2898 = vmatpush1.msra.mxu0 0.0
  %2899 = vmatprep.subr.mxu0 0.0
  %2900 = vmatpush1.msra.mxu0 0.0
  %2901 = vmatprep.subr.mxu0 0.0
  %2902 = vmatpush1.msra.mxu0 0.0
  %2903 = vmatprep.subr.mxu0 0.0
  %2904 = vmatpush1.msra.mxu0 0.0
  %2905 = vmatprep.subr.mxu0 0.0
  %2906 = vmatpush1.msra.mxu0 0.0
  %2907 = vmatprep.subr.mxu0 0.0
  %2908 = vmatpush1.msra.mxu0 0.0
  %2909 = vmatprep.subr.mxu0 0.0
  %2910 = vmatpush1.msra.mxu0 0.0
  %2911 = vmatprep.subr.mxu0 0.0
  %2912 = vmatpush1.msra.mxu0 0.0
  %2913 = vmatprep.subr.mxu0 0.0
  %2914 = vmatpush1.msra.mxu0 0.0
  %2915 = vmatprep.subr.mxu0 0.0
  %2916 = vmatpush1.msra.mxu0 %v2878
  %2917 = vmatprep.subr.mxu0 0.0
  %2918 = vmatpush1.msra.mxu0 %v2876
  %2919 = vmatprep.subr.mxu0 0.0
  %2920 = vmatpush2.msra.mxu0 0.0
  %2921 = vmatprep.subr.mxu0 0.0
  %2922 = vmatpush2.msra.mxu0 0.0
  %2923 = vmatprep.subr.mxu0 0.0
  %2924 = vmatpush2.msra.mxu0 0.0
  %2925 = vmatprep.subr.mxu0 0.0
  %2926 = vmatpush2.msra.mxu0 0.0
  %2927 = vmatprep.subr.mxu0 0.0
  %2928 = vmatpush2.msra.mxu0 0.0
  %2929 = vmatprep.subr.mxu0 0.0
  %2930 = vmatpush2.msra.mxu0 0.0
  %2931 = vmatprep.subr.mxu0 0.0
  %2932 = vmatpush2.msra.mxu0 0.0
  %2933 = vmatprep.subr.mxu0 0.0
  %2934 = vmatpush2.msra.mxu0 0.0
  %2935 = vmatprep.subr.mxu0 0.0
  %2936 = vmatpush2.msra.mxu0 0.0
  %2937 = vmatprep.subr.mxu0 0.0
  %2938 = vmatpush2.msra.mxu0 0.0
  %2939 = vmatprep.subr.mxu0 0.0
  %2940 = vmatpush2.msra.mxu0 0.0
  %2941 = vmatprep.subr.mxu0 0.0
  %2942 = vmatpush2.msra.mxu0 0.0
  %2943 = vmatprep.subr.mxu0 0.0
  %2944 = vmatpush2.msra.mxu0 0.0
  %2945 = vmatprep.subr.mxu0 0.0
  %2946 = vmatpush2.msra.mxu0 0.0
  %2947 = vmatprep.subr.mxu0 0.0
  %2948 = vmatpush2.msra.mxu0 0.0
  %2949 = vmatprep.subr.mxu0 0.0
  %2950 = vmatpush2.msra.mxu0 0.0
  %2951 = vmatprep.mubr.f32.mxu0 0.0
  %2952 = vmatmul.mubr.f32.gmra.mxu0 %v2882
  %v2953 = vpop.f32.mrf.mxu0
  %v2954 = vadd.f32 0.0, %v2953
  %v2955 = vpop.f32.mrf.mxu0
  %2956 = vmatprep.mubr.f32.mxu0 0.0
  %2957 = vmatmul.mubr.f32.gmra.mxu0 %v2885
  %v2958 = vpop.f32.mrf.mxu0
  %v2959 = vadd.f32 0.0, %v2958
  %v2960 = vpop.f32.mrf.mxu0
  %2961 = vdwg.mxu0
  %v2963 = vsel %vm104, %v2954, 0
  %v2966 = vsel %vm104, %v2959, 0
  %2968 = vmatprep.subr.mxu0 0.0
  %2969 = vmatpush1.msra.mxu0 0.0
  %2970 = vmatprep.subr.mxu0 0.0
  %2971 = vmatpush1.msra.mxu0 0.0
  %2972 = vmatprep.subr.mxu0 0.0
  %2973 = vmatpush1.msra.mxu0 0.0
  %2974 = vmatprep.subr.mxu0 0.0
  %2975 = vmatpush1.msra.mxu0 0.0
  %2976 = vmatprep.subr.mxu0 0.0
  %2977 = vmatpush1.msra.mxu0 0.0
  %2978 = vmatprep.subr.mxu0 0.0
  %2979 = vmatpush1.msra.mxu0 0.0
  %2980 = vmatprep.subr.mxu0 0.0
  %2981 = vmatpush1.msra.mxu0 0.0
  %2982 = vmatprep.subr.mxu0 0.0
  %2983 = vmatpush1.msra.mxu0 0.0
  %2984 = vmatprep.subr.mxu0 0.0
  %2985 = vmatpush1.msra.mxu0 0.0
  %2986 = vmatprep.subr.mxu0 0.0
  %2987 = vmatpush1.msra.mxu0 0.0
  %2988 = vmatprep.subr.mxu0 0.0
  %2989 = vmatpush1.msra.mxu0 0.0
  %2990 = vmatprep.subr.mxu0 0.0
  %2991 = vmatpush1.msra.mxu0 0.0
  %2992 = vmatprep.subr.mxu0 0.0
  %2993 = vmatpush1.msra.mxu0 0.0
  %2994 = vmatprep.subr.mxu0 0.0
  %2995 = vmatpush1.msra.mxu0 0.0
  %2996 = vmatprep.subr.mxu0 0.0
  %2997 = vmatpush1.msra.mxu0 0.0
  %2998 = vmatprep.subr.mxu0 0.0
  %2999 = vmatpush1.msra.mxu0 %v1797
  %3000 = vmatprep.subr.mxu0 0.0
  %3001 = vmatpush2.msra.mxu0 0.0
  %3002 = vmatprep.subr.mxu0 0.0
  %3003 = vmatpush2.msra.mxu0 0.0
  %3004 = vmatprep.subr.mxu0 0.0
  %3005 = vmatpush2.msra.mxu0 0.0
  %3006 = vmatprep.subr.mxu0 0.0
  %3007 = vmatpush2.msra.mxu0 0.0
  %3008 = vmatprep.subr.mxu0 0.0
  %3009 = vmatpush2.msra.mxu0 0.0
  %3010 = vmatprep.subr.mxu0 0.0
  %3011 = vmatpush2.msra.mxu0 0.0
  %3012 = vmatprep.subr.mxu0 0.0
  %3013 = vmatpush2.msra.mxu0 0.0
  %3014 = vmatprep.subr.mxu0 0.0
  %3015 = vmatpush2.msra.mxu0 0.0
  %3016 = vmatprep.subr.mxu0 0.0
  %3017 = vmatpush2.msra.mxu0 0.0
  %3018 = vmatprep.subr.mxu0 0.0
  %3019 = vmatpush2.msra.mxu0 0.0
  %3020 = vmatprep.subr.mxu0 0.0
  %3021 = vmatpush2.msra.mxu0 0.0
  %3022 = vmatprep.subr.mxu0 0.0
  %3023 = vmatpush2.msra.mxu0 0.0
  %3024 = vmatprep.subr.mxu0 0.0
  %3025 = vmatpush2.msra.mxu0 0.0
  %3026 = vmatprep.subr.mxu0 0.0
  %3027 = vmatpush2.msra.mxu0 0.0
  %3028 = vmatprep.subr.mxu0 0.0
  %3029 = vmatpush2.msra.mxu0 0.0
  %3030 = vmatprep.subr.mxu0 0.0
  %3031 = vmatpush2.msra.mxu0 0.0
  %3032 = vmatprep.mubr.f32.mxu0 0.0
  %3033 = vmatmul.mubr.f32.gmra.mxu0 %v2963
  %v3034 = vpop.f32.mrf.mxu0
  %v3035 = vadd.f32 0.0, %v3034
  %v3036 = vpop.f32.mrf.mxu0
  %3037 = vmatprep.mubr.f32.mxu0 0.0
  %3038 = vmatmul.mubr.f32.gmra.mxu0 %v2966
  %v3039 = vpop.f32.mrf.mxu0
  %v3040 = vadd.f32 0.0, %v3039
  %v3041 = vpop.f32.mrf.mxu0
  %3042 = vdwg.mxu0
  %v3043 = vadd.f32 %v2756, %v3035
  %v3044 = vadd.f32 %v2757, %v3040
  %v3045 = vlaneseq
  %v3046 = vshrl.u32 %v3045, 7
  %v3047 = vsub.s32 0, %v3046
  %v3048 = vrot.slane %v1815, %v3047
  %v3049 = vadd.f32 %v3043, %v3048
  %v3050 = vadd.f32 %v3044, %v3048
  %v3051 = vadd.f32 %v1784, %v3049
  %v3052 = vadd.f32 %v1785, %v3050
  %v3053 = vsel %vm299, %v3051, 0.0
  %3054 = vadd.xlane.f32.xlu0 %v3053
  %v3055 = vpop.xlane.xlu0 %3054
  %v3056 = vsel %vm299, %v3052, 0.0
  %3057 = vadd.xlane.f32.xlu0 %v3056
  %v3058 = vpop.xlane.xlu0 %3057
  %v3059 = vmul.f32 %v3055, %v1538
  %v3060 = vmul.f32 %v3058, %v1538
  %v3061 = vsub.f32 %v3051, %v3059
  %v3062 = vsub.f32 %v3052, %v3060
  %v3063 = vmul.f32 %v3061, %v3061
  %v3064 = vmul.f32 %v3062, %v3062
  %v3065 = vsel %vm299, %v3063, 0.0
  %3066 = vadd.xlane.f32.xlu0 %v3065
  %v3067 = vpop.xlane.xlu0 %3066
  %v3068 = vsel %vm299, %v3064, 0.0
  %3069 = vadd.xlane.f32.xlu0 %v3068
  %v3070 = vpop.xlane.xlu0 %3069
  %v3071 = vmul.f32 %v3067, %v1538
  %v3072 = vmul.f32 %v3070, %v1538
  %v3073 = vadd.f32 %v3071, 1e-05
  %v3074 = vadd.f32 %v3072, 1e-05
  %v3075 = vrsqrt.pop %v3073
  %v3076 = vrsqrt.pop %v3074
  %v3077 = vmul.f32 %v3061, %v3075
  %v3078 = vmul.f32 %v3062, %v3076
  %v3079 = vlaneseq
  %v3080 = vshrl.u32 %v3079, 7
  %v3081 = vsub.s32 1, %v3080
  %v3082 = vrot.slane %v1815, %v3081
  %v3083 = vmul.f32 %v3077, %v3082
  %v3084 = vmul.f32 %v3078, %v3082
  %v3085 = vlaneseq
  %v3086 = vshrl.u32 %v3085, 7
  %v3087 = vsub.s32 2, %v3086
  %v3088 = vrot.slane %v1815, %v3087
  %v3089 = vadd.f32 %v3083, %v3088
  %v3090 = vadd.f32 %v3084, %v3088
  %v3092 = vlaneseq
  %v3093 = vshrl.u32 %v3092, 7
  %v3094 = vsub.s32 0, %v3093
  %v3095 = vrot.slane %v1804, %v3094
  %v3098 = vsel %vm299, %v3089, 0
  %v3101 = vsel %vm299, %v3090, 0
  %3103 = vmatprep.subr.mxu0 0.0
  %3104 = vmatpush1.msra.mxu0 0.0
  %3105 = vmatprep.subr.mxu0 0.0
  %3106 = vmatpush1.msra.mxu0 0.0
  %3107 = vmatprep.subr.mxu0 0.0
  %3108 = vmatpush1.msra.mxu0 0.0
  %3109 = vmatprep.subr.mxu0 0.0
  %3110 = vmatpush1.msra.mxu0 0.0
  %3111 = vmatprep.subr.mxu0 0.0
  %3112 = vmatpush1.msra.mxu0 0.0
  %3113 = vmatprep.subr.mxu0 0.0
  %3114 = vmatpush1.msra.mxu0 0.0
  %3115 = vmatprep.subr.mxu0 0.0
  %3116 = vmatpush1.msra.mxu0 0.0
  %3117 = vmatprep.subr.mxu0 0.0
  %3118 = vmatpush1.msra.mxu0 0.0
  %3119 = vmatprep.subr.mxu0 0.0
  %3120 = vmatpush1.msra.mxu0 0.0
  %3121 = vmatprep.subr.mxu0 0.0
  %3122 = vmatpush1.msra.mxu0 0.0
  %3123 = vmatprep.subr.mxu0 0.0
  %3124 = vmatpush1.msra.mxu0 0.0
  %3125 = vmatprep.subr.mxu0 0.0
  %3126 = vmatpush1.msra.mxu0 0.0
  %3127 = vmatprep.subr.mxu0 0.0
  %3128 = vmatpush1.msra.mxu0 %v1802
  %3129 = vmatprep.subr.mxu0 0.0
  %3130 = vmatpush1.msra.mxu0 %v1801
  %3131 = vmatprep.subr.mxu0 0.0
  %3132 = vmatpush1.msra.mxu0 %v1800
  %3133 = vmatprep.subr.mxu0 0.0
  %3134 = vmatpush1.msra.mxu0 %v1799
  %3135 = vmatprep.subr.mxu0 0.0
  %3136 = vmatpush2.msra.mxu0 0.0
  %3137 = vmatprep.subr.mxu0 0.0
  %3138 = vmatpush2.msra.mxu0 0.0
  %3139 = vmatprep.subr.mxu0 0.0
  %3140 = vmatpush2.msra.mxu0 0.0
  %3141 = vmatprep.subr.mxu0 0.0
  %3142 = vmatpush2.msra.mxu0 0.0
  %3143 = vmatprep.subr.mxu0 0.0
  %3144 = vmatpush2.msra.mxu0 0.0
  %3145 = vmatprep.subr.mxu0 0.0
  %3146 = vmatpush2.msra.mxu0 0.0
  %3147 = vmatprep.subr.mxu0 0.0
  %3148 = vmatpush2.msra.mxu0 0.0
  %3149 = vmatprep.subr.mxu0 0.0
  %3150 = vmatpush2.msra.mxu0 0.0
  %3151 = vmatprep.subr.mxu0 0.0
  %3152 = vmatpush2.msra.mxu0 0.0
  %3153 = vmatprep.subr.mxu0 0.0
  %3154 = vmatpush2.msra.mxu0 0.0
  %3155 = vmatprep.subr.mxu0 0.0
  %3156 = vmatpush2.msra.mxu0 0.0
  %3157 = vmatprep.subr.mxu0 0.0
  %3158 = vmatpush2.msra.mxu0 0.0
  %3159 = vmatprep.subr.mxu0 0.0
  %3160 = vmatpush2.msra.mxu0 0.0
  %3161 = vmatprep.subr.mxu0 0.0
  %3162 = vmatpush2.msra.mxu0 0.0
  %3163 = vmatprep.subr.mxu0 0.0
  %3164 = vmatpush2.msra.mxu0 0.0
  %3165 = vmatprep.subr.mxu0 0.0
  %3166 = vmatpush2.msra.mxu0 0.0
  %3167 = vmatprep.mubr.f32.mxu0 0.0
  %3168 = vmatmul.mubr.f32.gmra.mxu0 %v3098
  %v3169 = vpop.f32.mrf.mxu0
  %v3170 = vadd.f32 %v3095, %v3169
  %v3171 = vpop.f32.mrf.mxu0
  %3172 = vmatprep.mubr.f32.mxu0 0.0
  %3173 = vmatmul.mubr.f32.gmra.mxu0 %v3101
  %v3174 = vpop.f32.mrf.mxu0
  %v3175 = vadd.f32 %v3095, %v3174
  %v3176 = vpop.f32.mrf.mxu0
  %3177 = vdwg.mxu0
  %v3178 = vmax.f32 %v3170, 0.0
  %v3179 = vmax.f32 %v3175, 0.0
  %v3180 = vlaneseq
  %v3181 = vshrl.u32 %v3180, 7
  %v3182 = vsub.s32 3, %v3181
  %v3183 = vrot.slane %v1815, %v3182
  %v3185 = vsel %vm1664, %v3178, 0
  %v3188 = vsel %vm1664, %v3179, 0
  %3190 = vmatprep.subr.mxu0 0.0
  %3191 = vmatpush1.msra.mxu0 0.0
  %3192 = vmatprep.subr.mxu0 0.0
  %3193 = vmatpush1.msra.mxu0 0.0
  %3194 = vmatprep.subr.mxu0 0.0
  %3195 = vmatpush1.msra.mxu0 0.0
  %3196 = vmatprep.subr.mxu0 0.0
  %3197 = vmatpush1.msra.mxu0 0.0
  %3198 = vmatprep.subr.mxu0 0.0
  %3199 = vmatpush1.msra.mxu0 0.0
  %3200 = vmatprep.subr.mxu0 0.0
  %3201 = vmatpush1.msra.mxu0 0.0
  %3202 = vmatprep.subr.mxu0 0.0
  %3203 = vmatpush1.msra.mxu0 0.0
  %3204 = vmatprep.subr.mxu0 0.0
  %3205 = vmatpush1.msra.mxu0 0.0
  %3206 = vmatprep.subr.mxu0 0.0
  %3207 = vmatpush1.msra.mxu0 %v1813
  %3208 = vmatprep.subr.mxu0 0.0
  %3209 = vmatpush1.msra.mxu0 %v1812
  %3210 = vmatprep.subr.mxu0 0.0
  %3211 = vmatpush1.msra.mxu0 %v1811
  %3212 = vmatprep.subr.mxu0 0.0
  %3213 = vmatpush1.msra.mxu0 %v1810
  %3214 = vmatprep.subr.mxu0 0.0
  %3215 = vmatpush1.msra.mxu0 %v1809
  %3216 = vmatprep.subr.mxu0 0.0
  %3217 = vmatpush1.msra.mxu0 %v1808
  %3218 = vmatprep.subr.mxu0 0.0
  %3219 = vmatpush1.msra.mxu0 %v1807
  %3220 = vmatprep.subr.mxu0 0.0
  %3221 = vmatpush1.msra.mxu0 %v1806
  %3222 = vmatprep.subr.mxu0 0.0
  %3223 = vmatpush2.msra.mxu0 0.0
  %3224 = vmatprep.subr.mxu0 0.0
  %3225 = vmatpush2.msra.mxu0 0.0
  %3226 = vmatprep.subr.mxu0 0.0
  %3227 = vmatpush2.msra.mxu0 0.0
  %3228 = vmatprep.subr.mxu0 0.0
  %3229 = vmatpush2.msra.mxu0 0.0
  %3230 = vmatprep.subr.mxu0 0.0
  %3231 = vmatpush2.msra.mxu0 0.0
  %3232 = vmatprep.subr.mxu0 0.0
  %3233 = vmatpush2.msra.mxu0 0.0
  %3234 = vmatprep.subr.mxu0 0.0
  %3235 = vmatpush2.msra.mxu0 0.0
  %3236 = vmatprep.subr.mxu0 0.0
  %3237 = vmatpush2.msra.mxu0 0.0
  %3238 = vmatprep.subr.mxu0 0.0
  %3239 = vmatpush2.msra.mxu0 0.0
  %3240 = vmatprep.subr.mxu0 0.0
  %3241 = vmatpush2.msra.mxu0 0.0
  %3242 = vmatprep.subr.mxu0 0.0
  %3243 = vmatpush2.msra.mxu0 0.0
  %3244 = vmatprep.subr.mxu0 0.0
  %3245 = vmatpush2.msra.mxu0 0.0
  %3246 = vmatprep.subr.mxu0 0.0
  %3247 = vmatpush2.msra.mxu0 0.0
  %3248 = vmatprep.subr.mxu0 0.0
  %3249 = vmatpush2.msra.mxu0 0.0
  %3250 = vmatprep.subr.mxu0 0.0
  %3251 = vmatpush2.msra.mxu0 0.0
  %3252 = vmatprep.subr.mxu0 0.0
  %3253 = vmatpush2.msra.mxu0 0.0
  %3254 = vmatprep.mubr.f32.mxu0 0.0
  %3255 = vmatmul.mubr.f32.gmra.mxu0 %v3185
  %v3256 = vpop.f32.mrf.mxu0
  %v3257 = vadd.f32 %v3183, %v3256
  %v3258 = vpop.f32.mrf.mxu0
  %3259 = vmatprep.mubr.f32.mxu0 0.0
  %3260 = vmatmul.mubr.f32.gmra.mxu0 %v3188
  %v3261 = vpop.f32.mrf.mxu0
  %v3262 = vadd.f32 %v3183, %v3261
  %v3263 = vpop.f32.mrf.mxu0
  %3264 = vdwg.mxu0
  %v3265 = vadd.f32 %v3089, %v3257
  %v3266 = vadd.f32 %v3090, %v3262
  %v3267 = vsel %vm299, %v3265, 0.0
  %3268 = vadd.xlane.f32.xlu0 %v3267
  %v3269 = vpop.xlane.xlu0 %3268
  %v3270 = vsel %vm299, %v3266, 0.0
  %3271 = vadd.xlane.f32.xlu0 %v3270
  %v3272 = vpop.xlane.xlu0 %3271
  %v3273 = vmul.f32 %v3269, %v1538
  %v3274 = vmul.f32 %v3272, %v1538
  %v3275 = vsub.f32 %v3265, %v3273
  %v3276 = vsub.f32 %v3266, %v3274
  %v3277 = vmul.f32 %v3275, %v3275
  %v3278 = vmul.f32 %v3276, %v3276
  %v3279 = vsel %vm299, %v3277, 0.0
  %3280 = vadd.xlane.f32.xlu0 %v3279
  %v3281 = vpop.xlane.xlu0 %3280
  %v3282 = vsel %vm299, %v3278, 0.0
  %3283 = vadd.xlane.f32.xlu0 %v3282
  %v3284 = vpop.xlane.xlu0 %3283
  %v3285 = vmul.f32 %v3281, %v1538
  %v3286 = vmul.f32 %v3284, %v1538
  %v3287 = vadd.f32 %v3285, 1e-05
  %v3288 = vadd.f32 %v3286, 1e-05
  %v3289 = vrsqrt.pop %v3287
  %v3290 = vrsqrt.pop %v3288
  %v3291 = vmul.f32 %v3275, %v3289
  %v3292 = vmul.f32 %v3276, %v3290
  %v3293 = vlaneseq
  %v3294 = vshrl.u32 %v3293, 7
  %v3295 = vsub.s32 4, %v3294
  %v3296 = vrot.slane %v1815, %v3295
  %v3297 = vmul.f32 %v3291, %v3296
  %v3298 = vmul.f32 %v3292, %v3296
  %v3299 = vlaneseq
  %v3300 = vshrl.u32 %v3299, 7
  %v3301 = vsub.s32 5, %v3300
  %v3302 = vrot.slane %v1815, %v3301
  %v3303 = vadd.f32 %v3297, %v3302
  %v3304 = vadd.f32 %v3298, %v3302
  %v3305 = vld [vmem:[%s11] sm:$0xff]
  %v3306 = vld [vmem:[%s11 + $0x8] sm:$0xff]
  %v3307 = vld [vmem:[%s11 + $0x10] sm:$0xff]
  %v3308 = vld [vmem:[%s11 + $0x18] sm:$0xff]
  %v3309 = vld [vmem:[%s12] sm:$0x1]
  %v3311 = vlaneseq
  %v3312 = vshrl.u32 %v3311, 7
  %v3313 = vsub.s32 0, %v3312
  %v3314 = vrot.slane %v3309, %v3313
  %v3317 = vsel %vm299, %v3303, 0
  %v3320 = vsel %vm299, %v3304, 0
  %3322 = vmatprep.subr.mxu0 0.0
  %3323 = vmatpush1.msra.mxu0 0.0
  %3324 = vmatprep.subr.mxu0 0.0
  %3325 = vmatpush1.msra.mxu0 0.0
  %3326 = vmatprep.subr.mxu0 0.0
  %3327 = vmatpush1.msra.mxu0 0.0
  %3328 = vmatprep.subr.mxu0 0.0
  %3329 = vmatpush1.msra.mxu0 0.0
  %3330 = vmatprep.subr.mxu0 0.0
  %3331 = vmatpush1.msra.mxu0 0.0
  %3332 = vmatprep.subr.mxu0 0.0
  %3333 = vmatpush1.msra.mxu0 0.0
  %3334 = vmatprep.subr.mxu0 0.0
  %3335 = vmatpush1.msra.mxu0 0.0
  %3336 = vmatprep.subr.mxu0 0.0
  %3337 = vmatpush1.msra.mxu0 0.0
  %3338 = vmatprep.subr.mxu0 0.0
  %3339 = vmatpush1.msra.mxu0 0.0
  %3340 = vmatprep.subr.mxu0 0.0
  %3341 = vmatpush1.msra.mxu0 0.0
  %3342 = vmatprep.subr.mxu0 0.0
  %3343 = vmatpush1.msra.mxu0 0.0
  %3344 = vmatprep.subr.mxu0 0.0
  %3345 = vmatpush1.msra.mxu0 0.0
  %3346 = vmatprep.subr.mxu0 0.0
  %3347 = vmatpush1.msra.mxu0 %v3308
  %3348 = vmatprep.subr.mxu0 0.0
  %3349 = vmatpush1.msra.mxu0 %v3307
  %3350 = vmatprep.subr.mxu0 0.0
  %3351 = vmatpush1.msra.mxu0 %v3306
  %3352 = vmatprep.subr.mxu0 0.0
  %3353 = vmatpush1.msra.mxu0 %v3305
  %3354 = vmatprep.subr.mxu0 0.0
  %3355 = vmatpush2.msra.mxu0 0.0
  %3356 = vmatprep.subr.mxu0 0.0
  %3357 = vmatpush2.msra.mxu0 0.0
  %3358 = vmatprep.subr.mxu0 0.0
  %3359 = vmatpush2.msra.mxu0 0.0
  %3360 = vmatprep.subr.mxu0 0.0
  %3361 = vmatpush2.msra.mxu0 0.0
  %3362 = vmatprep.subr.mxu0 0.0
  %3363 = vmatpush2.msra.mxu0 0.0
  %3364 = vmatprep.subr.mxu0 0.0
  %3365 = vmatpush2.msra.mxu0 0.0
  %3366 = vmatprep.subr.mxu0 0.0
  %3367 = vmatpush2.msra.mxu0 0.0
  %3368 = vmatprep.subr.mxu0 0.0
  %3369 = vmatpush2.msra.mxu0 0.0
  %3370 = vmatprep.subr.mxu0 0.0
  %3371 = vmatpush2.msra.mxu0 0.0
  %3372 = vmatprep.subr.mxu0 0.0
  %3373 = vmatpush2.msra.mxu0 0.0
  %3374 = vmatprep.subr.mxu0 0.0
  %3375 = vmatpush2.msra.mxu0 0.0
  %3376 = vmatprep.subr.mxu0 0.0
  %3377 = vmatpush2.msra.mxu0 0.0
  %3378 = vmatprep.subr.mxu0 0.0
  %3379 = vmatpush2.msra.mxu0 0.0
  %3380 = vmatprep.subr.mxu0 0.0
  %3381 = vmatpush2.msra.mxu0 0.0
  %3382 = vmatprep.subr.mxu0 0.0
  %3383 = vmatpush2.msra.mxu0 0.0
  %3384 = vmatprep.subr.mxu0 0.0
  %3385 = vmatpush2.msra.mxu0 0.0
  %3386 = vmatprep.mubr.f32.mxu0 0.0
  %3387 = vmatmul.mubr.f32.gmra.mxu0 %v3317
  %v3388 = vpop.f32.mrf.mxu0
  %v3389 = vadd.f32 %v3314, %v3388
  %v3390 = vpop.f32.mrf.mxu0
  %3391 = vmatprep.mubr.f32.mxu0 0.0
  %3392 = vmatmul.mubr.f32.gmra.mxu0 %v3320
  %v3393 = vpop.f32.mrf.mxu0
  %v3394 = vadd.f32 %v3314, %v3393
  %v3395 = vpop.f32.mrf.mxu0
  %3396 = vdwg.mxu0
  %3397 = vst [vmem:[%s13] sm:$0xff] %v3389
  %3398 = vst [vmem:[%s13 + $0x8] sm:$0xff] %v3394
  // Predicated region
  $region54: #{cond_prim_forward.1} parent=0 // pred_check
    _
  $region55: #{cond_prim_forward.1} parent=0 // pred_check_branch
    %3400 = sbr.rel (0) target = $region57
  $region56: #{cond_prim_forward.1} parent=0 // pred_region
    _
  $region57: #{cond_prim_forward.1} parent=0 // pred_fallthru
    _
  // Predicated region
  $region58: #{cond_prim_forward.1} parent=0 // pred_check
    _
  $region59: #{cond_prim_forward.1} parent=0 // pred_check_branch
    %3402 = sbr.rel (0) target = $region61
  $region60: #{cond_prim_forward.1} parent=0 // pred_region
    _
  $region61: #{cond_prim_forward.1} parent=0 // pred_fallthru
    _

</llo_original>
